<compile_context>
chip_gen: v7x
topology: tpu7x:2x2x1
jax: 0.10.0
libtpu: 0.0.40
codegen_flags: <defaults>
</compile_context>

<pallas_src>
import jax
import jax.numpy as jnp
from jax import lax
from jax.experimental import pallas as pl
from jax.experimental.pallas import tpu as pltpu


# ----------------------------------------------------------------------------
# Fused kernel
# ----------------------------------------------------------------------------
def _fused_forward_kernel(x_ref, w1_ref, w2_ref, bias_ref, small_ref, o_ref):
    """Full forward pass for one (T, B, D) time-major input, entirely in VMEM/vregs.

    x_ref:     (T, B, D)          time-major input
    w1_ref:    (2*D  + 2H, 8H)    layer-1 [Wih_big ; Whh_big], gate cols interleaved
    w2_ref:    (2*2H + 2H, 8H)    layer-2 [Wih_big ; Whh_big]
    bias_ref:  (2, 8H)            fused (b_ih + b_hh) per layer, same column layout
    small_ref: (8, 2H)            rows: ln1_g, ln1_b, ln2_g, ln2_b, dense_w, [dense_b,0..]
    o_ref:     (B, T)             output (wrapper appends the trailing singleton dim)

    Gate column layout (8 blocks of H): [i_f, i_b, f_f, f_b, o_f, o_b, g_f, g_b].
    Hidden/cell carry layout: [fwd | bwd] of width 2H.
    """
    T, B, _ = x_ref.shape
    H = w1_ref.shape[1] // 8

    def time_reverse(a):  # static unrolled reverse along the (small) time axis
        return jnp.stack([a[T - 1 - t] for t in range(T)], axis=0)

    def layer_norm(y, gamma, beta):
        mean = jnp.mean(y, axis=-1, keepdims=True)
        var = jnp.mean((y - mean) ** 2, axis=-1, keepdims=True)  # biased, like PyTorch
        return (y - mean) * lax.rsqrt(var + 1e-5) * gamma + beta

    def bidir_lstm(x_tbf, w_ref, bias_1x, batch_major_out):
        """Fused bidirectional LSTM layer. Returns (T,B,2H) or (B,T,2H)."""
        din2 = w_ref.shape[0] - 2 * H  # = 2 * input feature dim

        # --- off-chain: hoisted input projection for both directions in ONE matmul ---
        # x_cat[t] = [x_t | x_(T-1-t)]  -> fwd rows of Wih_big see x_t, bwd rows see x_rev.
        x_cat = jnp.concatenate([x_tbf, time_reverse(x_tbf)], axis=-1)  # (T, B, din2)
        gx = (jnp.dot(x_cat.reshape(T * B, din2), w_ref[0:din2, :],
                      preferred_element_type=jnp.float32)
              + bias_1x).reshape(T, B, 8 * H)

        whh = w_ref[din2:din2 + 2 * H, :]  # (2H, 8H) block matrix, loaded once

        h = jnp.zeros((B, 2 * H), jnp.float32)  # [h_fwd | h_bwd]
        c = jnp.zeros((B, 2 * H), jnp.float32)  # [c_fwd | c_bwd]
        ys_f = [None] * T
        ys_b = [None] * T

        # T is small & static: fully unrolled. One MXU matmul + 3 EUP ops per step.
        for s in range(T):
            gates = gx[s] + jnp.dot(h, whh, preferred_element_type=jnp.float32)  # (B, 8H)
            sig = jax.nn.sigmoid(gates[:, 0:6 * H])      # i,f,o for BOTH dirs: one EUP op
            g_gate = jnp.tanh(gates[:, 6 * H:8 * H])     # g for both dirs
            c = sig[:, 2 * H:4 * H] * c + sig[:, 0:2 * H] * g_gate
            h = sig[:, 4 * H:6 * H] * jnp.tanh(c)
            ys_f[s] = h[:, 0:H]                 # fwd hidden -> time s
            ys_b[T - 1 - s] = h[:, H:2 * H]     # bwd hidden -> time T-1-s

        ax = 1 if batch_major_out else 0
        return jnp.concatenate([jnp.stack(ys_f, axis=ax),
                                jnp.stack(ys_b, axis=ax)], axis=-1)

    x = x_ref[...].astype(jnp.float32)  # (T, B, D)

    # lstm1 (bidirectional, H=32) -> (T, B, 64), kept time-major to feed layer 2.
    y1 = bidir_lstm(x, w1_ref, bias_ref[0:1, :], batch_major_out=False)
    y1 = layer_norm(y1, small_ref[0:1, :], small_ref[1:2, :])
    # dropout1: identity (inference)

    # lstm2 (bidirectional, H=32) -> (B, T, 64), batch-major for a lane-dense output store.
    y2 = bidir_lstm(y1, w2_ref, bias_ref[1:2, :], batch_major_out=True)
    y2 = layer_norm(y2, small_ref[2:3, :], small_ref[3:4, :])
    # dropout2: identity (inference)

    # dense: Linear(64 -> 1) as VPU multiply + lane reduction.
    out = jnp.sum(y2 * small_ref[4:5, :], axis=-1) + small_ref[5:6, 0:1]  # (B, T)
    o_ref[...] = out


# ----------------------------------------------------------------------------
# Wrapper
# ----------------------------------------------------------------------------
_VMEM_SPEC = pl.BlockSpec(memory_space=pltpu.MemorySpace.VMEM)


@jax.jit
def fuel_consumption_forward(x_btd, kparams):
    """x_btd: (B, T, input_size) batch-first, like the PyTorch module. Returns (B, T, 1)."""
    B, T, _ = x_btd.shape
    x_tbd = jnp.transpose(x_btd.astype(jnp.float32), (1, 0, 2))  # tiny, one-time
    out_bt = pl.pallas_call(
        _fused_forward_kernel,
        out_shape=jax.ShapeDtypeStruct((B, T), jnp.float32),
        in_specs=[_VMEM_SPEC] * 5,
        out_specs=_VMEM_SPEC,
    )(x_tbd, kparams["w1"], kparams["w2"], kparams["bias"], kparams["small"])
    return out_bt[..., None]


# ----------------------------------------------------------------------------
# Parameters: PyTorch-layout init + conversion to the fused kernel layout
# ----------------------------------------------------------------------------
def init_torch_params(key, input_size, hidden=32):
    """Deterministic PyTorch-style params (same layout/order as nn.LSTM / nn.Linear)."""
    H = hidden

    def uni(k, shape, bound):
        return jax.random.uniform(k, shape, jnp.float32, minval=-bound, maxval=bound)

    keys = iter(jax.random.split(key, 32))
    kb = 1.0 / (H ** 0.5)

    def lstm_layer(din):
        dirs = []
        for _ in range(2):  # [forward, backward]
            dirs.append(dict(
                w_ih=uni(next(keys), (4 * H, din), kb),   # rows in [i, f, g, o] order
                w_hh=uni(next(keys), (4 * H, H), kb),
                b_ih=uni(next(keys), (4 * H,), kb),
                b_hh=uni(next(keys), (4 * H,), kb),
            ))
        return dirs

    kd = 1.0 / ((2 * H) ** 0.5)
    return dict(
        lstm1=lstm_layer(input_size),
        lstm2=lstm_layer(2 * H),
        ln1_g=jnp.ones((2 * H,), jnp.float32), ln1_b=jnp.zeros((2 * H,), jnp.float32),
        ln2_g=jnp.ones((2 * H,), jnp.float32), ln2_b=jnp.zeros((2 * H,), jnp.float32),
        dense_w=uni(next(keys), (1, 2 * H), kd),
        dense_b=uni(next(keys), (1,), kd),
    )


def convert_params(tp, hidden=32):
    """PyTorch layout -> fused-kernel layout (transpose, gate reorder, dir interleave)."""
    H = hidden

    def reorder(m):  # (..., 4H) columns [i,f,g,o] -> [i,f,o,g]
        return jnp.concatenate([m[..., 0:2 * H], m[..., 3 * H:4 * H], m[..., 2 * H:3 * H]],
                               axis=-1)

    def interleave_mat(mf, mb):  # (rows, 4H) each, [i,f,o,g] -> (rows_f+rows_b, 8H)
        rf, rb = mf.shape[0], mb.shape[0]
        big = jnp.zeros((rf + rb, 4, 2, H), jnp.float32)
        big = big.at[:rf, :, 0, :].set(mf.reshape(rf, 4, H))   # fwd rows, fwd gate cols
        big = big.at[rf:, :, 1, :].set(mb.reshape(rb, 4, H))   # bwd rows, bwd gate cols
        return big.reshape(rf + rb, 8 * H)

    def interleave_vec(vf, vb):  # (4H,) each -> (8H,)
        return jnp.stack([vf.reshape(4, H), vb.reshape(4, H)], axis=1).reshape(8 * H)

    def layer(dirs):
        f, b = dirs
        wih = interleave_mat(reorder(f["w_ih"].T), reorder(b["w_ih"].T))   # (2*Din, 8H)
        whh = interleave_mat(reorder(f["w_hh"].T), reorder(b["w_hh"].T))   # (2H, 8H)
        bias = interleave_vec(reorder(f["b_ih"] + f["b_hh"]),
                              reorder(b["b_ih"] + b["b_hh"]))              # (8H,)
        return jnp.concatenate([wih, whh], axis=0), bias

    w1, b1 = layer(tp["lstm1"])
    w2, b2 = layer(tp["lstm2"])

    small = jnp.zeros((8, 2 * H), jnp.float32)
    small = small.at[0].set(tp["ln1_g"]).at[1].set(tp["ln1_b"])
    small = small.at[2].set(tp["ln2_g"]).at[3].set(tp["ln2_b"])
    small = small.at[4].set(tp["dense_w"][0])
    small = small.at[5, 0].set(tp["dense_b"][0])

    return dict(w1=w1, w2=w2, bias=jnp.stack([b1, b2], axis=0), small=small)


# ----------------------------------------------------------------------------
# Pure-JAX reference (PyTorch semantics) for correctness validation
# ----------------------------------------------------------------------------
def reference_forward(x_btd, tp, hidden=32):
    H = hidden
    HI = jax.lax.Precision.HIGHEST
    x = jnp.transpose(x_btd.astype(jnp.float32), (1, 0, 2))  # (T, B, D)
    T = x.shape[0]

    def lstm_dir(xs, p):
        B = xs.shape[1]
        h = jnp.zeros((B, H), jnp.float32)
        c = jnp.zeros((B, H), jnp.float32)
        outs = []
        for t in range(T):
            g = (jnp.dot(xs[t], p["w_ih"].T, precision=HI) + p["b_ih"]
                 + jnp.dot(h, p["w_hh"].T, precision=HI) + p["b_hh"])
            i = jax.nn.sigmoid(g[:, 0:H])
            f = jax.nn.sigmoid(g[:, H:2 * H])
            gg = jnp.tanh(g[:, 2 * H:3 * H])
            o = jax.nn.sigmoid(g[:, 3 * H:4 * H])
            c = f * c + i * gg
            h = o * jnp.tanh(c)
            outs.append(h)
        return jnp.stack(outs, axis=0)

    def bidir(xs, dirs):
        yf = lstm_dir(xs, dirs[0])
        yb = lstm_dir(xs[::-1], dirs[1])[::-1]
        return jnp.concatenate([yf, yb], axis=-1)

    def ln(y, g, b):
        m = jnp.mean(y, -1, keepdims=True)
        v = jnp.mean((y - m) ** 2, -1, keepdims=True)
        return (y - m) / jnp.sqrt(v + 1e-5) * g + b

    y = bidir(x, tp["lstm1"])
    y = ln(y, tp["ln1_g"], tp["ln1_b"])
    y = bidir(y, tp["lstm2"])
    y = ln(y, tp["ln2_g"], tp["ln2_b"])
    out = jnp.dot(y, tp["dense_w"].T, precision=HI) + tp["dense_b"]  # (T, B, 1)
    return jnp.transpose(out, (1, 0, 2))                             # (B, T, 1)


if __name__ == "__main__":
    B, T, INPUT_SIZE, HIDDEN = 2, 8, 8, 32
    key = jax.random.PRNGKey(0)
    k_x, k_p = jax.random.split(key)

    x = jax.random.normal(k_x, (B, T, INPUT_SIZE), dtype=jnp.float32)
    torch_params = init_torch_params(k_p, INPUT_SIZE, HIDDEN)
    kernel_params = convert_params(torch_params, HIDDEN)

    out = jax.block_until_ready(fuel_consumption_forward(x, kernel_params))

    assert out.shape == (B, T, 1), out.shape
    assert bool(jnp.all(jnp.isfinite(out)))

    ref = reference_forward(x, torch_params, HIDDEN)
    max_err = float(jnp.max(jnp.abs(out - ref)))
    assert max_err < 2e-2, f"kernel vs reference mismatch: max abs err = {max_err}"

    print("KERNEL_OK")
</pallas_src>

<mosaic_0001>
module attributes {stable_mosaic.version = 11 : i64} {
  func.func @_fused_forward_kernel(%arg0: memref<8x2x8xf32, #tpu.memory_space<vmem>>, %arg1: memref<80x256xf32, #tpu.memory_space<vmem>>, %arg2: memref<192x256xf32, #tpu.memory_space<vmem>>, %arg3: memref<2x256xf32, #tpu.memory_space<vmem>>, %arg4: memref<8x64xf32, #tpu.memory_space<vmem>>, %arg5: memref<2x8xf32, #tpu.memory_space<vmem>>) attributes {dimension_semantics = [], scalar_prefetch = 0 : i64, scratch_operands = 0 : i64, tpu.core_type = #tpu.core_type<tc>} {
    %c0 = arith.constant 0 : index
    %c0_0 = arith.constant 0 : index
    %c0_1 = arith.constant 0 : index
    %0 = vector.load %arg0[%c0, %c0_0, %c0_1] : memref<8x2x8xf32, #tpu.memory_space<vmem>>, vector<8x2x8xf32>
    %c0_2 = arith.constant 0 : index
    %c0_3 = arith.constant 0 : index
    %1 = vector.load %arg3[%c0_2, %c0_3] : memref<2x256xf32, #tpu.memory_space<vmem>>, vector<1x256xf32>
    %2 = vector.extract_strided_slice %0 {offsets = [7, 0, 0], sizes = [1, 2, 8], strides = [1, 1, 1]} : vector<8x2x8xf32> to vector<1x2x8xf32>
    %3 = vector.shape_cast %2 : vector<1x2x8xf32> to vector<2x8xf32>
    %4 = vector.extract_strided_slice %0 {offsets = [6, 0, 0], sizes = [1, 2, 8], strides = [1, 1, 1]} : vector<8x2x8xf32> to vector<1x2x8xf32>
    %5 = vector.shape_cast %4 : vector<1x2x8xf32> to vector<2x8xf32>
    %6 = vector.extract_strided_slice %0 {offsets = [5, 0, 0], sizes = [1, 2, 8], strides = [1, 1, 1]} : vector<8x2x8xf32> to vector<1x2x8xf32>
    %7 = vector.shape_cast %6 : vector<1x2x8xf32> to vector<2x8xf32>
    %8 = vector.extract_strided_slice %0 {offsets = [4, 0, 0], sizes = [1, 2, 8], strides = [1, 1, 1]} : vector<8x2x8xf32> to vector<1x2x8xf32>
    %9 = vector.shape_cast %8 : vector<1x2x8xf32> to vector<2x8xf32>
    %10 = vector.extract_strided_slice %0 {offsets = [3, 0, 0], sizes = [1, 2, 8], strides = [1, 1, 1]} : vector<8x2x8xf32> to vector<1x2x8xf32>
    %11 = vector.shape_cast %10 : vector<1x2x8xf32> to vector<2x8xf32>
    %12 = vector.extract_strided_slice %0 {offsets = [2, 0, 0], sizes = [1, 2, 8], strides = [1, 1, 1]} : vector<8x2x8xf32> to vector<1x2x8xf32>
    %13 = vector.shape_cast %12 : vector<1x2x8xf32> to vector<2x8xf32>
    %14 = vector.extract_strided_slice %0 {offsets = [1, 0, 0], sizes = [1, 2, 8], strides = [1, 1, 1]} : vector<8x2x8xf32> to vector<1x2x8xf32>
    %15 = vector.shape_cast %14 : vector<1x2x8xf32> to vector<2x8xf32>
    %16 = vector.extract_strided_slice %0 {offsets = [0, 0, 0], sizes = [1, 2, 8], strides = [1, 1, 1]} : vector<8x2x8xf32> to vector<1x2x8xf32>
    %17 = vector.shape_cast %16 : vector<1x2x8xf32> to vector<2x8xf32>
    %18 = vector.shape_cast %3 : vector<2x8xf32> to vector<1x2x8xf32>
    %19 = vector.shape_cast %5 : vector<2x8xf32> to vector<1x2x8xf32>
    %20 = vector.shape_cast %7 : vector<2x8xf32> to vector<1x2x8xf32>
    %21 = vector.shape_cast %9 : vector<2x8xf32> to vector<1x2x8xf32>
    %22 = vector.shape_cast %11 : vector<2x8xf32> to vector<1x2x8xf32>
    %23 = vector.shape_cast %13 : vector<2x8xf32> to vector<1x2x8xf32>
    %24 = vector.shape_cast %15 : vector<2x8xf32> to vector<1x2x8xf32>
    %25 = vector.shape_cast %17 : vector<2x8xf32> to vector<1x2x8xf32>
    %26 = tpu.concatenate %18, %19, %20, %21, %22, %23, %24, %25 in 0 : vector<1x2x8xf32>, vector<1x2x8xf32>, vector<1x2x8xf32>, vector<1x2x8xf32>, vector<1x2x8xf32>, vector<1x2x8xf32>, vector<1x2x8xf32>, vector<1x2x8xf32> -> vector<8x2x8xf32>
    %27 = tpu.concatenate %0, %26 in 2 : vector<8x2x8xf32>, vector<8x2x8xf32> -> vector<8x2x16xf32>
    %28 = vector.shape_cast %27 : vector<8x2x16xf32> to vector<16x16xf32>
    %c0_4 = arith.constant 0 : index
    %c0_5 = arith.constant 0 : index
    %29 = vector.load %arg1[%c0_4, %c0_5] : memref<80x256xf32, #tpu.memory_space<vmem>>, vector<16x256xf32>
    %cst = arith.constant dense<0.000000e+00> : vector<16x256xf32>
    %30 = tpu.matmul %28, %29, %cst {dimension_numbers = #tpu.dot_dimension_numbers<[1], [0], [0], [1], [0, 0, 1, 1], [], []>} : vector<16x16xf32>, vector<16x256xf32>, vector<16x256xf32> -> vector<16x256xf32>
    %31 = vector.broadcast %1 : vector<1x256xf32> to vector<16x256xf32>
    %32 = arith.addf %30, %31 : vector<16x256xf32>
    %33 = vector.shape_cast %32 : vector<16x256xf32> to vector<8x2x256xf32>
    %c16 = arith.constant 16 : index
    %c0_6 = arith.constant 0 : index
    %34 = vector.load %arg1[%c16, %c0_6] : memref<80x256xf32, #tpu.memory_space<vmem>>, vector<64x256xf32>
    %cst_7 = arith.constant 0.000000e+00 : f32
    %35 = vector.broadcast %cst_7 : f32 to vector<2x64xf32>
    %cst_8 = arith.constant 0.000000e+00 : f32
    %36 = vector.broadcast %cst_8 : f32 to vector<2x64xf32>
    %37 = vector.extract_strided_slice %33 {offsets = [0, 0, 0], sizes = [1, 2, 256], strides = [1, 1, 1]} : vector<8x2x256xf32> to vector<1x2x256xf32>
    %38 = vector.shape_cast %37 : vector<1x2x256xf32> to vector<2x256xf32>
    %cst_9 = arith.constant dense<0.000000e+00> : vector<2x256xf32>
    %39 = tpu.matmul %35, %34, %cst_9 {dimension_numbers = #tpu.dot_dimension_numbers<[1], [0], [0], [1], [0, 0, 1, 1], [], []>} : vector<2x64xf32>, vector<64x256xf32>, vector<2x256xf32> -> vector<2x256xf32>
    %40 = arith.addf %38, %39 : vector<2x256xf32>
    %41 = vector.extract_strided_slice %40 {offsets = [0, 0], sizes = [2, 192], strides = [1, 1]} : vector<2x256xf32> to vector<2x192xf32>
    %42 = arith.negf %41 : vector<2x192xf32>
    %43 = math.exp %42 : vector<2x192xf32>
    %cst_10 = arith.constant 1.000000e+00 : f32
    %44 = vector.broadcast %cst_10 : f32 to vector<2x192xf32>
    %45 = arith.addf %44, %43 : vector<2x192xf32>
    %46 = arith.divf %44, %45 : vector<2x192xf32>
    %47 = vector.extract_strided_slice %40 {offsets = [0, 192], sizes = [2, 64], strides = [1, 1]} : vector<2x256xf32> to vector<2x64xf32>
    %48 = math.tanh %47 : vector<2x64xf32>
    %49 = vector.extract_strided_slice %46 {offsets = [0, 64], sizes = [2, 64], strides = [1, 1]} : vector<2x192xf32> to vector<2x64xf32>
    %50 = arith.mulf %49, %36 : vector<2x64xf32>
    %51 = vector.extract_strided_slice %46 {offsets = [0, 0], sizes = [2, 64], strides = [1, 1]} : vector<2x192xf32> to vector<2x64xf32>
    %52 = arith.mulf %51, %48 : vector<2x64xf32>
    %53 = arith.addf %50, %52 : vector<2x64xf32>
    %54 = vector.extract_strided_slice %46 {offsets = [0, 128], sizes = [2, 64], strides = [1, 1]} : vector<2x192xf32> to vector<2x64xf32>
    %55 = math.tanh %53 : vector<2x64xf32>
    %56 = arith.mulf %54, %55 : vector<2x64xf32>
    %57 = vector.extract_strided_slice %56 {offsets = [0, 0], sizes = [2, 32], strides = [1, 1]} : vector<2x64xf32> to vector<2x32xf32>
    %58 = vector.extract_strided_slice %56 {offsets = [0, 32], sizes = [2, 32], strides = [1, 1]} : vector<2x64xf32> to vector<2x32xf32>
    %59 = vector.extract_strided_slice %33 {offsets = [1, 0, 0], sizes = [1, 2, 256], strides = [1, 1, 1]} : vector<8x2x256xf32> to vector<1x2x256xf32>
    %60 = vector.shape_cast %59 : vector<1x2x256xf32> to vector<2x256xf32>
    %cst_11 = arith.constant dense<0.000000e+00> : vector<2x256xf32>
    %61 = tpu.matmul %56, %34, %cst_11 {dimension_numbers = #tpu.dot_dimension_numbers<[1], [0], [0], [1], [0, 0, 1, 1], [], []>} : vector<2x64xf32>, vector<64x256xf32>, vector<2x256xf32> -> vector<2x256xf32>
    %62 = arith.addf %60, %61 : vector<2x256xf32>
    %63 = vector.extract_strided_slice %62 {offsets = [0, 0], sizes = [2, 192], strides = [1, 1]} : vector<2x256xf32> to vector<2x192xf32>
    %64 = arith.negf %63 : vector<2x192xf32>
    %65 = math.exp %64 : vector<2x192xf32>
    %cst_12 = arith.constant 1.000000e+00 : f32
    %66 = vector.broadcast %cst_12 : f32 to vector<2x192xf32>
    %67 = arith.addf %66, %65 : vector<2x192xf32>
    %68 = arith.divf %66, %67 : vector<2x192xf32>
    %69 = vector.extract_strided_slice %62 {offsets = [0, 192], sizes = [2, 64], strides = [1, 1]} : vector<2x256xf32> to vector<2x64xf32>
    %70 = math.tanh %69 : vector<2x64xf32>
    %71 = vector.extract_strided_slice %68 {offsets = [0, 64], sizes = [2, 64], strides = [1, 1]} : vector<2x192xf32> to vector<2x64xf32>
    %72 = arith.mulf %71, %53 : vector<2x64xf32>
    %73 = vector.extract_strided_slice %68 {offsets = [0, 0], sizes = [2, 64], strides = [1, 1]} : vector<2x192xf32> to vector<2x64xf32>
    %74 = arith.mulf %73, %70 : vector<2x64xf32>
    %75 = arith.addf %72, %74 : vector<2x64xf32>
    %76 = vector.extract_strided_slice %68 {offsets = [0, 128], sizes = [2, 64], strides = [1, 1]} : vector<2x192xf32> to vector<2x64xf32>
    %77 = math.tanh %75 : vector<2x64xf32>
    %78 = arith.mulf %76, %77 : vector<2x64xf32>
    %79 = vector.extract_strided_slice %78 {offsets = [0, 0], sizes = [2, 32], strides = [1, 1]} : vector<2x64xf32> to vector<2x32xf32>
    %80 = vector.extract_strided_slice %78 {offsets = [0, 32], sizes = [2, 32], strides = [1, 1]} : vector<2x64xf32> to vector<2x32xf32>
    %81 = vector.extract_strided_slice %33 {offsets = [2, 0, 0], sizes = [1, 2, 256], strides = [1, 1, 1]} : vector<8x2x256xf32> to vector<1x2x256xf32>
    %82 = vector.shape_cast %81 : vector<1x2x256xf32> to vector<2x256xf32>
    %cst_13 = arith.constant dense<0.000000e+00> : vector<2x256xf32>
    %83 = tpu.matmul %78, %34, %cst_13 {dimension_numbers = #tpu.dot_dimension_numbers<[1], [0], [0], [1], [0, 0, 1, 1], [], []>} : vector<2x64xf32>, vector<64x256xf32>, vector<2x256xf32> -> vector<2x256xf32>
    %84 = arith.addf %82, %83 : vector<2x256xf32>
    %85 = vector.extract_strided_slice %84 {offsets = [0, 0], sizes = [2, 192], strides = [1, 1]} : vector<2x256xf32> to vector<2x192xf32>
    %86 = arith.negf %85 : vector<2x192xf32>
    %87 = math.exp %86 : vector<2x192xf32>
    %cst_14 = arith.constant 1.000000e+00 : f32
    %88 = vector.broadcast %cst_14 : f32 to vector<2x192xf32>
    %89 = arith.addf %88, %87 : vector<2x192xf32>
    %90 = arith.divf %88, %89 : vector<2x192xf32>
    %91 = vector.extract_strided_slice %84 {offsets = [0, 192], sizes = [2, 64], strides = [1, 1]} : vector<2x256xf32> to vector<2x64xf32>
    %92 = math.tanh %91 : vector<2x64xf32>
    %93 = vector.extract_strided_slice %90 {offsets = [0, 64], sizes = [2, 64], strides = [1, 1]} : vector<2x192xf32> to vector<2x64xf32>
    %94 = arith.mulf %93, %75 : vector<2x64xf32>
    %95 = vector.extract_strided_slice %90 {offsets = [0, 0], sizes = [2, 64], strides = [1, 1]} : vector<2x192xf32> to vector<2x64xf32>
    %96 = arith.mulf %95, %92 : vector<2x64xf32>
    %97 = arith.addf %94, %96 : vector<2x64xf32>
    %98 = vector.extract_strided_slice %90 {offsets = [0, 128], sizes = [2, 64], strides = [1, 1]} : vector<2x192xf32> to vector<2x64xf32>
    %99 = math.tanh %97 : vector<2x64xf32>
    %100 = arith.mulf %98, %99 : vector<2x64xf32>
    %101 = vector.extract_strided_slice %100 {offsets = [0, 0], sizes = [2, 32], strides = [1, 1]} : vector<2x64xf32> to vector<2x32xf32>
    %102 = vector.extract_strided_slice %100 {offsets = [0, 32], sizes = [2, 32], strides = [1, 1]} : vector<2x64xf32> to vector<2x32xf32>
    %103 = vector.extract_strided_slice %33 {offsets = [3, 0, 0], sizes = [1, 2, 256], strides = [1, 1, 1]} : vector<8x2x256xf32> to vector<1x2x256xf32>
    %104 = vector.shape_cast %103 : vector<1x2x256xf32> to vector<2x256xf32>
    %cst_15 = arith.constant dense<0.000000e+00> : vector<2x256xf32>
    %105 = tpu.matmul %100, %34, %cst_15 {dimension_numbers = #tpu.dot_dimension_numbers<[1], [0], [0], [1], [0, 0, 1, 1], [], []>} : vector<2x64xf32>, vector<64x256xf32>, vector<2x256xf32> -> vector<2x256xf32>
    %106 = arith.addf %104, %105 : vector<2x256xf32>
    %107 = vector.extract_strided_slice %106 {offsets = [0, 0], sizes = [2, 192], strides = [1, 1]} : vector<2x256xf32> to vector<2x192xf32>
    %108 = arith.negf %107 : vector<2x192xf32>
    %109 = math.exp %108 : vector<2x192xf32>
    %cst_16 = arith.constant 1.000000e+00 : f32
    %110 = vector.broadcast %cst_16 : f32 to vector<2x192xf32>
    %111 = arith.addf %110, %109 : vector<2x192xf32>
    %112 = arith.divf %110, %111 : vector<2x192xf32>
    %113 = vector.extract_strided_slice %106 {offsets = [0, 192], sizes = [2, 64], strides = [1, 1]} : vector<2x256xf32> to vector<2x64xf32>
    %114 = math.tanh %113 : vector<2x64xf32>
    %115 = vector.extract_strided_slice %112 {offsets = [0, 64], sizes = [2, 64], strides = [1, 1]} : vector<2x192xf32> to vector<2x64xf32>
    %116 = arith.mulf %115, %97 : vector<2x64xf32>
    %117 = vector.extract_strided_slice %112 {offsets = [0, 0], sizes = [2, 64], strides = [1, 1]} : vector<2x192xf32> to vector<2x64xf32>
    %118 = arith.mulf %117, %114 : vector<2x64xf32>
    %119 = arith.addf %116, %118 : vector<2x64xf32>
    %120 = vector.extract_strided_slice %112 {offsets = [0, 128], sizes = [2, 64], strides = [1, 1]} : vector<2x192xf32> to vector<2x64xf32>
    %121 = math.tanh %119 : vector<2x64xf32>
    %122 = arith.mulf %120, %121 : vector<2x64xf32>
    %123 = vector.extract_strided_slice %122 {offsets = [0, 0], sizes = [2, 32], strides = [1, 1]} : vector<2x64xf32> to vector<2x32xf32>
    %124 = vector.extract_strided_slice %122 {offsets = [0, 32], sizes = [2, 32], strides = [1, 1]} : vector<2x64xf32> to vector<2x32xf32>
    %125 = vector.extract_strided_slice %33 {offsets = [4, 0, 0], sizes = [1, 2, 256], strides = [1, 1, 1]} : vector<8x2x256xf32> to vector<1x2x256xf32>
    %126 = vector.shape_cast %125 : vector<1x2x256xf32> to vector<2x256xf32>
    %cst_17 = arith.constant dense<0.000000e+00> : vector<2x256xf32>
    %127 = tpu.matmul %122, %34, %cst_17 {dimension_numbers = #tpu.dot_dimension_numbers<[1], [0], [0], [1], [0, 0, 1, 1], [], []>} : vector<2x64xf32>, vector<64x256xf32>, vector<2x256xf32> -> vector<2x256xf32>
    %128 = arith.addf %126, %127 : vector<2x256xf32>
    %129 = vector.extract_strided_slice %128 {offsets = [0, 0], sizes = [2, 192], strides = [1, 1]} : vector<2x256xf32> to vector<2x192xf32>
    %130 = arith.negf %129 : vector<2x192xf32>
    %131 = math.exp %130 : vector<2x192xf32>
    %cst_18 = arith.constant 1.000000e+00 : f32
    %132 = vector.broadcast %cst_18 : f32 to vector<2x192xf32>
    %133 = arith.addf %132, %131 : vector<2x192xf32>
    %134 = arith.divf %132, %133 : vector<2x192xf32>
    %135 = vector.extract_strided_slice %128 {offsets = [0, 192], sizes = [2, 64], strides = [1, 1]} : vector<2x256xf32> to vector<2x64xf32>
    %136 = math.tanh %135 : vector<2x64xf32>
    %137 = vector.extract_strided_slice %134 {offsets = [0, 64], sizes = [2, 64], strides = [1, 1]} : vector<2x192xf32> to vector<2x64xf32>
    %138 = arith.mulf %137, %119 : vector<2x64xf32>
    %139 = vector.extract_strided_slice %134 {offsets = [0, 0], sizes = [2, 64], strides = [1, 1]} : vector<2x192xf32> to vector<2x64xf32>
    %140 = arith.mulf %139, %136 : vector<2x64xf32>
    %141 = arith.addf %138, %140 : vector<2x64xf32>
    %142 = vector.extract_strided_slice %134 {offsets = [0, 128], sizes = [2, 64], strides = [1, 1]} : vector<2x192xf32> to vector<2x64xf32>
    %143 = math.tanh %141 : vector<2x64xf32>
    %144 = arith.mulf %142, %143 : vector<2x64xf32>
    %145 = vector.extract_strided_slice %144 {offsets = [0, 0], sizes = [2, 32], strides = [1, 1]} : vector<2x64xf32> to vector<2x32xf32>
    %146 = vector.extract_strided_slice %144 {offsets = [0, 32], sizes = [2, 32], strides = [1, 1]} : vector<2x64xf32> to vector<2x32xf32>
    %147 = vector.extract_strided_slice %33 {offsets = [5, 0, 0], sizes = [1, 2, 256], strides = [1, 1, 1]} : vector<8x2x256xf32> to vector<1x2x256xf32>
    %148 = vector.shape_cast %147 : vector<1x2x256xf32> to vector<2x256xf32>
    %cst_19 = arith.constant dense<0.000000e+00> : vector<2x256xf32>
    %149 = tpu.matmul %144, %34, %cst_19 {dimension_numbers = #tpu.dot_dimension_numbers<[1], [0], [0], [1], [0, 0, 1, 1], [], []>} : vector<2x64xf32>, vector<64x256xf32>, vector<2x256xf32> -> vector<2x256xf32>
    %150 = arith.addf %148, %149 : vector<2x256xf32>
    %151 = vector.extract_strided_slice %150 {offsets = [0, 0], sizes = [2, 192], strides = [1, 1]} : vector<2x256xf32> to vector<2x192xf32>
    %152 = arith.negf %151 : vector<2x192xf32>
    %153 = math.exp %152 : vector<2x192xf32>
    %cst_20 = arith.constant 1.000000e+00 : f32
    %154 = vector.broadcast %cst_20 : f32 to vector<2x192xf32>
    %155 = arith.addf %154, %153 : vector<2x192xf32>
    %156 = arith.divf %154, %155 : vector<2x192xf32>
    %157 = vector.extract_strided_slice %150 {offsets = [0, 192], sizes = [2, 64], strides = [1, 1]} : vector<2x256xf32> to vector<2x64xf32>
    %158 = math.tanh %157 : vector<2x64xf32>
    %159 = vector.extract_strided_slice %156 {offsets = [0, 64], sizes = [2, 64], strides = [1, 1]} : vector<2x192xf32> to vector<2x64xf32>
    %160 = arith.mulf %159, %141 : vector<2x64xf32>
    %161 = vector.extract_strided_slice %156 {offsets = [0, 0], sizes = [2, 64], strides = [1, 1]} : vector<2x192xf32> to vector<2x64xf32>
    %162 = arith.mulf %161, %158 : vector<2x64xf32>
    %163 = arith.addf %160, %162 : vector<2x64xf32>
    %164 = vector.extract_strided_slice %156 {offsets = [0, 128], sizes = [2, 64], strides = [1, 1]} : vector<2x192xf32> to vector<2x64xf32>
    %165 = math.tanh %163 : vector<2x64xf32>
    %166 = arith.mulf %164, %165 : vector<2x64xf32>
    %167 = vector.extract_strided_slice %166 {offsets = [0, 0], sizes = [2, 32], strides = [1, 1]} : vector<2x64xf32> to vector<2x32xf32>
    %168 = vector.extract_strided_slice %166 {offsets = [0, 32], sizes = [2, 32], strides = [1, 1]} : vector<2x64xf32> to vector<2x32xf32>
    %169 = vector.extract_strided_slice %33 {offsets = [6, 0, 0], sizes = [1, 2, 256], strides = [1, 1, 1]} : vector<8x2x256xf32> to vector<1x2x256xf32>
    %170 = vector.shape_cast %169 : vector<1x2x256xf32> to vector<2x256xf32>
    %cst_21 = arith.constant dense<0.000000e+00> : vector<2x256xf32>
    %171 = tpu.matmul %166, %34, %cst_21 {dimension_numbers = #tpu.dot_dimension_numbers<[1], [0], [0], [1], [0, 0, 1, 1], [], []>} : vector<2x64xf32>, vector<64x256xf32>, vector<2x256xf32> -> vector<2x256xf32>
    %172 = arith.addf %170, %171 : vector<2x256xf32>
    %173 = vector.extract_strided_slice %172 {offsets = [0, 0], sizes = [2, 192], strides = [1, 1]} : vector<2x256xf32> to vector<2x192xf32>
    %174 = arith.negf %173 : vector<2x192xf32>
    %175 = math.exp %174 : vector<2x192xf32>
    %cst_22 = arith.constant 1.000000e+00 : f32
    %176 = vector.broadcast %cst_22 : f32 to vector<2x192xf32>
    %177 = arith.addf %176, %175 : vector<2x192xf32>
    %178 = arith.divf %176, %177 : vector<2x192xf32>
    %179 = vector.extract_strided_slice %172 {offsets = [0, 192], sizes = [2, 64], strides = [1, 1]} : vector<2x256xf32> to vector<2x64xf32>
    %180 = math.tanh %179 : vector<2x64xf32>
    %181 = vector.extract_strided_slice %178 {offsets = [0, 64], sizes = [2, 64], strides = [1, 1]} : vector<2x192xf32> to vector<2x64xf32>
    %182 = arith.mulf %181, %163 : vector<2x64xf32>
    %183 = vector.extract_strided_slice %178 {offsets = [0, 0], sizes = [2, 64], strides = [1, 1]} : vector<2x192xf32> to vector<2x64xf32>
    %184 = arith.mulf %183, %180 : vector<2x64xf32>
    %185 = arith.addf %182, %184 : vector<2x64xf32>
    %186 = vector.extract_strided_slice %178 {offsets = [0, 128], sizes = [2, 64], strides = [1, 1]} : vector<2x192xf32> to vector<2x64xf32>
    %187 = math.tanh %185 : vector<2x64xf32>
    %188 = arith.mulf %186, %187 : vector<2x64xf32>
    %189 = vector.extract_strided_slice %188 {offsets = [0, 0], sizes = [2, 32], strides = [1, 1]} : vector<2x64xf32> to vector<2x32xf32>
    %190 = vector.extract_strided_slice %188 {offsets = [0, 32], sizes = [2, 32], strides = [1, 1]} : vector<2x64xf32> to vector<2x32xf32>
    %191 = vector.extract_strided_slice %33 {offsets = [7, 0, 0], sizes = [1, 2, 256], strides = [1, 1, 1]} : vector<8x2x256xf32> to vector<1x2x256xf32>
    %192 = vector.shape_cast %191 : vector<1x2x256xf32> to vector<2x256xf32>
    %cst_23 = arith.constant dense<0.000000e+00> : vector<2x256xf32>
    %193 = tpu.matmul %188, %34, %cst_23 {dimension_numbers = #tpu.dot_dimension_numbers<[1], [0], [0], [1], [0, 0, 1, 1], [], []>} : vector<2x64xf32>, vector<64x256xf32>, vector<2x256xf32> -> vector<2x256xf32>
    %194 = arith.addf %192, %193 : vector<2x256xf32>
    %195 = vector.extract_strided_slice %194 {offsets = [0, 0], sizes = [2, 192], strides = [1, 1]} : vector<2x256xf32> to vector<2x192xf32>
    %196 = arith.negf %195 : vector<2x192xf32>
    %197 = math.exp %196 : vector<2x192xf32>
    %cst_24 = arith.constant 1.000000e+00 : f32
    %198 = vector.broadcast %cst_24 : f32 to vector<2x192xf32>
    %199 = arith.addf %198, %197 : vector<2x192xf32>
    %200 = arith.divf %198, %199 : vector<2x192xf32>
    %201 = vector.extract_strided_slice %194 {offsets = [0, 192], sizes = [2, 64], strides = [1, 1]} : vector<2x256xf32> to vector<2x64xf32>
    %202 = math.tanh %201 : vector<2x64xf32>
    %203 = vector.extract_strided_slice %200 {offsets = [0, 64], sizes = [2, 64], strides = [1, 1]} : vector<2x192xf32> to vector<2x64xf32>
    %204 = arith.mulf %203, %185 : vector<2x64xf32>
    %205 = vector.extract_strided_slice %200 {offsets = [0, 0], sizes = [2, 64], strides = [1, 1]} : vector<2x192xf32> to vector<2x64xf32>
    %206 = arith.mulf %205, %202 : vector<2x64xf32>
    %207 = arith.addf %204, %206 : vector<2x64xf32>
    %208 = vector.extract_strided_slice %200 {offsets = [0, 128], sizes = [2, 64], strides = [1, 1]} : vector<2x192xf32> to vector<2x64xf32>
    %209 = math.tanh %207 : vector<2x64xf32>
    %210 = arith.mulf %208, %209 : vector<2x64xf32>
    %211 = vector.extract_strided_slice %210 {offsets = [0, 0], sizes = [2, 32], strides = [1, 1]} : vector<2x64xf32> to vector<2x32xf32>
    %212 = vector.extract_strided_slice %210 {offsets = [0, 32], sizes = [2, 32], strides = [1, 1]} : vector<2x64xf32> to vector<2x32xf32>
    %213 = vector.shape_cast %57 : vector<2x32xf32> to vector<1x2x32xf32>
    %214 = vector.shape_cast %79 : vector<2x32xf32> to vector<1x2x32xf32>
    %215 = vector.shape_cast %101 : vector<2x32xf32> to vector<1x2x32xf32>
    %216 = vector.shape_cast %123 : vector<2x32xf32> to vector<1x2x32xf32>
    %217 = vector.shape_cast %145 : vector<2x32xf32> to vector<1x2x32xf32>
    %218 = vector.shape_cast %167 : vector<2x32xf32> to vector<1x2x32xf32>
    %219 = vector.shape_cast %189 : vector<2x32xf32> to vector<1x2x32xf32>
    %220 = vector.shape_cast %211 : vector<2x32xf32> to vector<1x2x32xf32>
    %221 = tpu.concatenate %213, %214, %215, %216, %217, %218, %219, %220 in 0 : vector<1x2x32xf32>, vector<1x2x32xf32>, vector<1x2x32xf32>, vector<1x2x32xf32>, vector<1x2x32xf32>, vector<1x2x32xf32>, vector<1x2x32xf32>, vector<1x2x32xf32> -> vector<8x2x32xf32>
    %222 = vector.shape_cast %212 : vector<2x32xf32> to vector<1x2x32xf32>
    %223 = vector.shape_cast %190 : vector<2x32xf32> to vector<1x2x32xf32>
    %224 = vector.shape_cast %168 : vector<2x32xf32> to vector<1x2x32xf32>
    %225 = vector.shape_cast %146 : vector<2x32xf32> to vector<1x2x32xf32>
    %226 = vector.shape_cast %124 : vector<2x32xf32> to vector<1x2x32xf32>
    %227 = vector.shape_cast %102 : vector<2x32xf32> to vector<1x2x32xf32>
    %228 = vector.shape_cast %80 : vector<2x32xf32> to vector<1x2x32xf32>
    %229 = vector.shape_cast %58 : vector<2x32xf32> to vector<1x2x32xf32>
    %230 = tpu.concatenate %222, %223, %224, %225, %226, %227, %228, %229 in 0 : vector<1x2x32xf32>, vector<1x2x32xf32>, vector<1x2x32xf32>, vector<1x2x32xf32>, vector<1x2x32xf32>, vector<1x2x32xf32>, vector<1x2x32xf32>, vector<1x2x32xf32> -> vector<8x2x32xf32>
    %231 = tpu.concatenate %221, %230 in 2 : vector<8x2x32xf32>, vector<8x2x32xf32> -> vector<8x2x64xf32>
    %c0_25 = arith.constant 0 : index
    %c0_26 = arith.constant 0 : index
    %232 = vector.load %arg4[%c0_25, %c0_26] : memref<8x64xf32, #tpu.memory_space<vmem>>, vector<1x64xf32>
    %c1 = arith.constant 1 : index
    %c0_27 = arith.constant 0 : index
    %233 = vector.load %arg4[%c1, %c0_27] : memref<8x64xf32, #tpu.memory_space<vmem>>, vector<1x64xf32>
    %cst_28 = arith.constant dense<0.000000e+00> : vector<8x2xf32>
    %234 = vector.multi_reduction <add>, %231, %cst_28 [2] : vector<8x2x64xf32> to vector<8x2xf32>
    %235 = vector.shape_cast %234 : vector<8x2xf32> to vector<8x2x1xf32>
    %cst_29 = arith.constant 6.400000e+01 : f32
    %236 = vector.broadcast %cst_29 : f32 to vector<8x2x1xf32>
    %237 = arith.divf %235, %236 : vector<8x2x1xf32>
    %238 = vector.broadcast %237 : vector<8x2x1xf32> to vector<8x2x64xf32>
    %239 = arith.subf %231, %238 : vector<8x2x64xf32>
    %240 = arith.mulf %239, %239 : vector<8x2x64xf32>
    %cst_30 = arith.constant dense<0.000000e+00> : vector<8x2xf32>
    %241 = vector.multi_reduction <add>, %240, %cst_30 [2] : vector<8x2x64xf32> to vector<8x2xf32>
    %242 = vector.shape_cast %241 : vector<8x2xf32> to vector<8x2x1xf32>
    %cst_31 = arith.constant 6.400000e+01 : f32
    %243 = vector.broadcast %cst_31 : f32 to vector<8x2x1xf32>
    %244 = arith.divf %242, %243 : vector<8x2x1xf32>
    %245 = vector.broadcast %237 : vector<8x2x1xf32> to vector<8x2x64xf32>
    %246 = arith.subf %231, %245 : vector<8x2x64xf32>
    %cst_32 = arith.constant 9.99999974E-6 : f32
    %247 = vector.broadcast %cst_32 : f32 to vector<8x2x1xf32>
    %248 = arith.addf %244, %247 : vector<8x2x1xf32>
    %249 = math.rsqrt %248 : vector<8x2x1xf32>
    %250 = vector.broadcast %249 : vector<8x2x1xf32> to vector<8x2x64xf32>
    %251 = arith.mulf %246, %250 : vector<8x2x64xf32>
    %252 = vector.shape_cast %232 : vector<1x64xf32> to vector<1x1x64xf32>
    %253 = vector.broadcast %252 : vector<1x1x64xf32> to vector<8x2x64xf32>
    %254 = arith.mulf %251, %253 : vector<8x2x64xf32>
    %255 = vector.shape_cast %233 : vector<1x64xf32> to vector<1x1x64xf32>
    %256 = vector.broadcast %255 : vector<1x1x64xf32> to vector<8x2x64xf32>
    %257 = arith.addf %254, %256 : vector<8x2x64xf32>
    %c1_33 = arith.constant 1 : index
    %c0_34 = arith.constant 0 : index
    %258 = vector.load %arg3[%c1_33, %c0_34] : memref<2x256xf32, #tpu.memory_space<vmem>>, vector<1x256xf32>
    %259 = vector.extract_strided_slice %257 {offsets = [7, 0, 0], sizes = [1, 2, 64], strides = [1, 1, 1]} : vector<8x2x64xf32> to vector<1x2x64xf32>
    %260 = vector.shape_cast %259 : vector<1x2x64xf32> to vector<2x64xf32>
    %261 = vector.extract_strided_slice %257 {offsets = [6, 0, 0], sizes = [1, 2, 64], strides = [1, 1, 1]} : vector<8x2x64xf32> to vector<1x2x64xf32>
    %262 = vector.shape_cast %261 : vector<1x2x64xf32> to vector<2x64xf32>
    %263 = vector.extract_strided_slice %257 {offsets = [5, 0, 0], sizes = [1, 2, 64], strides = [1, 1, 1]} : vector<8x2x64xf32> to vector<1x2x64xf32>
    %264 = vector.shape_cast %263 : vector<1x2x64xf32> to vector<2x64xf32>
    %265 = vector.extract_strided_slice %257 {offsets = [4, 0, 0], sizes = [1, 2, 64], strides = [1, 1, 1]} : vector<8x2x64xf32> to vector<1x2x64xf32>
    %266 = vector.shape_cast %265 : vector<1x2x64xf32> to vector<2x64xf32>
    %267 = vector.extract_strided_slice %257 {offsets = [3, 0, 0], sizes = [1, 2, 64], strides = [1, 1, 1]} : vector<8x2x64xf32> to vector<1x2x64xf32>
    %268 = vector.shape_cast %267 : vector<1x2x64xf32> to vector<2x64xf32>
    %269 = vector.extract_strided_slice %257 {offsets = [2, 0, 0], sizes = [1, 2, 64], strides = [1, 1, 1]} : vector<8x2x64xf32> to vector<1x2x64xf32>
    %270 = vector.shape_cast %269 : vector<1x2x64xf32> to vector<2x64xf32>
    %271 = vector.extract_strided_slice %257 {offsets = [1, 0, 0], sizes = [1, 2, 64], strides = [1, 1, 1]} : vector<8x2x64xf32> to vector<1x2x64xf32>
    %272 = vector.shape_cast %271 : vector<1x2x64xf32> to vector<2x64xf32>
    %273 = vector.extract_strided_slice %257 {offsets = [0, 0, 0], sizes = [1, 2, 64], strides = [1, 1, 1]} : vector<8x2x64xf32> to vector<1x2x64xf32>
    %274 = vector.shape_cast %273 : vector<1x2x64xf32> to vector<2x64xf32>
    %275 = vector.shape_cast %260 : vector<2x64xf32> to vector<1x2x64xf32>
    %276 = vector.shape_cast %262 : vector<2x64xf32> to vector<1x2x64xf32>
    %277 = vector.shape_cast %264 : vector<2x64xf32> to vector<1x2x64xf32>
    %278 = vector.shape_cast %266 : vector<2x64xf32> to vector<1x2x64xf32>
    %279 = vector.shape_cast %268 : vector<2x64xf32> to vector<1x2x64xf32>
    %280 = vector.shape_cast %270 : vector<2x64xf32> to vector<1x2x64xf32>
    %281 = vector.shape_cast %272 : vector<2x64xf32> to vector<1x2x64xf32>
    %282 = vector.shape_cast %274 : vector<2x64xf32> to vector<1x2x64xf32>
    %283 = tpu.concatenate %275, %276, %277, %278, %279, %280, %281, %282 in 0 : vector<1x2x64xf32>, vector<1x2x64xf32>, vector<1x2x64xf32>, vector<1x2x64xf32>, vector<1x2x64xf32>, vector<1x2x64xf32>, vector<1x2x64xf32>, vector<1x2x64xf32> -> vector<8x2x64xf32>
    %284 = tpu.concatenate %257, %283 in 2 : vector<8x2x64xf32>, vector<8x2x64xf32> -> vector<8x2x128xf32>
    %285 = vector.shape_cast %284 : vector<8x2x128xf32> to vector<16x128xf32>
    %c0_35 = arith.constant 0 : index
    %c0_36 = arith.constant 0 : index
    %286 = vector.load %arg2[%c0_35, %c0_36] : memref<192x256xf32, #tpu.memory_space<vmem>>, vector<128x256xf32>
    %cst_37 = arith.constant dense<0.000000e+00> : vector<16x256xf32>
    %287 = tpu.matmul %285, %286, %cst_37 {dimension_numbers = #tpu.dot_dimension_numbers<[1], [0], [0], [1], [0, 0, 1, 1], [], []>} : vector<16x128xf32>, vector<128x256xf32>, vector<16x256xf32> -> vector<16x256xf32>
    %288 = vector.broadcast %258 : vector<1x256xf32> to vector<16x256xf32>
    %289 = arith.addf %287, %288 : vector<16x256xf32>
    %290 = vector.shape_cast %289 : vector<16x256xf32> to vector<8x2x256xf32>
    %c128 = arith.constant 128 : index
    %c0_38 = arith.constant 0 : index
    %291 = vector.load %arg2[%c128, %c0_38] : memref<192x256xf32, #tpu.memory_space<vmem>>, vector<64x256xf32>
    %cst_39 = arith.constant 0.000000e+00 : f32
    %292 = vector.broadcast %cst_39 : f32 to vector<2x64xf32>
    %cst_40 = arith.constant 0.000000e+00 : f32
    %293 = vector.broadcast %cst_40 : f32 to vector<2x64xf32>
    %294 = vector.extract_strided_slice %290 {offsets = [0, 0, 0], sizes = [1, 2, 256], strides = [1, 1, 1]} : vector<8x2x256xf32> to vector<1x2x256xf32>
    %295 = vector.shape_cast %294 : vector<1x2x256xf32> to vector<2x256xf32>
    %cst_41 = arith.constant dense<0.000000e+00> : vector<2x256xf32>
    %296 = tpu.matmul %292, %291, %cst_41 {dimension_numbers = #tpu.dot_dimension_numbers<[1], [0], [0], [1], [0, 0, 1, 1], [], []>} : vector<2x64xf32>, vector<64x256xf32>, vector<2x256xf32> -> vector<2x256xf32>
    %297 = arith.addf %295, %296 : vector<2x256xf32>
    %298 = vector.extract_strided_slice %297 {offsets = [0, 0], sizes = [2, 192], strides = [1, 1]} : vector<2x256xf32> to vector<2x192xf32>
    %299 = arith.negf %298 : vector<2x192xf32>
    %300 = math.exp %299 : vector<2x192xf32>
    %cst_42 = arith.constant 1.000000e+00 : f32
    %301 = vector.broadcast %cst_42 : f32 to vector<2x192xf32>
    %302 = arith.addf %301, %300 : vector<2x192xf32>
    %303 = arith.divf %301, %302 : vector<2x192xf32>
    %304 = vector.extract_strided_slice %297 {offsets = [0, 192], sizes = [2, 64], strides = [1, 1]} : vector<2x256xf32> to vector<2x64xf32>
    %305 = math.tanh %304 : vector<2x64xf32>
    %306 = vector.extract_strided_slice %303 {offsets = [0, 64], sizes = [2, 64], strides = [1, 1]} : vector<2x192xf32> to vector<2x64xf32>
    %307 = arith.mulf %306, %293 : vector<2x64xf32>
    %308 = vector.extract_strided_slice %303 {offsets = [0, 0], sizes = [2, 64], strides = [1, 1]} : vector<2x192xf32> to vector<2x64xf32>
    %309 = arith.mulf %308, %305 : vector<2x64xf32>
    %310 = arith.addf %307, %309 : vector<2x64xf32>
    %311 = vector.extract_strided_slice %303 {offsets = [0, 128], sizes = [2, 64], strides = [1, 1]} : vector<2x192xf32> to vector<2x64xf32>
    %312 = math.tanh %310 : vector<2x64xf32>
    %313 = arith.mulf %311, %312 : vector<2x64xf32>
    %314 = vector.extract_strided_slice %313 {offsets = [0, 0], sizes = [2, 32], strides = [1, 1]} : vector<2x64xf32> to vector<2x32xf32>
    %315 = vector.extract_strided_slice %313 {offsets = [0, 32], sizes = [2, 32], strides = [1, 1]} : vector<2x64xf32> to vector<2x32xf32>
    %316 = vector.extract_strided_slice %290 {offsets = [1, 0, 0], sizes = [1, 2, 256], strides = [1, 1, 1]} : vector<8x2x256xf32> to vector<1x2x256xf32>
    %317 = vector.shape_cast %316 : vector<1x2x256xf32> to vector<2x256xf32>
    %cst_43 = arith.constant dense<0.000000e+00> : vector<2x256xf32>
    %318 = tpu.matmul %313, %291, %cst_43 {dimension_numbers = #tpu.dot_dimension_numbers<[1], [0], [0], [1], [0, 0, 1, 1], [], []>} : vector<2x64xf32>, vector<64x256xf32>, vector<2x256xf32> -> vector<2x256xf32>
    %319 = arith.addf %317, %318 : vector<2x256xf32>
    %320 = vector.extract_strided_slice %319 {offsets = [0, 0], sizes = [2, 192], strides = [1, 1]} : vector<2x256xf32> to vector<2x192xf32>
    %321 = arith.negf %320 : vector<2x192xf32>
    %322 = math.exp %321 : vector<2x192xf32>
    %cst_44 = arith.constant 1.000000e+00 : f32
    %323 = vector.broadcast %cst_44 : f32 to vector<2x192xf32>
    %324 = arith.addf %323, %322 : vector<2x192xf32>
    %325 = arith.divf %323, %324 : vector<2x192xf32>
    %326 = vector.extract_strided_slice %319 {offsets = [0, 192], sizes = [2, 64], strides = [1, 1]} : vector<2x256xf32> to vector<2x64xf32>
    %327 = math.tanh %326 : vector<2x64xf32>
    %328 = vector.extract_strided_slice %325 {offsets = [0, 64], sizes = [2, 64], strides = [1, 1]} : vector<2x192xf32> to vector<2x64xf32>
    %329 = arith.mulf %328, %310 : vector<2x64xf32>
    %330 = vector.extract_strided_slice %325 {offsets = [0, 0], sizes = [2, 64], strides = [1, 1]} : vector<2x192xf32> to vector<2x64xf32>
    %331 = arith.mulf %330, %327 : vector<2x64xf32>
    %332 = arith.addf %329, %331 : vector<2x64xf32>
    %333 = vector.extract_strided_slice %325 {offsets = [0, 128], sizes = [2, 64], strides = [1, 1]} : vector<2x192xf32> to vector<2x64xf32>
    %334 = math.tanh %332 : vector<2x64xf32>
    %335 = arith.mulf %333, %334 : vector<2x64xf32>
    %336 = vector.extract_strided_slice %335 {offsets = [0, 0], sizes = [2, 32], strides = [1, 1]} : vector<2x64xf32> to vector<2x32xf32>
    %337 = vector.extract_strided_slice %335 {offsets = [0, 32], sizes = [2, 32], strides = [1, 1]} : vector<2x64xf32> to vector<2x32xf32>
    %338 = vector.extract_strided_slice %290 {offsets = [2, 0, 0], sizes = [1, 2, 256], strides = [1, 1, 1]} : vector<8x2x256xf32> to vector<1x2x256xf32>
    %339 = vector.shape_cast %338 : vector<1x2x256xf32> to vector<2x256xf32>
    %cst_45 = arith.constant dense<0.000000e+00> : vector<2x256xf32>
    %340 = tpu.matmul %335, %291, %cst_45 {dimension_numbers = #tpu.dot_dimension_numbers<[1], [0], [0], [1], [0, 0, 1, 1], [], []>} : vector<2x64xf32>, vector<64x256xf32>, vector<2x256xf32> -> vector<2x256xf32>
    %341 = arith.addf %339, %340 : vector<2x256xf32>
    %342 = vector.extract_strided_slice %341 {offsets = [0, 0], sizes = [2, 192], strides = [1, 1]} : vector<2x256xf32> to vector<2x192xf32>
    %343 = arith.negf %342 : vector<2x192xf32>
    %344 = math.exp %343 : vector<2x192xf32>
    %cst_46 = arith.constant 1.000000e+00 : f32
    %345 = vector.broadcast %cst_46 : f32 to vector<2x192xf32>
    %346 = arith.addf %345, %344 : vector<2x192xf32>
    %347 = arith.divf %345, %346 : vector<2x192xf32>
    %348 = vector.extract_strided_slice %341 {offsets = [0, 192], sizes = [2, 64], strides = [1, 1]} : vector<2x256xf32> to vector<2x64xf32>
    %349 = math.tanh %348 : vector<2x64xf32>
    %350 = vector.extract_strided_slice %347 {offsets = [0, 64], sizes = [2, 64], strides = [1, 1]} : vector<2x192xf32> to vector<2x64xf32>
    %351 = arith.mulf %350, %332 : vector<2x64xf32>
    %352 = vector.extract_strided_slice %347 {offsets = [0, 0], sizes = [2, 64], strides = [1, 1]} : vector<2x192xf32> to vector<2x64xf32>
    %353 = arith.mulf %352, %349 : vector<2x64xf32>
    %354 = arith.addf %351, %353 : vector<2x64xf32>
    %355 = vector.extract_strided_slice %347 {offsets = [0, 128], sizes = [2, 64], strides = [1, 1]} : vector<2x192xf32> to vector<2x64xf32>
    %356 = math.tanh %354 : vector<2x64xf32>
    %357 = arith.mulf %355, %356 : vector<2x64xf32>
    %358 = vector.extract_strided_slice %357 {offsets = [0, 0], sizes = [2, 32], strides = [1, 1]} : vector<2x64xf32> to vector<2x32xf32>
    %359 = vector.extract_strided_slice %357 {offsets = [0, 32], sizes = [2, 32], strides = [1, 1]} : vector<2x64xf32> to vector<2x32xf32>
    %360 = vector.extract_strided_slice %290 {offsets = [3, 0, 0], sizes = [1, 2, 256], strides = [1, 1, 1]} : vector<8x2x256xf32> to vector<1x2x256xf32>
    %361 = vector.shape_cast %360 : vector<1x2x256xf32> to vector<2x256xf32>
    %cst_47 = arith.constant dense<0.000000e+00> : vector<2x256xf32>
    %362 = tpu.matmul %357, %291, %cst_47 {dimension_numbers = #tpu.dot_dimension_numbers<[1], [0], [0], [1], [0, 0, 1, 1], [], []>} : vector<2x64xf32>, vector<64x256xf32>, vector<2x256xf32> -> vector<2x256xf32>
    %363 = arith.addf %361, %362 : vector<2x256xf32>
    %364 = vector.extract_strided_slice %363 {offsets = [0, 0], sizes = [2, 192], strides = [1, 1]} : vector<2x256xf32> to vector<2x192xf32>
    %365 = arith.negf %364 : vector<2x192xf32>
    %366 = math.exp %365 : vector<2x192xf32>
    %cst_48 = arith.constant 1.000000e+00 : f32
    %367 = vector.broadcast %cst_48 : f32 to vector<2x192xf32>
    %368 = arith.addf %367, %366 : vector<2x192xf32>
    %369 = arith.divf %367, %368 : vector<2x192xf32>
    %370 = vector.extract_strided_slice %363 {offsets = [0, 192], sizes = [2, 64], strides = [1, 1]} : vector<2x256xf32> to vector<2x64xf32>
    %371 = math.tanh %370 : vector<2x64xf32>
    %372 = vector.extract_strided_slice %369 {offsets = [0, 64], sizes = [2, 64], strides = [1, 1]} : vector<2x192xf32> to vector<2x64xf32>
    %373 = arith.mulf %372, %354 : vector<2x64xf32>
    %374 = vector.extract_strided_slice %369 {offsets = [0, 0], sizes = [2, 64], strides = [1, 1]} : vector<2x192xf32> to vector<2x64xf32>
    %375 = arith.mulf %374, %371 : vector<2x64xf32>
    %376 = arith.addf %373, %375 : vector<2x64xf32>
    %377 = vector.extract_strided_slice %369 {offsets = [0, 128], sizes = [2, 64], strides = [1, 1]} : vector<2x192xf32> to vector<2x64xf32>
    %378 = math.tanh %376 : vector<2x64xf32>
    %379 = arith.mulf %377, %378 : vector<2x64xf32>
    %380 = vector.extract_strided_slice %379 {offsets = [0, 0], sizes = [2, 32], strides = [1, 1]} : vector<2x64xf32> to vector<2x32xf32>
    %381 = vector.extract_strided_slice %379 {offsets = [0, 32], sizes = [2, 32], strides = [1, 1]} : vector<2x64xf32> to vector<2x32xf32>
    %382 = vector.extract_strided_slice %290 {offsets = [4, 0, 0], sizes = [1, 2, 256], strides = [1, 1, 1]} : vector<8x2x256xf32> to vector<1x2x256xf32>
    %383 = vector.shape_cast %382 : vector<1x2x256xf32> to vector<2x256xf32>
    %cst_49 = arith.constant dense<0.000000e+00> : vector<2x256xf32>
    %384 = tpu.matmul %379, %291, %cst_49 {dimension_numbers = #tpu.dot_dimension_numbers<[1], [0], [0], [1], [0, 0, 1, 1], [], []>} : vector<2x64xf32>, vector<64x256xf32>, vector<2x256xf32> -> vector<2x256xf32>
    %385 = arith.addf %383, %384 : vector<2x256xf32>
    %386 = vector.extract_strided_slice %385 {offsets = [0, 0], sizes = [2, 192], strides = [1, 1]} : vector<2x256xf32> to vector<2x192xf32>
    %387 = arith.negf %386 : vector<2x192xf32>
    %388 = math.exp %387 : vector<2x192xf32>
    %cst_50 = arith.constant 1.000000e+00 : f32
    %389 = vector.broadcast %cst_50 : f32 to vector<2x192xf32>
    %390 = arith.addf %389, %388 : vector<2x192xf32>
    %391 = arith.divf %389, %390 : vector<2x192xf32>
    %392 = vector.extract_strided_slice %385 {offsets = [0, 192], sizes = [2, 64], strides = [1, 1]} : vector<2x256xf32> to vector<2x64xf32>
    %393 = math.tanh %392 : vector<2x64xf32>
    %394 = vector.extract_strided_slice %391 {offsets = [0, 64], sizes = [2, 64], strides = [1, 1]} : vector<2x192xf32> to vector<2x64xf32>
    %395 = arith.mulf %394, %376 : vector<2x64xf32>
    %396 = vector.extract_strided_slice %391 {offsets = [0, 0], sizes = [2, 64], strides = [1, 1]} : vector<2x192xf32> to vector<2x64xf32>
    %397 = arith.mulf %396, %393 : vector<2x64xf32>
    %398 = arith.addf %395, %397 : vector<2x64xf32>
    %399 = vector.extract_strided_slice %391 {offsets = [0, 128], sizes = [2, 64], strides = [1, 1]} : vector<2x192xf32> to vector<2x64xf32>
    %400 = math.tanh %398 : vector<2x64xf32>
    %401 = arith.mulf %399, %400 : vector<2x64xf32>
    %402 = vector.extract_strided_slice %401 {offsets = [0, 0], sizes = [2, 32], strides = [1, 1]} : vector<2x64xf32> to vector<2x32xf32>
    %403 = vector.extract_strided_slice %401 {offsets = [0, 32], sizes = [2, 32], strides = [1, 1]} : vector<2x64xf32> to vector<2x32xf32>
    %404 = vector.extract_strided_slice %290 {offsets = [5, 0, 0], sizes = [1, 2, 256], strides = [1, 1, 1]} : vector<8x2x256xf32> to vector<1x2x256xf32>
    %405 = vector.shape_cast %404 : vector<1x2x256xf32> to vector<2x256xf32>
    %cst_51 = arith.constant dense<0.000000e+00> : vector<2x256xf32>
    %406 = tpu.matmul %401, %291, %cst_51 {dimension_numbers = #tpu.dot_dimension_numbers<[1], [0], [0], [1], [0, 0, 1, 1], [], []>} : vector<2x64xf32>, vector<64x256xf32>, vector<2x256xf32> -> vector<2x256xf32>
    %407 = arith.addf %405, %406 : vector<2x256xf32>
    %408 = vector.extract_strided_slice %407 {offsets = [0, 0], sizes = [2, 192], strides = [1, 1]} : vector<2x256xf32> to vector<2x192xf32>
    %409 = arith.negf %408 : vector<2x192xf32>
    %410 = math.exp %409 : vector<2x192xf32>
    %cst_52 = arith.constant 1.000000e+00 : f32
    %411 = vector.broadcast %cst_52 : f32 to vector<2x192xf32>
    %412 = arith.addf %411, %410 : vector<2x192xf32>
    %413 = arith.divf %411, %412 : vector<2x192xf32>
    %414 = vector.extract_strided_slice %407 {offsets = [0, 192], sizes = [2, 64], strides = [1, 1]} : vector<2x256xf32> to vector<2x64xf32>
    %415 = math.tanh %414 : vector<2x64xf32>
    %416 = vector.extract_strided_slice %413 {offsets = [0, 64], sizes = [2, 64], strides = [1, 1]} : vector<2x192xf32> to vector<2x64xf32>
    %417 = arith.mulf %416, %398 : vector<2x64xf32>
    %418 = vector.extract_strided_slice %413 {offsets = [0, 0], sizes = [2, 64], strides = [1, 1]} : vector<2x192xf32> to vector<2x64xf32>
    %419 = arith.mulf %418, %415 : vector<2x64xf32>
    %420 = arith.addf %417, %419 : vector<2x64xf32>
    %421 = vector.extract_strided_slice %413 {offsets = [0, 128], sizes = [2, 64], strides = [1, 1]} : vector<2x192xf32> to vector<2x64xf32>
    %422 = math.tanh %420 : vector<2x64xf32>
    %423 = arith.mulf %421, %422 : vector<2x64xf32>
    %424 = vector.extract_strided_slice %423 {offsets = [0, 0], sizes = [2, 32], strides = [1, 1]} : vector<2x64xf32> to vector<2x32xf32>
    %425 = vector.extract_strided_slice %423 {offsets = [0, 32], sizes = [2, 32], strides = [1, 1]} : vector<2x64xf32> to vector<2x32xf32>
    %426 = vector.extract_strided_slice %290 {offsets = [6, 0, 0], sizes = [1, 2, 256], strides = [1, 1, 1]} : vector<8x2x256xf32> to vector<1x2x256xf32>
    %427 = vector.shape_cast %426 : vector<1x2x256xf32> to vector<2x256xf32>
    %cst_53 = arith.constant dense<0.000000e+00> : vector<2x256xf32>
    %428 = tpu.matmul %423, %291, %cst_53 {dimension_numbers = #tpu.dot_dimension_numbers<[1], [0], [0], [1], [0, 0, 1, 1], [], []>} : vector<2x64xf32>, vector<64x256xf32>, vector<2x256xf32> -> vector<2x256xf32>
    %429 = arith.addf %427, %428 : vector<2x256xf32>
    %430 = vector.extract_strided_slice %429 {offsets = [0, 0], sizes = [2, 192], strides = [1, 1]} : vector<2x256xf32> to vector<2x192xf32>
    %431 = arith.negf %430 : vector<2x192xf32>
    %432 = math.exp %431 : vector<2x192xf32>
    %cst_54 = arith.constant 1.000000e+00 : f32
    %433 = vector.broadcast %cst_54 : f32 to vector<2x192xf32>
    %434 = arith.addf %433, %432 : vector<2x192xf32>
    %435 = arith.divf %433, %434 : vector<2x192xf32>
    %436 = vector.extract_strided_slice %429 {offsets = [0, 192], sizes = [2, 64], strides = [1, 1]} : vector<2x256xf32> to vector<2x64xf32>
    %437 = math.tanh %436 : vector<2x64xf32>
    %438 = vector.extract_strided_slice %435 {offsets = [0, 64], sizes = [2, 64], strides = [1, 1]} : vector<2x192xf32> to vector<2x64xf32>
    %439 = arith.mulf %438, %420 : vector<2x64xf32>
    %440 = vector.extract_strided_slice %435 {offsets = [0, 0], sizes = [2, 64], strides = [1, 1]} : vector<2x192xf32> to vector<2x64xf32>
    %441 = arith.mulf %440, %437 : vector<2x64xf32>
    %442 = arith.addf %439, %441 : vector<2x64xf32>
    %443 = vector.extract_strided_slice %435 {offsets = [0, 128], sizes = [2, 64], strides = [1, 1]} : vector<2x192xf32> to vector<2x64xf32>
    %444 = math.tanh %442 : vector<2x64xf32>
    %445 = arith.mulf %443, %444 : vector<2x64xf32>
    %446 = vector.extract_strided_slice %445 {offsets = [0, 0], sizes = [2, 32], strides = [1, 1]} : vector<2x64xf32> to vector<2x32xf32>
    %447 = vector.extract_strided_slice %445 {offsets = [0, 32], sizes = [2, 32], strides = [1, 1]} : vector<2x64xf32> to vector<2x32xf32>
    %448 = vector.extract_strided_slice %290 {offsets = [7, 0, 0], sizes = [1, 2, 256], strides = [1, 1, 1]} : vector<8x2x256xf32> to vector<1x2x256xf32>
    %449 = vector.shape_cast %448 : vector<1x2x256xf32> to vector<2x256xf32>
    %cst_55 = arith.constant dense<0.000000e+00> : vector<2x256xf32>
    %450 = tpu.matmul %445, %291, %cst_55 {dimension_numbers = #tpu.dot_dimension_numbers<[1], [0], [0], [1], [0, 0, 1, 1], [], []>} : vector<2x64xf32>, vector<64x256xf32>, vector<2x256xf32> -> vector<2x256xf32>
    %451 = arith.addf %449, %450 : vector<2x256xf32>
    %452 = vector.extract_strided_slice %451 {offsets = [0, 0], sizes = [2, 192], strides = [1, 1]} : vector<2x256xf32> to vector<2x192xf32>
    %453 = arith.negf %452 : vector<2x192xf32>
    %454 = math.exp %453 : vector<2x192xf32>
    %cst_56 = arith.constant 1.000000e+00 : f32
    %455 = vector.broadcast %cst_56 : f32 to vector<2x192xf32>
    %456 = arith.addf %455, %454 : vector<2x192xf32>
    %457 = arith.divf %455, %456 : vector<2x192xf32>
    %458 = vector.extract_strided_slice %451 {offsets = [0, 192], sizes = [2, 64], strides = [1, 1]} : vector<2x256xf32> to vector<2x64xf32>
    %459 = math.tanh %458 : vector<2x64xf32>
    %460 = vector.extract_strided_slice %457 {offsets = [0, 64], sizes = [2, 64], strides = [1, 1]} : vector<2x192xf32> to vector<2x64xf32>
    %461 = arith.mulf %460, %442 : vector<2x64xf32>
    %462 = vector.extract_strided_slice %457 {offsets = [0, 0], sizes = [2, 64], strides = [1, 1]} : vector<2x192xf32> to vector<2x64xf32>
    %463 = arith.mulf %462, %459 : vector<2x64xf32>
    %464 = arith.addf %461, %463 : vector<2x64xf32>
    %465 = vector.extract_strided_slice %457 {offsets = [0, 128], sizes = [2, 64], strides = [1, 1]} : vector<2x192xf32> to vector<2x64xf32>
    %466 = math.tanh %464 : vector<2x64xf32>
    %467 = arith.mulf %465, %466 : vector<2x64xf32>
    %468 = vector.extract_strided_slice %467 {offsets = [0, 0], sizes = [2, 32], strides = [1, 1]} : vector<2x64xf32> to vector<2x32xf32>
    %469 = vector.extract_strided_slice %467 {offsets = [0, 32], sizes = [2, 32], strides = [1, 1]} : vector<2x64xf32> to vector<2x32xf32>
    %470 = vector.shape_cast %314 : vector<2x32xf32> to vector<2x1x32xf32>
    %471 = vector.shape_cast %336 : vector<2x32xf32> to vector<2x1x32xf32>
    %472 = vector.shape_cast %358 : vector<2x32xf32> to vector<2x1x32xf32>
    %473 = vector.shape_cast %380 : vector<2x32xf32> to vector<2x1x32xf32>
    %474 = vector.shape_cast %402 : vector<2x32xf32> to vector<2x1x32xf32>
    %475 = vector.shape_cast %424 : vector<2x32xf32> to vector<2x1x32xf32>
    %476 = vector.shape_cast %446 : vector<2x32xf32> to vector<2x1x32xf32>
    %477 = vector.shape_cast %468 : vector<2x32xf32> to vector<2x1x32xf32>
    %478 = tpu.concatenate %470, %471, %472, %473, %474, %475, %476, %477 in 1 : vector<2x1x32xf32>, vector<2x1x32xf32>, vector<2x1x32xf32>, vector<2x1x32xf32>, vector<2x1x32xf32>, vector<2x1x32xf32>, vector<2x1x32xf32>, vector<2x1x32xf32> -> vector<2x8x32xf32>
    %479 = vector.shape_cast %469 : vector<2x32xf32> to vector<2x1x32xf32>
    %480 = vector.shape_cast %447 : vector<2x32xf32> to vector<2x1x32xf32>
    %481 = vector.shape_cast %425 : vector<2x32xf32> to vector<2x1x32xf32>
    %482 = vector.shape_cast %403 : vector<2x32xf32> to vector<2x1x32xf32>
    %483 = vector.shape_cast %381 : vector<2x32xf32> to vector<2x1x32xf32>
    %484 = vector.shape_cast %359 : vector<2x32xf32> to vector<2x1x32xf32>
    %485 = vector.shape_cast %337 : vector<2x32xf32> to vector<2x1x32xf32>
    %486 = vector.shape_cast %315 : vector<2x32xf32> to vector<2x1x32xf32>
    %487 = tpu.concatenate %479, %480, %481, %482, %483, %484, %485, %486 in 1 : vector<2x1x32xf32>, vector<2x1x32xf32>, vector<2x1x32xf32>, vector<2x1x32xf32>, vector<2x1x32xf32>, vector<2x1x32xf32>, vector<2x1x32xf32>, vector<2x1x32xf32> -> vector<2x8x32xf32>
    %488 = tpu.concatenate %478, %487 in 2 : vector<2x8x32xf32>, vector<2x8x32xf32> -> vector<2x8x64xf32>
    %c2 = arith.constant 2 : index
    %c0_57 = arith.constant 0 : index
    %489 = vector.load %arg4[%c2, %c0_57] : memref<8x64xf32, #tpu.memory_space<vmem>>, vector<1x64xf32>
    %c3 = arith.constant 3 : index
    %c0_58 = arith.constant 0 : index
    %490 = vector.load %arg4[%c3, %c0_58] : memref<8x64xf32, #tpu.memory_space<vmem>>, vector<1x64xf32>
    %cst_59 = arith.constant dense<0.000000e+00> : vector<2x8xf32>
    %491 = vector.multi_reduction <add>, %488, %cst_59 [2] : vector<2x8x64xf32> to vector<2x8xf32>
    %492 = vector.shape_cast %491 : vector<2x8xf32> to vector<2x8x1xf32>
    %cst_60 = arith.constant 6.400000e+01 : f32
    %493 = vector.broadcast %cst_60 : f32 to vector<2x8x1xf32>
    %494 = arith.divf %492, %493 : vector<2x8x1xf32>
    %495 = vector.broadcast %494 : vector<2x8x1xf32> to vector<2x8x64xf32>
    %496 = arith.subf %488, %495 : vector<2x8x64xf32>
    %497 = arith.mulf %496, %496 : vector<2x8x64xf32>
    %cst_61 = arith.constant dense<0.000000e+00> : vector<2x8xf32>
    %498 = vector.multi_reduction <add>, %497, %cst_61 [2] : vector<2x8x64xf32> to vector<2x8xf32>
    %499 = vector.shape_cast %498 : vector<2x8xf32> to vector<2x8x1xf32>
    %cst_62 = arith.constant 6.400000e+01 : f32
    %500 = vector.broadcast %cst_62 : f32 to vector<2x8x1xf32>
    %501 = arith.divf %499, %500 : vector<2x8x1xf32>
    %502 = vector.broadcast %494 : vector<2x8x1xf32> to vector<2x8x64xf32>
    %503 = arith.subf %488, %502 : vector<2x8x64xf32>
    %cst_63 = arith.constant 9.99999974E-6 : f32
    %504 = vector.broadcast %cst_63 : f32 to vector<2x8x1xf32>
    %505 = arith.addf %501, %504 : vector<2x8x1xf32>
    %506 = math.rsqrt %505 : vector<2x8x1xf32>
    %507 = vector.broadcast %506 : vector<2x8x1xf32> to vector<2x8x64xf32>
    %508 = arith.mulf %503, %507 : vector<2x8x64xf32>
    %509 = vector.shape_cast %489 : vector<1x64xf32> to vector<1x1x64xf32>
    %510 = vector.broadcast %509 : vector<1x1x64xf32> to vector<2x8x64xf32>
    %511 = arith.mulf %508, %510 : vector<2x8x64xf32>
    %512 = vector.shape_cast %490 : vector<1x64xf32> to vector<1x1x64xf32>
    %513 = vector.broadcast %512 : vector<1x1x64xf32> to vector<2x8x64xf32>
    %514 = arith.addf %511, %513 : vector<2x8x64xf32>
    %c4 = arith.constant 4 : index
    %c0_64 = arith.constant 0 : index
    %515 = vector.load %arg4[%c4, %c0_64] : memref<8x64xf32, #tpu.memory_space<vmem>>, vector<1x64xf32>
    %516 = vector.shape_cast %515 : vector<1x64xf32> to vector<1x1x64xf32>
    %517 = vector.broadcast %516 : vector<1x1x64xf32> to vector<2x8x64xf32>
    %518 = arith.mulf %514, %517 : vector<2x8x64xf32>
    %cst_65 = arith.constant dense<0.000000e+00> : vector<2x8xf32>
    %519 = vector.multi_reduction <add>, %518, %cst_65 [2] : vector<2x8x64xf32> to vector<2x8xf32>
    %c5 = arith.constant 5 : index
    %c0_66 = arith.constant 0 : index
    %520 = vector.load %arg4[%c5, %c0_66] : memref<8x64xf32, #tpu.memory_space<vmem>>, vector<1x1xf32>
    %521 = vector.broadcast %520 : vector<1x1xf32> to vector<2x8xf32>
    %522 = arith.addf %519, %521 : vector<2x8xf32>
    %c0_67 = arith.constant 0 : index
    %c0_68 = arith.constant 0 : index
    %523 = vector.load %arg5[%c0_67, %c0_68] : memref<2x8xf32, #tpu.memory_space<vmem>>, vector<2x8xf32>
    tpu.vector_store %arg5[%c0_67, %c0_68], %522 {strides = array<i32>} : memref<2x8xf32, #tpu.memory_space<vmem>>, vector<2x8xf32>,
    return
  }
}

</mosaic_0001>

<llo_original>
// kernel: fuel_consumption_forward.1
$region0: #{fuel_consumption_forward.1}
  #allocation0 [shape = 'u32[]', space=smem, size = 0x4, offset = 0x4, fixed_abs, tag = 'smem constant byte address 0x4 - core index']
  #allocation1 [shape = 'u32[144,128]{1,0:T(1,128)}', space=vmem, size = 0x12000, scoped, tag = 'internal scratch']
  %s0 = inlined_call_operand.vmem [shape: f32[8,2,8], index: 0, kind: input, shape index: {}]
  %s1 = inlined_call_operand.hbm [shape: f32[80,256], index: 1, kind: input, shape index: {}]
  %s2 = inlined_call_operand.hbm [shape: f32[192,256], index: 2, kind: input, shape index: {}]
  %s3 = inlined_call_operand.vmem [shape: f32[2,256], index: 3, kind: input, shape index: {}]
  %s4 = inlined_call_operand.vmem [shape: f32[8,64], index: 4, kind: input, shape index: {}]
  %s5 = inlined_call_operand.hbm [shape: f32[2,8], index: 5, kind: output, shape index: {}]
  %s6 = sld [smem:[#allocation0]]
  $region38: #{fuel_consumption_forward.1} parent=0
    _
  %s8 = ssub.s32 1, %s6
  %s9 = scalar_select 0, %s8, %s6
  $region1: #{fuel_consumption_forward.1} parent=0
    #allocation2 [shape = 'u8[81920]{0}', space=vmem, size = 0x14000, scoped, tag = 'input window, operand 1, single buffered']
    #allocation3 [shape = 's32[1]{0}', space=sflag, size = 0x4, scoped, tag = 'scoped memory for fuel_consumption_forward.1']
    #allocation4 [shape = 's32[1]{0}', space=sflag, size = 0x4, scoped, tag = 'scoped memory for fuel_consumption_forward.1']
    #allocation5 [shape = 'u8[196608]{0}', space=vmem, size = 0x30000, scoped, tag = 'input window, operand 2, single buffered']
    #allocation6 [shape = 's32[1]{0}', space=sflag, size = 0x4, scoped, tag = 'scoped memory for fuel_consumption_forward.1']
    #allocation7 [shape = 'u8[1024]{0}', space=vmem, size = 0x400, scoped, tag = 'output window, operand 0, single buffered']
    %10 = vsyncpa [#allocation3], 0
    %11 = vsyncpa [#allocation6], 0
    %12 = vsyncpa [#allocation4], 0
    // Predicated region
    $region2: #{fuel_consumption_forward.1} parent=1 // pred_check
      _
    $region3: #{fuel_consumption_forward.1} parent=1 // pred_check_branch
      %14 = sbr.rel (0) target = $region5
    $region4: #{fuel_consumption_forward.1} parent=1 // pred_region
      _
    $region5: #{fuel_consumption_forward.1} parent=1 // pred_fallthru
      _
    // Predicated region
    $region6: #{fuel_consumption_forward.1} parent=1 // pred_check
      _
    $region7: #{fuel_consumption_forward.1} parent=1 // pred_check_branch
      %16 = sbr.rel (0) target = $region9
    $region8: #{fuel_consumption_forward.1} parent=1 // pred_region
      %s18 = ssub.s32 2560, 2560
      %19 = vsyncadd [#allocation3], %s18
      %s20 = sshll.u32 [#allocation2], 4
      %s21 = int_to_ptr.vmem [resolvable:$true] %s20
      %26 = dma.hbm_to_vmem [thread:$0]  %s1, 2560, %s21, [#allocation3], 256, 256, 16
    $region9: #{fuel_consumption_forward.1} parent=1 // pred_fallthru
      _
    // Predicated region
    $region10: #{fuel_consumption_forward.1} parent=1 // pred_check
      _
    $region11: #{fuel_consumption_forward.1} parent=1 // pred_check_branch
      %28 = sbr.rel (0) target = $region13
    $region12: #{fuel_consumption_forward.1} parent=1 // pred_region
      %s30 = ssub.s32 6144, 6144
      %31 = vsyncadd [#allocation6], %s30
      %s32 = sshll.u32 [#allocation5], 4
      %s33 = int_to_ptr.vmem [resolvable:$true] %s32
      %38 = dma.hbm_to_vmem [thread:$0]  %s2, 6144, %s33, [#allocation6], 256, 256, 16
    $region13: #{fuel_consumption_forward.1} parent=1 // pred_fallthru
      _
    // Predicated region
    $region14: #{fuel_consumption_forward.1} parent=1 // pred_check
      _
    $region15: #{fuel_consumption_forward.1} parent=1 // pred_check_branch
      %40 = sbr.rel (0) target = $region17
    $region16: #{fuel_consumption_forward.1} parent=1 // pred_region
      _
    $region17: #{fuel_consumption_forward.1} parent=1 // pred_fallthru
      _
    // Predicated region
    $region18: #{fuel_consumption_forward.1} parent=1 // pred_check
      _
    $region19: #{fuel_consumption_forward.1} parent=1 // pred_check_branch
      %42 = sbr.rel (0) target = $region21
    $region20: #{fuel_consumption_forward.1} parent=1 // pred_region
      _
    $region21: #{fuel_consumption_forward.1} parent=1 // pred_fallthru
      _
    // Predicated region
    $region22: #{fuel_consumption_forward.1} parent=1 // pred_check
      _
    $region23: #{fuel_consumption_forward.1} parent=1 // pred_check_branch
      %44 = sbr.rel (0) target = $region25
    $region24: #{fuel_consumption_forward.1} parent=1 // pred_region
      %45 = dma.done [#allocation3], 2560
    $region25: #{fuel_consumption_forward.1} parent=1 // pred_fallthru
      _
    // Predicated region
    $region26: #{fuel_consumption_forward.1} parent=1 // pred_check
      _
    $region27: #{fuel_consumption_forward.1} parent=1 // pred_check_branch
      %47 = sbr.rel (0) target = $region29
    $region28: #{fuel_consumption_forward.1} parent=1 // pred_region
      %48 = dma.done [#allocation6], 6144
    $region29: #{fuel_consumption_forward.1} parent=1 // pred_fallthru
      _
    %v49 = vld [vmem:[%s0] sm:$0x3]
    %v50 = vld [vmem:[%s0 + $0x2] sm:$0x3]
    %v51 = vld [vmem:[%s0 + $0x4] sm:$0x3]
    %v52 = vld [vmem:[%s0 + $0x6] sm:$0x3]
    %v53 = vld [vmem:[%s0 + $0x8] sm:$0x3]
    %v54 = vld [vmem:[%s0 + $0xa] sm:$0x3]
    %v55 = vld [vmem:[%s0 + $0xc] sm:$0x3]
    %v56 = vld [vmem:[%s0 + $0xe] sm:$0x3]
    %v57 = vld [vmem:[%s3] ss:$2 sm:$0x3]
    %66 = vrot.lane.b32.xlu0 %v56, 8
    %v67 = vpop.permute.xlu0 %66
    %68 = vrot.lane.b32.xlu0 %v55, 8
    %v69 = vpop.permute.xlu0 %68
    %70 = vrot.lane.b32.xlu0 %v54, 8
    %v71 = vpop.permute.xlu0 %70
    %72 = vrot.lane.b32.xlu0 %v53, 8
    %v73 = vpop.permute.xlu0 %72
    %74 = vrot.lane.b32.xlu0 %v52, 8
    %v75 = vpop.permute.xlu0 %74
    %76 = vrot.lane.b32.xlu0 %v51, 8
    %v77 = vpop.permute.xlu0 %76
    %78 = vrot.lane.b32.xlu0 %v50, 8
    %v79 = vpop.permute.xlu0 %78
    %80 = vrot.lane.b32.xlu0 %v49, 8
    %v81 = vpop.permute.xlu0 %80
    %vm90 = vcmask 64512
    %v91 = vsel %vm90, %v49, %v67
    %v92 = vsel %vm90, %v50, %v69
    %v93 = vsel %vm90, %v51, %v71
    %v94 = vsel %vm90, %v52, %v73
    %v95 = vsel %vm90, %v53, %v75
    %v96 = vsel %vm90, %v54, %v77
    %v97 = vsel %vm90, %v55, %v79
    %v98 = vsel %vm90, %v56, %v81
    %v99 = vld [vmem:[#allocation2] sm:$0xff]
    %v100 = vld [vmem:[#allocation2 + $0x8] sm:$0xff]
    %v101 = vld [vmem:[#allocation2 + $0x10] sm:$0xff]
    %v102 = vld [vmem:[#allocation2 + $0x18] sm:$0xff]
    %v104 = vlaneseq
    %v105 = vshrl.u32 %v104, 7
    %v106 = vsub.s32 0, %v105
    %v107 = vrot.slane %v57, %v106
    %v108 = vlaneseq
    %v109 = vshrl.u32 %v108, 7
    %v110 = vsub.s32 1, %v109
    %v111 = vrot.slane %v57, %v110
    %v122 = vcombine.low %v91, %v92
    %v123 = vcombine.low %v93, %v94
    %v125 = vunpack.c.l.s4 1983009808
    %v126 = vunpack.c.0.s8 %v125
    %v127 = vlaneseq
    %v128 = vshrl.u32 %v127, 7
    %v129 = vsub.s32 %v126, %v128
    %v130 = vrot.slane %v122, %v129
    %v132 = vunpack.c.l.s4 1983009808
    %v133 = vunpack.c.0.s8 %v132
    %v134 = vlaneseq
    %v135 = vshrl.u32 %v134, 7
    %v136 = vsub.s32 %v133, %v135
    %v137 = vrot.slane %v123, %v136
    %v138 = vcombine.low %v130, %v137
    %v139 = vcombine.low %v95, %v96
    %v140 = vcombine.low %v97, %v98
    %v142 = vunpack.c.l.s4 1983009808
    %v143 = vunpack.c.0.s8 %v142
    %v144 = vlaneseq
    %v145 = vshrl.u32 %v144, 7
    %v146 = vsub.s32 %v143, %v145
    %v147 = vrot.slane %v139, %v146
    %v149 = vunpack.c.l.s4 1983009808
    %v150 = vunpack.c.0.s8 %v149
    %v151 = vlaneseq
    %v152 = vshrl.u32 %v151, 7
    %v153 = vsub.s32 %v150, %v152
    %v154 = vrot.slane %v140, %v153
    %v155 = vcombine.low %v147, %v154
    %vm156 = vcmask 130048
    %v157 = vsel %vm156, %v138, 0
    %v159 = vsel %vm156, %v155, 0
    %161 = vmatprep.subr.mxu0 %v100
    %162 = vmatpush1.msra.mxu0 %v99
    %163 = vmatprep.subr.mxu0 %v102
    %164 = vmatpush1.msra.mxu0 %v101
    %165 = vmatprep.subr.mxu0 0.0
    %166 = vmatpush1.msra.mxu0 0.0
    %167 = vmatprep.subr.mxu0 0.0
    %168 = vmatpush1.msra.mxu0 0.0
    %169 = vmatprep.subr.mxu0 0.0
    %170 = vmatpush1.msra.mxu0 0.0
    %171 = vmatprep.subr.mxu0 0.0
    %172 = vmatpush1.msra.mxu0 0.0
    %173 = vmatprep.subr.mxu0 0.0
    %174 = vmatpush1.msra.mxu0 0.0
    %175 = vmatprep.subr.mxu0 0.0
    %176 = vmatpush1.msra.mxu0 0.0
    %177 = vmatprep.subr.mxu0 0.0
    %178 = vmatpush1.msra.mxu0 0.0
    %179 = vmatprep.subr.mxu0 0.0
    %180 = vmatpush1.msra.mxu0 0.0
    %181 = vmatprep.subr.mxu0 0.0
    %182 = vmatpush1.msra.mxu0 0.0
    %183 = vmatprep.subr.mxu0 0.0
    %184 = vmatpush1.msra.mxu0 0.0
    %185 = vmatprep.subr.mxu0 0.0
    %186 = vmatpush1.msra.mxu0 0.0
    %187 = vmatprep.subr.mxu0 0.0
    %188 = vmatpush1.msra.mxu0 0.0
    %189 = vmatprep.subr.mxu0 0.0
    %190 = vmatpush1.msra.mxu0 0.0
    %191 = vmatprep.subr.mxu0 0.0
    %192 = vmatpush1.msra.mxu0 0.0
    %193 = vmatprep.subr.mxu0 0.0
    %194 = vmatpush1.msra.mxu0 0.0
    %195 = vmatprep.subr.mxu0 0.0
    %196 = vmatpush1.msra.mxu0 0.0
    %197 = vmatprep.subr.mxu0 0.0
    %198 = vmatpush1.msra.mxu0 0.0
    %199 = vmatprep.subr.mxu0 0.0
    %200 = vmatpush1.msra.mxu0 0.0
    %201 = vmatprep.subr.mxu0 0.0
    %202 = vmatpush1.msra.mxu0 0.0
    %203 = vmatprep.subr.mxu0 0.0
    %204 = vmatpush1.msra.mxu0 0.0
    %205 = vmatprep.subr.mxu0 0.0
    %206 = vmatpush1.msra.mxu0 0.0
    %207 = vmatprep.subr.mxu0 0.0
    %208 = vmatpush1.msra.mxu0 0.0
    %209 = vmatprep.subr.mxu0 0.0
    %210 = vmatpush1.msra.mxu0 0.0
    %211 = vmatprep.subr.mxu0 0.0
    %212 = vmatpush1.msra.mxu0 0.0
    %213 = vmatprep.subr.mxu0 0.0
    %214 = vmatpush1.msra.mxu0 0.0
    %215 = vmatprep.subr.mxu0 0.0
    %216 = vmatpush1.msra.mxu0 0.0
    %217 = vmatprep.subr.mxu0 0.0
    %218 = vmatpush1.msra.mxu0 0.0
    %219 = vmatprep.subr.mxu0 0.0
    %220 = vmatpush1.msra.mxu0 0.0
    %221 = vmatprep.subr.mxu0 0.0
    %222 = vmatpush1.msra.mxu0 0.0
    %223 = vmatprep.subr.mxu0 0.0
    %224 = vmatpush1.msra.mxu0 0.0
    %225 = vmatprep.mubr.f32.mxu0 0.0
    %226 = vmatmul.mubr.f32.gmra.mrb[0].mxu0 %v157
    %v227 = vpop.f32.mrb[0].mxu0
    %v228 = vadd.f32 %v107, %v227
    %v229 = vpop.f32.mrb[0].mxu0
    %v230 = vadd.f32 %v111, %v229
    %231 = vmatprep.mubr.f32.mxu0 0.0
    %232 = vmatmul.mubr.f32.gmra.mrb[0].mxu0 %v159
    %v233 = vpop.f32.mrb[0].mxu0
    %v234 = vadd.f32 %v107, %v233
    %v235 = vpop.f32.mrb[0].mxu0
    %v236 = vadd.f32 %v111, %v235
    %237 = vdwg.mxu0
    %v242 = vcombine.low %v228, %v230
    %v243 = vcombine.high %v228, %v230
    %v245 = vunpack.c.l.s4 1983009808
    %v246 = vunpack.c.0.s8 %v245
    %v247 = vlaneseq
    %v248 = vshrl.u32 %v247, 7
    %v249 = vsub.s32 %v246, %v248
    %v250 = vrot.slane %v242, %v249
    %v252 = vunpack.c.l.s4 1983009808
    %v253 = vunpack.c.0.s8 %v252
    %v254 = vlaneseq
    %v255 = vshrl.u32 %v254, 7
    %v256 = vsub.s32 %v253, %v255
    %v257 = vrot.slane %v243, %v256
    %v258 = vcombine.high %v250, %v250
    %v259 = vcombine.high %v257, %v257
    %v260 = vcombine.low %v234, %v236
    %v261 = vcombine.high %v234, %v236
    %v263 = vunpack.c.l.s4 1983009808
    %v264 = vunpack.c.0.s8 %v263
    %v265 = vlaneseq
    %v266 = vshrl.u32 %v265, 7
    %v267 = vsub.s32 %v264, %v266
    %v268 = vrot.slane %v260, %v267
    %v270 = vunpack.c.l.s4 1983009808
    %v271 = vunpack.c.0.s8 %v270
    %v272 = vlaneseq
    %v273 = vshrl.u32 %v272, 7
    %v274 = vsub.s32 %v271, %v273
    %v275 = vrot.slane %v261, %v274
    %v276 = vcombine.high %v268, %v268
    %v277 = vcombine.high %v275, %v275
    %v286 = vld [vmem:[#allocation2 + $0x20] sm:$0xff]
    %v287 = vld [vmem:[#allocation2 + $0x28] sm:$0xff]
    %v288 = vld [vmem:[#allocation2 + $0x30] sm:$0xff]
    %v289 = vld [vmem:[#allocation2 + $0x38] sm:$0xff]
    %v290 = vld [vmem:[#allocation2 + $0x40] sm:$0xff]
    %v291 = vld [vmem:[#allocation2 + $0x48] sm:$0xff]
    %v292 = vld [vmem:[#allocation2 + $0x50] sm:$0xff]
    %v293 = vld [vmem:[#allocation2 + $0x58] sm:$0xff]
    %v294 = vld [vmem:[#allocation2 + $0x60] sm:$0xff]
    %v295 = vld [vmem:[#allocation2 + $0x68] sm:$0xff]
    %v296 = vld [vmem:[#allocation2 + $0x70] sm:$0xff]
    %v297 = vld [vmem:[#allocation2 + $0x78] sm:$0xff]
    %v298 = vld [vmem:[#allocation2 + $0x80] sm:$0xff]
    %v299 = vld [vmem:[#allocation2 + $0x88] sm:$0xff]
    %v300 = vld [vmem:[#allocation2 + $0x90] sm:$0xff]
    %v301 = vld [vmem:[#allocation2 + $0x98] sm:$0xff]
    %vm302 = vcmask 523264
    %v304 = vsel %vm302, 0.0, 0
    %306 = vmatprep.subr.mxu0 %v287
    %307 = vmatpush1.msra.mxu0 %v286
    %308 = vmatprep.subr.mxu0 %v289
    %309 = vmatpush1.msra.mxu0 %v288
    %310 = vmatprep.subr.mxu0 %v291
    %311 = vmatpush1.msra.mxu0 %v290
    %312 = vmatprep.subr.mxu0 %v293
    %313 = vmatpush1.msra.mxu0 %v292
    %314 = vmatprep.subr.mxu0 %v295
    %315 = vmatpush1.msra.mxu0 %v294
    %316 = vmatprep.subr.mxu0 %v297
    %317 = vmatpush1.msra.mxu0 %v296
    %318 = vmatprep.subr.mxu0 %v299
    %319 = vmatpush1.msra.mxu0 %v298
    %320 = vmatprep.subr.mxu0 %v301
    %321 = vmatpush1.msra.mxu0 %v300
    %322 = vmatprep.subr.mxu0 0.0
    %323 = vmatpush1.msra.mxu0 0.0
    %324 = vmatprep.subr.mxu0 0.0
    %325 = vmatpush1.msra.mxu0 0.0
    %326 = vmatprep.subr.mxu0 0.0
    %327 = vmatpush1.msra.mxu0 0.0
    %328 = vmatprep.subr.mxu0 0.0
    %329 = vmatpush1.msra.mxu0 0.0
    %330 = vmatprep.subr.mxu0 0.0
    %331 = vmatpush1.msra.mxu0 0.0
    %332 = vmatprep.subr.mxu0 0.0
    %333 = vmatpush1.msra.mxu0 0.0
    %334 = vmatprep.subr.mxu0 0.0
    %335 = vmatpush1.msra.mxu0 0.0
    %336 = vmatprep.subr.mxu0 0.0
    %337 = vmatpush1.msra.mxu0 0.0
    %338 = vmatprep.subr.mxu0 0.0
    %339 = vmatpush1.msra.mxu0 0.0
    %340 = vmatprep.subr.mxu0 0.0
    %341 = vmatpush1.msra.mxu0 0.0
    %342 = vmatprep.subr.mxu0 0.0
    %343 = vmatpush1.msra.mxu0 0.0
    %344 = vmatprep.subr.mxu0 0.0
    %345 = vmatpush1.msra.mxu0 0.0
    %346 = vmatprep.subr.mxu0 0.0
    %347 = vmatpush1.msra.mxu0 0.0
    %348 = vmatprep.subr.mxu0 0.0
    %349 = vmatpush1.msra.mxu0 0.0
    %350 = vmatprep.subr.mxu0 0.0
    %351 = vmatpush1.msra.mxu0 0.0
    %352 = vmatprep.subr.mxu0 0.0
    %353 = vmatpush1.msra.mxu0 0.0
    %354 = vmatprep.subr.mxu0 0.0
    %355 = vmatpush1.msra.mxu0 0.0
    %356 = vmatprep.subr.mxu0 0.0
    %357 = vmatpush1.msra.mxu0 0.0
    %358 = vmatprep.subr.mxu0 0.0
    %359 = vmatpush1.msra.mxu0 0.0
    %360 = vmatprep.subr.mxu0 0.0
    %361 = vmatpush1.msra.mxu0 0.0
    %362 = vmatprep.subr.mxu0 0.0
    %363 = vmatpush1.msra.mxu0 0.0
    %364 = vmatprep.subr.mxu0 0.0
    %365 = vmatpush1.msra.mxu0 0.0
    %366 = vmatprep.subr.mxu0 0.0
    %367 = vmatpush1.msra.mxu0 0.0
    %368 = vmatprep.subr.mxu0 0.0
    %369 = vmatpush1.msra.mxu0 0.0
    %370 = vmatprep.mubr.f32.mxu0 0.0
    %371 = vmatmul.mubr.f32.gmra.mrb[0].mxu0 %v304
    %v372 = vpop.f32.mrb[0].mxu0
    %v373 = vadd.f32 0.0, %v372
    %v374 = vpop.f32.mrb[0].mxu0
    %v375 = vadd.f32 0.0, %v374
    %376 = vdwg.mxu0
    %v379 = vcombine.low %v373, %v375
    %v381 = vunpack.c.l.s4 1983009808
    %v382 = vunpack.c.0.s8 %v381
    %v383 = vlaneseq
    %v384 = vshrl.u32 %v383, 7
    %v385 = vsub.s32 %v382, %v384
    %v386 = vrot.slane %v379, %v385
    %v388 = vadd.f32 %v250, %v386
    %v389 = vxor.u32 %v388, 2147483648
    %v390 = vmul.f32 %v389, 1.442695
    %v391 = vpow.pop %v390
    %v392 = vadd.f32 %v391, 1.0
    %v393 = vrcp.pop %v392
    %v394 = vmul.f32 1.0, %v393
    %396 = vrot.lane.b32.xlu0 %v388, 64
    %v397 = vpop.permute.xlu0 %396
    %v398 = vrot.slane %v397, 2
    %v400 = vtanh.pop %v398
    %v401 = vmul.f32 %v394, 0.0
    %v402 = vmul.f32 %v394, %v400
    %404 = vrot.lane.b32.xlu0 %v402, 64
    %v405 = vpop.permute.xlu0 %404
    %v407 = vadd.f32 %v401, %v405
    %v408 = vtanh.pop %v407
    %v410 = vrot.slane %v394, 2
    %413 = vrot.lane.b32.xlu0 %v408, 64
    %v414 = vpop.permute.xlu0 %413
    %v416 = vmul.f32 %v410, %v414
    %v418 = vsel %vm302, %v416, 0
    %420 = vmatprep.subr.mxu0 %v287
    %421 = vmatpush1.msra.mxu0 %v286
    %422 = vmatprep.subr.mxu0 %v289
    %423 = vmatpush1.msra.mxu0 %v288
    %424 = vmatprep.subr.mxu0 %v291
    %425 = vmatpush1.msra.mxu0 %v290
    %426 = vmatprep.subr.mxu0 %v293
    %427 = vmatpush1.msra.mxu0 %v292
    %428 = vmatprep.subr.mxu0 %v295
    %429 = vmatpush1.msra.mxu0 %v294
    %430 = vmatprep.subr.mxu0 %v297
    %431 = vmatpush1.msra.mxu0 %v296
    %432 = vmatprep.subr.mxu0 %v299
    %433 = vmatpush1.msra.mxu0 %v298
    %434 = vmatprep.subr.mxu0 %v301
    %435 = vmatpush1.msra.mxu0 %v300
    %436 = vmatprep.subr.mxu0 0.0
    %437 = vmatpush1.msra.mxu0 0.0
    %438 = vmatprep.subr.mxu0 0.0
    %439 = vmatpush1.msra.mxu0 0.0
    %440 = vmatprep.subr.mxu0 0.0
    %441 = vmatpush1.msra.mxu0 0.0
    %442 = vmatprep.subr.mxu0 0.0
    %443 = vmatpush1.msra.mxu0 0.0
    %444 = vmatprep.subr.mxu0 0.0
    %445 = vmatpush1.msra.mxu0 0.0
    %446 = vmatprep.subr.mxu0 0.0
    %447 = vmatpush1.msra.mxu0 0.0
    %448 = vmatprep.subr.mxu0 0.0
    %449 = vmatpush1.msra.mxu0 0.0
    %450 = vmatprep.subr.mxu0 0.0
    %451 = vmatpush1.msra.mxu0 0.0
    %452 = vmatprep.subr.mxu0 0.0
    %453 = vmatpush1.msra.mxu0 0.0
    %454 = vmatprep.subr.mxu0 0.0
    %455 = vmatpush1.msra.mxu0 0.0
    %456 = vmatprep.subr.mxu0 0.0
    %457 = vmatpush1.msra.mxu0 0.0
    %458 = vmatprep.subr.mxu0 0.0
    %459 = vmatpush1.msra.mxu0 0.0
    %460 = vmatprep.subr.mxu0 0.0
    %461 = vmatpush1.msra.mxu0 0.0
    %462 = vmatprep.subr.mxu0 0.0
    %463 = vmatpush1.msra.mxu0 0.0
    %464 = vmatprep.subr.mxu0 0.0
    %465 = vmatpush1.msra.mxu0 0.0
    %466 = vmatprep.subr.mxu0 0.0
    %467 = vmatpush1.msra.mxu0 0.0
    %468 = vmatprep.subr.mxu0 0.0
    %469 = vmatpush1.msra.mxu0 0.0
    %470 = vmatprep.subr.mxu0 0.0
    %471 = vmatpush1.msra.mxu0 0.0
    %472 = vmatprep.subr.mxu0 0.0
    %473 = vmatpush1.msra.mxu0 0.0
    %474 = vmatprep.subr.mxu0 0.0
    %475 = vmatpush1.msra.mxu0 0.0
    %476 = vmatprep.subr.mxu0 0.0
    %477 = vmatpush1.msra.mxu0 0.0
    %478 = vmatprep.subr.mxu0 0.0
    %479 = vmatpush1.msra.mxu0 0.0
    %480 = vmatprep.subr.mxu0 0.0
    %481 = vmatpush1.msra.mxu0 0.0
    %482 = vmatprep.subr.mxu0 0.0
    %483 = vmatpush1.msra.mxu0 0.0
    %484 = vmatprep.mubr.f32.mxu0 0.0
    %485 = vmatmul.mubr.f32.gmra.mrb[0].mxu0 %v418
    %v486 = vpop.f32.mrb[0].mxu0
    %v487 = vadd.f32 0.0, %v486
    %v488 = vpop.f32.mrb[0].mxu0
    %v489 = vadd.f32 0.0, %v488
    %490 = vdwg.mxu0
    %v493 = vcombine.low %v487, %v489
    %v495 = vunpack.c.l.s4 1983009808
    %v496 = vunpack.c.0.s8 %v495
    %v497 = vlaneseq
    %v498 = vshrl.u32 %v497, 7
    %v499 = vsub.s32 %v496, %v498
    %v500 = vrot.slane %v493, %v499
    %v502 = vadd.f32 %v258, %v500
    %v503 = vxor.u32 %v502, 2147483648
    %v504 = vmul.f32 %v503, 1.442695
    %v505 = vpow.pop %v504
    %v506 = vadd.f32 %v505, 1.0
    %v507 = vrcp.pop %v506
    %v508 = vmul.f32 1.0, %v507
    %510 = vrot.lane.b32.xlu0 %v502, 64
    %v511 = vpop.permute.xlu0 %510
    %v512 = vrot.slane %v511, 2
    %v514 = vtanh.pop %v512
    %v515 = vmul.f32 %v508, %v407
    %v516 = vmul.f32 %v508, %v514
    %518 = vrot.lane.b32.xlu0 %v516, 64
    %v519 = vpop.permute.xlu0 %518
    %v521 = vadd.f32 %v515, %v519
    %v522 = vtanh.pop %v521
    %v524 = vrot.slane %v508, 2
    %527 = vrot.lane.b32.xlu0 %v522, 64
    %v528 = vpop.permute.xlu0 %527
    %v530 = vmul.f32 %v524, %v528
    %v532 = vsel %vm302, %v530, 0
    %534 = vmatprep.subr.mxu0 %v287
    %535 = vmatpush1.msra.mxu0 %v286
    %536 = vmatprep.subr.mxu0 %v289
    %537 = vmatpush1.msra.mxu0 %v288
    %538 = vmatprep.subr.mxu0 %v291
    %539 = vmatpush1.msra.mxu0 %v290
    %540 = vmatprep.subr.mxu0 %v293
    %541 = vmatpush1.msra.mxu0 %v292
    %542 = vmatprep.subr.mxu0 %v295
    %543 = vmatpush1.msra.mxu0 %v294
    %544 = vmatprep.subr.mxu0 %v297
    %545 = vmatpush1.msra.mxu0 %v296
    %546 = vmatprep.subr.mxu0 %v299
    %547 = vmatpush1.msra.mxu0 %v298
    %548 = vmatprep.subr.mxu0 %v301
    %549 = vmatpush1.msra.mxu0 %v300
    %550 = vmatprep.subr.mxu0 0.0
    %551 = vmatpush1.msra.mxu0 0.0
    %552 = vmatprep.subr.mxu0 0.0
    %553 = vmatpush1.msra.mxu0 0.0
    %554 = vmatprep.subr.mxu0 0.0
    %555 = vmatpush1.msra.mxu0 0.0
    %556 = vmatprep.subr.mxu0 0.0
    %557 = vmatpush1.msra.mxu0 0.0
    %558 = vmatprep.subr.mxu0 0.0
    %559 = vmatpush1.msra.mxu0 0.0
    %560 = vmatprep.subr.mxu0 0.0
    %561 = vmatpush1.msra.mxu0 0.0
    %562 = vmatprep.subr.mxu0 0.0
    %563 = vmatpush1.msra.mxu0 0.0
    %564 = vmatprep.subr.mxu0 0.0
    %565 = vmatpush1.msra.mxu0 0.0
    %566 = vmatprep.subr.mxu0 0.0
    %567 = vmatpush1.msra.mxu0 0.0
    %568 = vmatprep.subr.mxu0 0.0
    %569 = vmatpush1.msra.mxu0 0.0
    %570 = vmatprep.subr.mxu0 0.0
    %571 = vmatpush1.msra.mxu0 0.0
    %572 = vmatprep.subr.mxu0 0.0
    %573 = vmatpush1.msra.mxu0 0.0
    %574 = vmatprep.subr.mxu0 0.0
    %575 = vmatpush1.msra.mxu0 0.0
    %576 = vmatprep.subr.mxu0 0.0
    %577 = vmatpush1.msra.mxu0 0.0
    %578 = vmatprep.subr.mxu0 0.0
    %579 = vmatpush1.msra.mxu0 0.0
    %580 = vmatprep.subr.mxu0 0.0
    %581 = vmatpush1.msra.mxu0 0.0
    %582 = vmatprep.subr.mxu0 0.0
    %583 = vmatpush1.msra.mxu0 0.0
    %584 = vmatprep.subr.mxu0 0.0
    %585 = vmatpush1.msra.mxu0 0.0
    %586 = vmatprep.subr.mxu0 0.0
    %587 = vmatpush1.msra.mxu0 0.0
    %588 = vmatprep.subr.mxu0 0.0
    %589 = vmatpush1.msra.mxu0 0.0
    %590 = vmatprep.subr.mxu0 0.0
    %591 = vmatpush1.msra.mxu0 0.0
    %592 = vmatprep.subr.mxu0 0.0
    %593 = vmatpush1.msra.mxu0 0.0
    %594 = vmatprep.subr.mxu0 0.0
    %595 = vmatpush1.msra.mxu0 0.0
    %596 = vmatprep.subr.mxu0 0.0
    %597 = vmatpush1.msra.mxu0 0.0
    %598 = vmatprep.mubr.f32.mxu0 0.0
    %599 = vmatmul.mubr.f32.gmra.mrb[0].mxu0 %v532
    %v600 = vpop.f32.mrb[0].mxu0
    %v601 = vadd.f32 0.0, %v600
    %v602 = vpop.f32.mrb[0].mxu0
    %v603 = vadd.f32 0.0, %v602
    %604 = vdwg.mxu0
    %v607 = vcombine.low %v601, %v603
    %v609 = vunpack.c.l.s4 1983009808
    %v610 = vunpack.c.0.s8 %v609
    %v611 = vlaneseq
    %v612 = vshrl.u32 %v611, 7
    %v613 = vsub.s32 %v610, %v612
    %v614 = vrot.slane %v607, %v613
    %v616 = vadd.f32 %v257, %v614
    %v617 = vxor.u32 %v616, 2147483648
    %v618 = vmul.f32 %v617, 1.442695
    %v619 = vpow.pop %v618
    %v620 = vadd.f32 %v619, 1.0
    %v621 = vrcp.pop %v620
    %v622 = vmul.f32 1.0, %v621
    %624 = vrot.lane.b32.xlu0 %v616, 64
    %v625 = vpop.permute.xlu0 %624
    %v626 = vrot.slane %v625, 2
    %v628 = vtanh.pop %v626
    %v629 = vmul.f32 %v622, %v521
    %v630 = vmul.f32 %v622, %v628
    %632 = vrot.lane.b32.xlu0 %v630, 64
    %v633 = vpop.permute.xlu0 %632
    %v635 = vadd.f32 %v629, %v633
    %v636 = vtanh.pop %v635
    %v638 = vrot.slane %v622, 2
    %641 = vrot.lane.b32.xlu0 %v636, 64
    %v642 = vpop.permute.xlu0 %641
    %v644 = vmul.f32 %v638, %v642
    %v646 = vsel %vm302, %v644, 0
    %648 = vmatprep.subr.mxu0 %v287
    %649 = vmatpush1.msra.mxu0 %v286
    %650 = vmatprep.subr.mxu0 %v289
    %651 = vmatpush1.msra.mxu0 %v288
    %652 = vmatprep.subr.mxu0 %v291
    %653 = vmatpush1.msra.mxu0 %v290
    %654 = vmatprep.subr.mxu0 %v293
    %655 = vmatpush1.msra.mxu0 %v292
    %656 = vmatprep.subr.mxu0 %v295
    %657 = vmatpush1.msra.mxu0 %v294
    %658 = vmatprep.subr.mxu0 %v297
    %659 = vmatpush1.msra.mxu0 %v296
    %660 = vmatprep.subr.mxu0 %v299
    %661 = vmatpush1.msra.mxu0 %v298
    %662 = vmatprep.subr.mxu0 %v301
    %663 = vmatpush1.msra.mxu0 %v300
    %664 = vmatprep.subr.mxu0 0.0
    %665 = vmatpush1.msra.mxu0 0.0
    %666 = vmatprep.subr.mxu0 0.0
    %667 = vmatpush1.msra.mxu0 0.0
    %668 = vmatprep.subr.mxu0 0.0
    %669 = vmatpush1.msra.mxu0 0.0
    %670 = vmatprep.subr.mxu0 0.0
    %671 = vmatpush1.msra.mxu0 0.0
    %672 = vmatprep.subr.mxu0 0.0
    %673 = vmatpush1.msra.mxu0 0.0
    %674 = vmatprep.subr.mxu0 0.0
    %675 = vmatpush1.msra.mxu0 0.0
    %676 = vmatprep.subr.mxu0 0.0
    %677 = vmatpush1.msra.mxu0 0.0
    %678 = vmatprep.subr.mxu0 0.0
    %679 = vmatpush1.msra.mxu0 0.0
    %680 = vmatprep.subr.mxu0 0.0
    %681 = vmatpush1.msra.mxu0 0.0
    %682 = vmatprep.subr.mxu0 0.0
    %683 = vmatpush1.msra.mxu0 0.0
    %684 = vmatprep.subr.mxu0 0.0
    %685 = vmatpush1.msra.mxu0 0.0
    %686 = vmatprep.subr.mxu0 0.0
    %687 = vmatpush1.msra.mxu0 0.0
    %688 = vmatprep.subr.mxu0 0.0
    %689 = vmatpush1.msra.mxu0 0.0
    %690 = vmatprep.subr.mxu0 0.0
    %691 = vmatpush1.msra.mxu0 0.0
    %692 = vmatprep.subr.mxu0 0.0
    %693 = vmatpush1.msra.mxu0 0.0
    %694 = vmatprep.subr.mxu0 0.0
    %695 = vmatpush1.msra.mxu0 0.0
    %696 = vmatprep.subr.mxu0 0.0
    %697 = vmatpush1.msra.mxu0 0.0
    %698 = vmatprep.subr.mxu0 0.0
    %699 = vmatpush1.msra.mxu0 0.0
    %700 = vmatprep.subr.mxu0 0.0
    %701 = vmatpush1.msra.mxu0 0.0
    %702 = vmatprep.subr.mxu0 0.0
    %703 = vmatpush1.msra.mxu0 0.0
    %704 = vmatprep.subr.mxu0 0.0
    %705 = vmatpush1.msra.mxu0 0.0
    %706 = vmatprep.subr.mxu0 0.0
    %707 = vmatpush1.msra.mxu0 0.0
    %708 = vmatprep.subr.mxu0 0.0
    %709 = vmatpush1.msra.mxu0 0.0
    %710 = vmatprep.subr.mxu0 0.0
    %711 = vmatpush1.msra.mxu0 0.0
    %712 = vmatprep.mubr.f32.mxu0 0.0
    %713 = vmatmul.mubr.f32.gmra.mrb[0].mxu0 %v646
    %v714 = vpop.f32.mrb[0].mxu0
    %v715 = vadd.f32 0.0, %v714
    %v716 = vpop.f32.mrb[0].mxu0
    %v717 = vadd.f32 0.0, %v716
    %718 = vdwg.mxu0
    %v721 = vcombine.low %v715, %v717
    %v723 = vunpack.c.l.s4 1983009808
    %v724 = vunpack.c.0.s8 %v723
    %v725 = vlaneseq
    %v726 = vshrl.u32 %v725, 7
    %v727 = vsub.s32 %v724, %v726
    %v728 = vrot.slane %v721, %v727
    %v730 = vadd.f32 %v259, %v728
    %v731 = vxor.u32 %v730, 2147483648
    %v732 = vmul.f32 %v731, 1.442695
    %v733 = vpow.pop %v732
    %v734 = vadd.f32 %v733, 1.0
    %v735 = vrcp.pop %v734
    %v736 = vmul.f32 1.0, %v735
    %738 = vrot.lane.b32.xlu0 %v730, 64
    %v739 = vpop.permute.xlu0 %738
    %v740 = vrot.slane %v739, 2
    %v742 = vtanh.pop %v740
    %v743 = vmul.f32 %v736, %v635
    %v744 = vmul.f32 %v736, %v742
    %746 = vrot.lane.b32.xlu0 %v744, 64
    %v747 = vpop.permute.xlu0 %746
    %v749 = vadd.f32 %v743, %v747
    %v750 = vtanh.pop %v749
    %v752 = vrot.slane %v736, 2
    %755 = vrot.lane.b32.xlu0 %v750, 64
    %v756 = vpop.permute.xlu0 %755
    %v758 = vmul.f32 %v752, %v756
    %v760 = vsel %vm302, %v758, 0
    %762 = vmatprep.subr.mxu0 %v287
    %763 = vmatpush1.msra.mxu0 %v286
    %764 = vmatprep.subr.mxu0 %v289
    %765 = vmatpush1.msra.mxu0 %v288
    %766 = vmatprep.subr.mxu0 %v291
    %767 = vmatpush1.msra.mxu0 %v290
    %768 = vmatprep.subr.mxu0 %v293
    %769 = vmatpush1.msra.mxu0 %v292
    %770 = vmatprep.subr.mxu0 %v295
    %771 = vmatpush1.msra.mxu0 %v294
    %772 = vmatprep.subr.mxu0 %v297
    %773 = vmatpush1.msra.mxu0 %v296
    %774 = vmatprep.subr.mxu0 %v299
    %775 = vmatpush1.msra.mxu0 %v298
    %776 = vmatprep.subr.mxu0 %v301
    %777 = vmatpush1.msra.mxu0 %v300
    %778 = vmatprep.subr.mxu0 0.0
    %779 = vmatpush1.msra.mxu0 0.0
    %780 = vmatprep.subr.mxu0 0.0
    %781 = vmatpush1.msra.mxu0 0.0
    %782 = vmatprep.subr.mxu0 0.0
    %783 = vmatpush1.msra.mxu0 0.0
    %784 = vmatprep.subr.mxu0 0.0
    %785 = vmatpush1.msra.mxu0 0.0
    %786 = vmatprep.subr.mxu0 0.0
    %787 = vmatpush1.msra.mxu0 0.0
    %788 = vmatprep.subr.mxu0 0.0
    %789 = vmatpush1.msra.mxu0 0.0
    %790 = vmatprep.subr.mxu0 0.0
    %791 = vmatpush1.msra.mxu0 0.0
    %792 = vmatprep.subr.mxu0 0.0
    %793 = vmatpush1.msra.mxu0 0.0
    %794 = vmatprep.subr.mxu0 0.0
    %795 = vmatpush1.msra.mxu0 0.0
    %796 = vmatprep.subr.mxu0 0.0
    %797 = vmatpush1.msra.mxu0 0.0
    %798 = vmatprep.subr.mxu0 0.0
    %799 = vmatpush1.msra.mxu0 0.0
    %800 = vmatprep.subr.mxu0 0.0
    %801 = vmatpush1.msra.mxu0 0.0
    %802 = vmatprep.subr.mxu0 0.0
    %803 = vmatpush1.msra.mxu0 0.0
    %804 = vmatprep.subr.mxu0 0.0
    %805 = vmatpush1.msra.mxu0 0.0
    %806 = vmatprep.subr.mxu0 0.0
    %807 = vmatpush1.msra.mxu0 0.0
    %808 = vmatprep.subr.mxu0 0.0
    %809 = vmatpush1.msra.mxu0 0.0
    %810 = vmatprep.subr.mxu0 0.0
    %811 = vmatpush1.msra.mxu0 0.0
    %812 = vmatprep.subr.mxu0 0.0
    %813 = vmatpush1.msra.mxu0 0.0
    %814 = vmatprep.subr.mxu0 0.0
    %815 = vmatpush1.msra.mxu0 0.0
    %816 = vmatprep.subr.mxu0 0.0
    %817 = vmatpush1.msra.mxu0 0.0
    %818 = vmatprep.subr.mxu0 0.0
    %819 = vmatpush1.msra.mxu0 0.0
    %820 = vmatprep.subr.mxu0 0.0
    %821 = vmatpush1.msra.mxu0 0.0
    %822 = vmatprep.subr.mxu0 0.0
    %823 = vmatpush1.msra.mxu0 0.0
    %824 = vmatprep.subr.mxu0 0.0
    %825 = vmatpush1.msra.mxu0 0.0
    %826 = vmatprep.mubr.f32.mxu0 0.0
    %827 = vmatmul.mubr.f32.gmra.mrb[0].mxu0 %v760
    %v828 = vpop.f32.mrb[0].mxu0
    %v829 = vadd.f32 0.0, %v828
    %v830 = vpop.f32.mrb[0].mxu0
    %v831 = vadd.f32 0.0, %v830
    %832 = vdwg.mxu0
    %v835 = vcombine.low %v829, %v831
    %v837 = vunpack.c.l.s4 1983009808
    %v838 = vunpack.c.0.s8 %v837
    %v839 = vlaneseq
    %v840 = vshrl.u32 %v839, 7
    %v841 = vsub.s32 %v838, %v840
    %v842 = vrot.slane %v835, %v841
    %v844 = vadd.f32 %v268, %v842
    %v845 = vxor.u32 %v844, 2147483648
    %v846 = vmul.f32 %v845, 1.442695
    %v847 = vpow.pop %v846
    %v848 = vadd.f32 %v847, 1.0
    %v849 = vrcp.pop %v848
    %v850 = vmul.f32 1.0, %v849
    %852 = vrot.lane.b32.xlu0 %v844, 64
    %v853 = vpop.permute.xlu0 %852
    %v854 = vrot.slane %v853, 2
    %v856 = vtanh.pop %v854
    %v857 = vmul.f32 %v850, %v749
    %v858 = vmul.f32 %v850, %v856
    %860 = vrot.lane.b32.xlu0 %v858, 64
    %v861 = vpop.permute.xlu0 %860
    %v863 = vadd.f32 %v857, %v861
    %v864 = vtanh.pop %v863
    %v866 = vrot.slane %v850, 2
    %869 = vrot.lane.b32.xlu0 %v864, 64
    %v870 = vpop.permute.xlu0 %869
    %v872 = vmul.f32 %v866, %v870
    %v874 = vsel %vm302, %v872, 0
    %876 = vmatprep.subr.mxu0 %v287
    %877 = vmatpush1.msra.mxu0 %v286
    %878 = vmatprep.subr.mxu0 %v289
    %879 = vmatpush1.msra.mxu0 %v288
    %880 = vmatprep.subr.mxu0 %v291
    %881 = vmatpush1.msra.mxu0 %v290
    %882 = vmatprep.subr.mxu0 %v293
    %883 = vmatpush1.msra.mxu0 %v292
    %884 = vmatprep.subr.mxu0 %v295
    %885 = vmatpush1.msra.mxu0 %v294
    %886 = vmatprep.subr.mxu0 %v297
    %887 = vmatpush1.msra.mxu0 %v296
    %888 = vmatprep.subr.mxu0 %v299
    %889 = vmatpush1.msra.mxu0 %v298
    %890 = vmatprep.subr.mxu0 %v301
    %891 = vmatpush1.msra.mxu0 %v300
    %892 = vmatprep.subr.mxu0 0.0
    %893 = vmatpush1.msra.mxu0 0.0
    %894 = vmatprep.subr.mxu0 0.0
    %895 = vmatpush1.msra.mxu0 0.0
    %896 = vmatprep.subr.mxu0 0.0
    %897 = vmatpush1.msra.mxu0 0.0
    %898 = vmatprep.subr.mxu0 0.0
    %899 = vmatpush1.msra.mxu0 0.0
    %900 = vmatprep.subr.mxu0 0.0
    %901 = vmatpush1.msra.mxu0 0.0
    %902 = vmatprep.subr.mxu0 0.0
    %903 = vmatpush1.msra.mxu0 0.0
    %904 = vmatprep.subr.mxu0 0.0
    %905 = vmatpush1.msra.mxu0 0.0
    %906 = vmatprep.subr.mxu0 0.0
    %907 = vmatpush1.msra.mxu0 0.0
    %908 = vmatprep.subr.mxu0 0.0
    %909 = vmatpush1.msra.mxu0 0.0
    %910 = vmatprep.subr.mxu0 0.0
    %911 = vmatpush1.msra.mxu0 0.0
    %912 = vmatprep.subr.mxu0 0.0
    %913 = vmatpush1.msra.mxu0 0.0
    %914 = vmatprep.subr.mxu0 0.0
    %915 = vmatpush1.msra.mxu0 0.0
    %916 = vmatprep.subr.mxu0 0.0
    %917 = vmatpush1.msra.mxu0 0.0
    %918 = vmatprep.subr.mxu0 0.0
    %919 = vmatpush1.msra.mxu0 0.0
    %920 = vmatprep.subr.mxu0 0.0
    %921 = vmatpush1.msra.mxu0 0.0
    %922 = vmatprep.subr.mxu0 0.0
    %923 = vmatpush1.msra.mxu0 0.0
    %924 = vmatprep.subr.mxu0 0.0
    %925 = vmatpush1.msra.mxu0 0.0
    %926 = vmatprep.subr.mxu0 0.0
    %927 = vmatpush1.msra.mxu0 0.0
    %928 = vmatprep.subr.mxu0 0.0
    %929 = vmatpush1.msra.mxu0 0.0
    %930 = vmatprep.subr.mxu0 0.0
    %931 = vmatpush1.msra.mxu0 0.0
    %932 = vmatprep.subr.mxu0 0.0
    %933 = vmatpush1.msra.mxu0 0.0
    %934 = vmatprep.subr.mxu0 0.0
    %935 = vmatpush1.msra.mxu0 0.0
    %936 = vmatprep.subr.mxu0 0.0
    %937 = vmatpush1.msra.mxu0 0.0
    %938 = vmatprep.subr.mxu0 0.0
    %939 = vmatpush1.msra.mxu0 0.0
    %940 = vmatprep.mubr.f32.mxu0 0.0
    %941 = vmatmul.mubr.f32.gmra.mrb[0].mxu0 %v874
    %v942 = vpop.f32.mrb[0].mxu0
    %v943 = vadd.f32 0.0, %v942
    %v944 = vpop.f32.mrb[0].mxu0
    %v945 = vadd.f32 0.0, %v944
    %946 = vdwg.mxu0
    %v949 = vcombine.low %v943, %v945
    %v951 = vunpack.c.l.s4 1983009808
    %v952 = vunpack.c.0.s8 %v951
    %v953 = vlaneseq
    %v954 = vshrl.u32 %v953, 7
    %v955 = vsub.s32 %v952, %v954
    %v956 = vrot.slane %v949, %v955
    %v958 = vadd.f32 %v276, %v956
    %v959 = vxor.u32 %v958, 2147483648
    %v960 = vmul.f32 %v959, 1.442695
    %v961 = vpow.pop %v960
    %v962 = vadd.f32 %v961, 1.0
    %v963 = vrcp.pop %v962
    %v964 = vmul.f32 1.0, %v963
    %966 = vrot.lane.b32.xlu0 %v958, 64
    %v967 = vpop.permute.xlu0 %966
    %v968 = vrot.slane %v967, 2
    %v970 = vtanh.pop %v968
    %v971 = vmul.f32 %v964, %v863
    %v972 = vmul.f32 %v964, %v970
    %974 = vrot.lane.b32.xlu0 %v972, 64
    %v975 = vpop.permute.xlu0 %974
    %v977 = vadd.f32 %v971, %v975
    %v978 = vtanh.pop %v977
    %v980 = vrot.slane %v964, 2
    %983 = vrot.lane.b32.xlu0 %v978, 64
    %v984 = vpop.permute.xlu0 %983
    %v986 = vmul.f32 %v980, %v984
    %v988 = vsel %vm302, %v986, 0
    %990 = vmatprep.subr.mxu0 %v287
    %991 = vmatpush1.msra.mxu0 %v286
    %992 = vmatprep.subr.mxu0 %v289
    %993 = vmatpush1.msra.mxu0 %v288
    %994 = vmatprep.subr.mxu0 %v291
    %995 = vmatpush1.msra.mxu0 %v290
    %996 = vmatprep.subr.mxu0 %v293
    %997 = vmatpush1.msra.mxu0 %v292
    %998 = vmatprep.subr.mxu0 %v295
    %999 = vmatpush1.msra.mxu0 %v294
    %1000 = vmatprep.subr.mxu0 %v297
    %1001 = vmatpush1.msra.mxu0 %v296
    %1002 = vmatprep.subr.mxu0 %v299
    %1003 = vmatpush1.msra.mxu0 %v298
    %1004 = vmatprep.subr.mxu0 %v301
    %1005 = vmatpush1.msra.mxu0 %v300
    %1006 = vmatprep.subr.mxu0 0.0
    %1007 = vmatpush1.msra.mxu0 0.0
    %1008 = vmatprep.subr.mxu0 0.0
    %1009 = vmatpush1.msra.mxu0 0.0
    %1010 = vmatprep.subr.mxu0 0.0
    %1011 = vmatpush1.msra.mxu0 0.0
    %1012 = vmatprep.subr.mxu0 0.0
    %1013 = vmatpush1.msra.mxu0 0.0
    %1014 = vmatprep.subr.mxu0 0.0
    %1015 = vmatpush1.msra.mxu0 0.0
    %1016 = vmatprep.subr.mxu0 0.0
    %1017 = vmatpush1.msra.mxu0 0.0
    %1018 = vmatprep.subr.mxu0 0.0
    %1019 = vmatpush1.msra.mxu0 0.0
    %1020 = vmatprep.subr.mxu0 0.0
    %1021 = vmatpush1.msra.mxu0 0.0
    %1022 = vmatprep.subr.mxu0 0.0
    %1023 = vmatpush1.msra.mxu0 0.0
    %1024 = vmatprep.subr.mxu0 0.0
    %1025 = vmatpush1.msra.mxu0 0.0
    %1026 = vmatprep.subr.mxu0 0.0
    %1027 = vmatpush1.msra.mxu0 0.0
    %1028 = vmatprep.subr.mxu0 0.0
    %1029 = vmatpush1.msra.mxu0 0.0
    %1030 = vmatprep.subr.mxu0 0.0
    %1031 = vmatpush1.msra.mxu0 0.0
    %1032 = vmatprep.subr.mxu0 0.0
    %1033 = vmatpush1.msra.mxu0 0.0
    %1034 = vmatprep.subr.mxu0 0.0
    %1035 = vmatpush1.msra.mxu0 0.0
    %1036 = vmatprep.subr.mxu0 0.0
    %1037 = vmatpush1.msra.mxu0 0.0
    %1038 = vmatprep.subr.mxu0 0.0
    %1039 = vmatpush1.msra.mxu0 0.0
    %1040 = vmatprep.subr.mxu0 0.0
    %1041 = vmatpush1.msra.mxu0 0.0
    %1042 = vmatprep.subr.mxu0 0.0
    %1043 = vmatpush1.msra.mxu0 0.0
    %1044 = vmatprep.subr.mxu0 0.0
    %1045 = vmatpush1.msra.mxu0 0.0
    %1046 = vmatprep.subr.mxu0 0.0
    %1047 = vmatpush1.msra.mxu0 0.0
    %1048 = vmatprep.subr.mxu0 0.0
    %1049 = vmatpush1.msra.mxu0 0.0
    %1050 = vmatprep.subr.mxu0 0.0
    %1051 = vmatpush1.msra.mxu0 0.0
    %1052 = vmatprep.subr.mxu0 0.0
    %1053 = vmatpush1.msra.mxu0 0.0
    %1054 = vmatprep.mubr.f32.mxu0 0.0
    %1055 = vmatmul.mubr.f32.gmra.mrb[0].mxu0 %v988
    %v1056 = vpop.f32.mrb[0].mxu0
    %v1057 = vadd.f32 0.0, %v1056
    %v1058 = vpop.f32.mrb[0].mxu0
    %v1059 = vadd.f32 0.0, %v1058
    %1060 = vdwg.mxu0
    %v1063 = vcombine.low %v1057, %v1059
    %v1065 = vunpack.c.l.s4 1983009808
    %v1066 = vunpack.c.0.s8 %v1065
    %v1067 = vlaneseq
    %v1068 = vshrl.u32 %v1067, 7
    %v1069 = vsub.s32 %v1066, %v1068
    %v1070 = vrot.slane %v1063, %v1069
    %v1072 = vadd.f32 %v275, %v1070
    %v1073 = vxor.u32 %v1072, 2147483648
    %v1074 = vmul.f32 %v1073, 1.442695
    %v1075 = vpow.pop %v1074
    %v1076 = vadd.f32 %v1075, 1.0
    %v1077 = vrcp.pop %v1076
    %v1078 = vmul.f32 1.0, %v1077
    %1080 = vrot.lane.b32.xlu0 %v1072, 64
    %v1081 = vpop.permute.xlu0 %1080
    %v1082 = vrot.slane %v1081, 2
    %v1084 = vtanh.pop %v1082
    %v1085 = vmul.f32 %v1078, %v977
    %v1086 = vmul.f32 %v1078, %v1084
    %1088 = vrot.lane.b32.xlu0 %v1086, 64
    %v1089 = vpop.permute.xlu0 %1088
    %v1091 = vadd.f32 %v1085, %v1089
    %v1092 = vtanh.pop %v1091
    %v1094 = vrot.slane %v1078, 2
    %1097 = vrot.lane.b32.xlu0 %v1092, 64
    %v1098 = vpop.permute.xlu0 %1097
    %v1100 = vmul.f32 %v1094, %v1098
    %v1102 = vsel %vm302, %v1100, 0
    %1104 = vmatprep.subr.mxu0 %v287
    %1105 = vmatpush1.msra.mxu0 %v286
    %1106 = vmatprep.subr.mxu0 %v289
    %1107 = vmatpush1.msra.mxu0 %v288
    %1108 = vmatprep.subr.mxu0 %v291
    %1109 = vmatpush1.msra.mxu0 %v290
    %1110 = vmatprep.subr.mxu0 %v293
    %1111 = vmatpush1.msra.mxu0 %v292
    %1112 = vmatprep.subr.mxu0 %v295
    %1113 = vmatpush1.msra.mxu0 %v294
    %1114 = vmatprep.subr.mxu0 %v297
    %1115 = vmatpush1.msra.mxu0 %v296
    %1116 = vmatprep.subr.mxu0 %v299
    %1117 = vmatpush1.msra.mxu0 %v298
    %1118 = vmatprep.subr.mxu0 %v301
    %1119 = vmatpush1.msra.mxu0 %v300
    %1120 = vmatprep.subr.mxu0 0.0
    %1121 = vmatpush1.msra.mxu0 0.0
    %1122 = vmatprep.subr.mxu0 0.0
    %1123 = vmatpush1.msra.mxu0 0.0
    %1124 = vmatprep.subr.mxu0 0.0
    %1125 = vmatpush1.msra.mxu0 0.0
    %1126 = vmatprep.subr.mxu0 0.0
    %1127 = vmatpush1.msra.mxu0 0.0
    %1128 = vmatprep.subr.mxu0 0.0
    %1129 = vmatpush1.msra.mxu0 0.0
    %1130 = vmatprep.subr.mxu0 0.0
    %1131 = vmatpush1.msra.mxu0 0.0
    %1132 = vmatprep.subr.mxu0 0.0
    %1133 = vmatpush1.msra.mxu0 0.0
    %1134 = vmatprep.subr.mxu0 0.0
    %1135 = vmatpush1.msra.mxu0 0.0
    %1136 = vmatprep.subr.mxu0 0.0
    %1137 = vmatpush1.msra.mxu0 0.0
    %1138 = vmatprep.subr.mxu0 0.0
    %1139 = vmatpush1.msra.mxu0 0.0
    %1140 = vmatprep.subr.mxu0 0.0
    %1141 = vmatpush1.msra.mxu0 0.0
    %1142 = vmatprep.subr.mxu0 0.0
    %1143 = vmatpush1.msra.mxu0 0.0
    %1144 = vmatprep.subr.mxu0 0.0
    %1145 = vmatpush1.msra.mxu0 0.0
    %1146 = vmatprep.subr.mxu0 0.0
    %1147 = vmatpush1.msra.mxu0 0.0
    %1148 = vmatprep.subr.mxu0 0.0
    %1149 = vmatpush1.msra.mxu0 0.0
    %1150 = vmatprep.subr.mxu0 0.0
    %1151 = vmatpush1.msra.mxu0 0.0
    %1152 = vmatprep.subr.mxu0 0.0
    %1153 = vmatpush1.msra.mxu0 0.0
    %1154 = vmatprep.subr.mxu0 0.0
    %1155 = vmatpush1.msra.mxu0 0.0
    %1156 = vmatprep.subr.mxu0 0.0
    %1157 = vmatpush1.msra.mxu0 0.0
    %1158 = vmatprep.subr.mxu0 0.0
    %1159 = vmatpush1.msra.mxu0 0.0
    %1160 = vmatprep.subr.mxu0 0.0
    %1161 = vmatpush1.msra.mxu0 0.0
    %1162 = vmatprep.subr.mxu0 0.0
    %1163 = vmatpush1.msra.mxu0 0.0
    %1164 = vmatprep.subr.mxu0 0.0
    %1165 = vmatpush1.msra.mxu0 0.0
    %1166 = vmatprep.subr.mxu0 0.0
    %1167 = vmatpush1.msra.mxu0 0.0
    %1168 = vmatprep.mubr.f32.mxu0 0.0
    %1169 = vmatmul.mubr.f32.gmra.mrb[0].mxu0 %v1102
    %v1170 = vpop.f32.mrb[0].mxu0
    %v1171 = vadd.f32 0.0, %v1170
    %v1172 = vpop.f32.mrb[0].mxu0
    %v1173 = vadd.f32 0.0, %v1172
    %1174 = vdwg.mxu0
    %v1177 = vcombine.low %v1171, %v1173
    %v1179 = vunpack.c.l.s4 1983009808
    %v1180 = vunpack.c.0.s8 %v1179
    %v1181 = vlaneseq
    %v1182 = vshrl.u32 %v1181, 7
    %v1183 = vsub.s32 %v1180, %v1182
    %v1184 = vrot.slane %v1177, %v1183
    %v1186 = vadd.f32 %v277, %v1184
    %v1187 = vxor.u32 %v1186, 2147483648
    %v1188 = vmul.f32 %v1187, 1.442695
    %v1189 = vpow.pop %v1188
    %v1190 = vadd.f32 %v1189, 1.0
    %v1191 = vrcp.pop %v1190
    %v1192 = vmul.f32 1.0, %v1191
    %1194 = vrot.lane.b32.xlu0 %v1186, 64
    %v1195 = vpop.permute.xlu0 %1194
    %v1196 = vrot.slane %v1195, 2
    %v1198 = vtanh.pop %v1196
    %v1199 = vmul.f32 %v1192, %v1091
    %v1200 = vmul.f32 %v1192, %v1198
    %1202 = vrot.lane.b32.xlu0 %v1200, 64
    %v1203 = vpop.permute.xlu0 %1202
    %v1205 = vadd.f32 %v1199, %v1203
    %v1206 = vtanh.pop %v1205
    %v1208 = vrot.slane %v1192, 2
    %1211 = vrot.lane.b32.xlu0 %v1206, 64
    %v1212 = vpop.permute.xlu0 %1211
    %v1214 = vmul.f32 %v1208, %v1212
    %vm1215 = vcmask 261120
    %v1216 = vsel %vm1215, %v416, %v1214
    %v1217 = vsel %vm1215, %v530, %v1100
    %v1218 = vsel %vm1215, %v644, %v986
    %v1219 = vsel %vm1215, %v758, %v872
    %v1220 = vsel %vm1215, %v872, %v758
    %v1221 = vsel %vm1215, %v986, %v644
    %v1222 = vsel %vm1215, %v1100, %v530
    %v1223 = vsel %vm1215, %v1214, %v416
    %v1224 = vld [vmem:[%s4] sm:$0x1]
    %v1225 = vld [vmem:[%s4 + $0x1] sm:$0x1]
    %vm1226 = vcmask 517120
    %v1227 = vsel %vm1226, %v1216, 0.0
    %1228 = vadd.xlane.f32.xlu0 %v1227
    %v1229 = vpop.xlane.xlu0 %1228
    %v1230 = vsel %vm1226, %v1217, 0.0
    %1231 = vadd.xlane.f32.xlu0 %v1230
    %v1232 = vpop.xlane.xlu0 %1231
    %v1233 = vsel %vm1226, %v1218, 0.0
    %1234 = vadd.xlane.f32.xlu0 %v1233
    %v1235 = vpop.xlane.xlu0 %1234
    %v1236 = vsel %vm1226, %v1219, 0.0
    %1237 = vadd.xlane.f32.xlu0 %v1236
    %v1238 = vpop.xlane.xlu0 %1237
    %v1239 = vsel %vm1226, %v1220, 0.0
    %1240 = vadd.xlane.f32.xlu0 %v1239
    %v1241 = vpop.xlane.xlu0 %1240
    %v1242 = vsel %vm1226, %v1221, 0.0
    %1243 = vadd.xlane.f32.xlu0 %v1242
    %v1244 = vpop.xlane.xlu0 %1243
    %v1245 = vsel %vm1226, %v1222, 0.0
    %1246 = vadd.xlane.f32.xlu0 %v1245
    %v1247 = vpop.xlane.xlu0 %1246
    %v1248 = vsel %vm1226, %v1223, 0.0
    %1249 = vadd.xlane.f32.xlu0 %v1248
    %v1250 = vpop.xlane.xlu0 %1249
    %v1251 = vrcp.pop 64.0
    %v1252 = vmul.f32 %v1229, %v1251
    %v1253 = vmul.f32 %v1232, %v1251
    %v1254 = vmul.f32 %v1235, %v1251
    %v1255 = vmul.f32 %v1238, %v1251
    %v1256 = vmul.f32 %v1241, %v1251
    %v1257 = vmul.f32 %v1244, %v1251
    %v1258 = vmul.f32 %v1247, %v1251
    %v1259 = vmul.f32 %v1250, %v1251
    %v1260 = vsub.f32 %v1216, %v1252
    %v1261 = vsub.f32 %v1217, %v1253
    %v1262 = vsub.f32 %v1218, %v1254
    %v1263 = vsub.f32 %v1219, %v1255
    %v1264 = vsub.f32 %v1220, %v1256
    %v1265 = vsub.f32 %v1221, %v1257
    %v1266 = vsub.f32 %v1222, %v1258
    %v1267 = vsub.f32 %v1223, %v1259
    %v1268 = vmul.f32 %v1260, %v1260
    %v1269 = vmul.f32 %v1261, %v1261
    %v1270 = vmul.f32 %v1262, %v1262
    %v1271 = vmul.f32 %v1263, %v1263
    %v1272 = vmul.f32 %v1264, %v1264
    %v1273 = vmul.f32 %v1265, %v1265
    %v1274 = vmul.f32 %v1266, %v1266
    %v1275 = vmul.f32 %v1267, %v1267
    %v1276 = vsel %vm1226, %v1268, 0.0
    %1277 = vadd.xlane.f32.xlu0 %v1276
    %v1278 = vpop.xlane.xlu0 %1277
    %v1279 = vsel %vm1226, %v1269, 0.0
    %1280 = vadd.xlane.f32.xlu0 %v1279
    %v1281 = vpop.xlane.xlu0 %1280
    %v1282 = vsel %vm1226, %v1270, 0.0
    %1283 = vadd.xlane.f32.xlu0 %v1282
    %v1284 = vpop.xlane.xlu0 %1283
    %v1285 = vsel %vm1226, %v1271, 0.0
    %1286 = vadd.xlane.f32.xlu0 %v1285
    %v1287 = vpop.xlane.xlu0 %1286
    %v1288 = vsel %vm1226, %v1272, 0.0
    %1289 = vadd.xlane.f32.xlu0 %v1288
    %v1290 = vpop.xlane.xlu0 %1289
    %v1291 = vsel %vm1226, %v1273, 0.0
    %1292 = vadd.xlane.f32.xlu0 %v1291
    %v1293 = vpop.xlane.xlu0 %1292
    %v1294 = vsel %vm1226, %v1274, 0.0
    %1295 = vadd.xlane.f32.xlu0 %v1294
    %v1296 = vpop.xlane.xlu0 %1295
    %v1297 = vsel %vm1226, %v1275, 0.0
    %1298 = vadd.xlane.f32.xlu0 %v1297
    %v1299 = vpop.xlane.xlu0 %1298
    %v1300 = vmul.f32 %v1278, %v1251
    %v1301 = vmul.f32 %v1281, %v1251
    %v1302 = vmul.f32 %v1284, %v1251
    %v1303 = vmul.f32 %v1287, %v1251
    %v1304 = vmul.f32 %v1290, %v1251
    %v1305 = vmul.f32 %v1293, %v1251
    %v1306 = vmul.f32 %v1296, %v1251
    %v1307 = vmul.f32 %v1299, %v1251
    %v1308 = vadd.f32 %v1300, 1e-05
    %v1309 = vadd.f32 %v1301, 1e-05
    %v1310 = vadd.f32 %v1302, 1e-05
    %v1311 = vadd.f32 %v1303, 1e-05
    %v1312 = vadd.f32 %v1304, 1e-05
    %v1313 = vadd.f32 %v1305, 1e-05
    %v1314 = vadd.f32 %v1306, 1e-05
    %v1315 = vadd.f32 %v1307, 1e-05
    %v1316 = vrsqrt.pop %v1308
    %v1317 = vrsqrt.pop %v1309
    %v1318 = vrsqrt.pop %v1310
    %v1319 = vrsqrt.pop %v1311
    %v1320 = vrsqrt.pop %v1312
    %v1321 = vrsqrt.pop %v1313
    %v1322 = vrsqrt.pop %v1314
    %v1323 = vrsqrt.pop %v1315
    %v1324 = vmul.f32 %v1260, %v1316
    %v1325 = vmul.f32 %v1261, %v1317
    %v1326 = vmul.f32 %v1262, %v1318
    %v1327 = vmul.f32 %v1263, %v1319
    %v1328 = vmul.f32 %v1264, %v1320
    %v1329 = vmul.f32 %v1265, %v1321
    %v1330 = vmul.f32 %v1266, %v1322
    %v1331 = vmul.f32 %v1267, %v1323
    %v1332 = vlaneseq
    %v1333 = vshrl.u32 %v1332, 7
    %v1334 = vsub.s32 0, %v1333
    %v1335 = vrot.slane %v1224, %v1334
    %v1336 = vmul.f32 %v1324, %v1335
    %v1337 = vmul.f32 %v1325, %v1335
    %v1338 = vmul.f32 %v1326, %v1335
    %v1339 = vmul.f32 %v1327, %v1335
    %v1340 = vmul.f32 %v1328, %v1335
    %v1341 = vmul.f32 %v1329, %v1335
    %v1342 = vmul.f32 %v1330, %v1335
    %v1343 = vmul.f32 %v1331, %v1335
    %v1344 = vlaneseq
    %v1345 = vshrl.u32 %v1344, 7
    %v1346 = vsub.s32 0, %v1345
    %v1347 = vrot.slane %v1225, %v1346
    %v1348 = vadd.f32 %v1336, %v1347
    %v1349 = vadd.f32 %v1337, %v1347
    %v1350 = vadd.f32 %v1338, %v1347
    %v1351 = vadd.f32 %v1339, %v1347
    %v1352 = vadd.f32 %v1340, %v1347
    %v1353 = vadd.f32 %v1341, %v1347
    %v1354 = vadd.f32 %v1342, %v1347
    %v1355 = vadd.f32 %v1343, %v1347
    %s1356 = scalar_lea.vmem %s3, 1
    %v1357 = vld [vmem:[%s1356] ss:$2 sm:$0x3]
    %1366 = vrot.lane.b32.xlu0 %v1355, 64
    %v1367 = vpop.permute.xlu0 %1366
    %1368 = vrot.lane.b32.xlu0 %v1354, 64
    %v1369 = vpop.permute.xlu0 %1368
    %1370 = vrot.lane.b32.xlu0 %v1353, 64
    %v1371 = vpop.permute.xlu0 %1370
    %1372 = vrot.lane.b32.xlu0 %v1352, 64
    %v1373 = vpop.permute.xlu0 %1372
    %1374 = vrot.lane.b32.xlu0 %v1351, 64
    %v1375 = vpop.permute.xlu0 %1374
    %1376 = vrot.lane.b32.xlu0 %v1350, 64
    %v1377 = vpop.permute.xlu0 %1376
    %1378 = vrot.lane.b32.xlu0 %v1349, 64
    %v1379 = vpop.permute.xlu0 %1378
    %1380 = vrot.lane.b32.xlu0 %v1348, 64
    %v1381 = vpop.permute.xlu0 %1380
    %v1390 = vsel %vm302, %v1348, %v1367
    %v1391 = vsel %vm302, %v1349, %v1369
    %v1392 = vsel %vm302, %v1350, %v1371
    %v1393 = vsel %vm302, %v1351, %v1373
    %v1394 = vsel %vm302, %v1352, %v1375
    %v1395 = vsel %vm302, %v1353, %v1377
    %v1396 = vsel %vm302, %v1354, %v1379
    %v1397 = vsel %vm302, %v1355, %v1381
    %v1398 = vld [vmem:[#allocation5] sm:$0xff]
    %v1399 = vld [vmem:[#allocation5 + $0x8] sm:$0xff]
    %v1400 = vld [vmem:[#allocation5 + $0x10] sm:$0xff]
    %v1401 = vld [vmem:[#allocation5 + $0x18] sm:$0xff]
    %v1402 = vld [vmem:[#allocation5 + $0x20] sm:$0xff]
    %v1403 = vld [vmem:[#allocation5 + $0x28] sm:$0xff]
    %v1404 = vld [vmem:[#allocation5 + $0x30] sm:$0xff]
    %v1405 = vld [vmem:[#allocation5 + $0x38] sm:$0xff]
    %v1406 = vld [vmem:[#allocation5 + $0x40] sm:$0xff]
    %v1407 = vld [vmem:[#allocation5 + $0x48] sm:$0xff]
    %v1408 = vld [vmem:[#allocation5 + $0x50] sm:$0xff]
    %v1409 = vld [vmem:[#allocation5 + $0x58] sm:$0xff]
    %v1410 = vld [vmem:[#allocation5 + $0x60] sm:$0xff]
    %v1411 = vld [vmem:[#allocation5 + $0x68] sm:$0xff]
    %v1412 = vld [vmem:[#allocation5 + $0x70] sm:$0xff]
    %v1413 = vld [vmem:[#allocation5 + $0x78] sm:$0xff]
    %v1414 = vld [vmem:[#allocation5 + $0x80] sm:$0xff]
    %v1415 = vld [vmem:[#allocation5 + $0x88] sm:$0xff]
    %v1416 = vld [vmem:[#allocation5 + $0x90] sm:$0xff]
    %v1417 = vld [vmem:[#allocation5 + $0x98] sm:$0xff]
    %v1418 = vld [vmem:[#allocation5 + $0xa0] sm:$0xff]
    %v1419 = vld [vmem:[#allocation5 + $0xa8] sm:$0xff]
    %v1420 = vld [vmem:[#allocation5 + $0xb0] sm:$0xff]
    %v1421 = vld [vmem:[#allocation5 + $0xb8] sm:$0xff]
    %v1422 = vld [vmem:[#allocation5 + $0xc0] sm:$0xff]
    %v1423 = vld [vmem:[#allocation5 + $0xc8] sm:$0xff]
    %v1424 = vld [vmem:[#allocation5 + $0xd0] sm:$0xff]
    %v1425 = vld [vmem:[#allocation5 + $0xd8] sm:$0xff]
    %v1426 = vld [vmem:[#allocation5 + $0xe0] sm:$0xff]
    %v1427 = vld [vmem:[#allocation5 + $0xe8] sm:$0xff]
    %v1428 = vld [vmem:[#allocation5 + $0xf0] sm:$0xff]
    %v1429 = vld [vmem:[#allocation5 + $0xf8] sm:$0xff]
    %v1431 = vlaneseq
    %v1432 = vshrl.u32 %v1431, 7
    %v1433 = vsub.s32 0, %v1432
    %v1434 = vrot.slane %v1357, %v1433
    %v1435 = vlaneseq
    %v1436 = vshrl.u32 %v1435, 7
    %v1437 = vsub.s32 1, %v1436
    %v1438 = vrot.slane %v1357, %v1437
    %v1449 = vcombine.low %v1390, %v1391
    %v1450 = vcombine.low %v1392, %v1393
    %v1452 = vunpack.c.l.s4 1983009808
    %v1453 = vunpack.c.0.s8 %v1452
    %v1454 = vlaneseq
    %v1455 = vshrl.u32 %v1454, 7
    %v1456 = vsub.s32 %v1453, %v1455
    %v1457 = vrot.slane %v1449, %v1456
    %v1459 = vunpack.c.l.s4 1983009808
    %v1460 = vunpack.c.0.s8 %v1459
    %v1461 = vlaneseq
    %v1462 = vshrl.u32 %v1461, 7
    %v1463 = vsub.s32 %v1460, %v1462
    %v1464 = vrot.slane %v1450, %v1463
    %v1465 = vcombine.low %v1457, %v1464
    %v1466 = vcombine.low %v1394, %v1395
    %v1467 = vcombine.low %v1396, %v1397
    %v1469 = vunpack.c.l.s4 1983009808
    %v1470 = vunpack.c.0.s8 %v1469
    %v1471 = vlaneseq
    %v1472 = vshrl.u32 %v1471, 7
    %v1473 = vsub.s32 %v1470, %v1472
    %v1474 = vrot.slane %v1466, %v1473
    %v1476 = vunpack.c.l.s4 1983009808
    %v1477 = vunpack.c.0.s8 %v1476
    %v1478 = vlaneseq
    %v1479 = vshrl.u32 %v1478, 7
    %v1480 = vsub.s32 %v1477, %v1479
    %v1481 = vrot.slane %v1467, %v1480
    %v1482 = vcombine.low %v1474, %v1481
    %1485 = vmatprep.subr.mxu0 %v1399
    %1486 = vmatpush1.msra.mxu0 %v1398
    %1487 = vmatprep.subr.mxu0 %v1401
    %1488 = vmatpush1.msra.mxu0 %v1400
    %1489 = vmatprep.subr.mxu0 %v1403
    %1490 = vmatpush1.msra.mxu0 %v1402
    %1491 = vmatprep.subr.mxu0 %v1405
    %1492 = vmatpush1.msra.mxu0 %v1404
    %1493 = vmatprep.subr.mxu0 %v1407
    %1494 = vmatpush1.msra.mxu0 %v1406
    %1495 = vmatprep.subr.mxu0 %v1409
    %1496 = vmatpush1.msra.mxu0 %v1408
    %1497 = vmatprep.subr.mxu0 %v1411
    %1498 = vmatpush1.msra.mxu0 %v1410
    %1499 = vmatprep.subr.mxu0 %v1413
    %1500 = vmatpush1.msra.mxu0 %v1412
    %1501 = vmatprep.subr.mxu0 %v1415
    %1502 = vmatpush1.msra.mxu0 %v1414
    %1503 = vmatprep.subr.mxu0 %v1417
    %1504 = vmatpush1.msra.mxu0 %v1416
    %1505 = vmatprep.subr.mxu0 %v1419
    %1506 = vmatpush1.msra.mxu0 %v1418
    %1507 = vmatprep.subr.mxu0 %v1421
    %1508 = vmatpush1.msra.mxu0 %v1420
    %1509 = vmatprep.subr.mxu0 %v1423
    %1510 = vmatpush1.msra.mxu0 %v1422
    %1511 = vmatprep.subr.mxu0 %v1425
    %1512 = vmatpush1.msra.mxu0 %v1424
    %1513 = vmatprep.subr.mxu0 %v1427
    %1514 = vmatpush1.msra.mxu0 %v1426
    %1515 = vmatprep.subr.mxu0 %v1429
    %1516 = vmatpush1.msra.mxu0 %v1428
    %1517 = vmatprep.subr.mxu0 0.0
    %1518 = vmatpush1.msra.mxu0 0.0
    %1519 = vmatprep.subr.mxu0 0.0
    %1520 = vmatpush1.msra.mxu0 0.0
    %1521 = vmatprep.subr.mxu0 0.0
    %1522 = vmatpush1.msra.mxu0 0.0
    %1523 = vmatprep.subr.mxu0 0.0
    %1524 = vmatpush1.msra.mxu0 0.0
    %1525 = vmatprep.subr.mxu0 0.0
    %1526 = vmatpush1.msra.mxu0 0.0
    %1527 = vmatprep.subr.mxu0 0.0
    %1528 = vmatpush1.msra.mxu0 0.0
    %1529 = vmatprep.subr.mxu0 0.0
    %1530 = vmatpush1.msra.mxu0 0.0
    %1531 = vmatprep.subr.mxu0 0.0
    %1532 = vmatpush1.msra.mxu0 0.0
    %1533 = vmatprep.subr.mxu0 0.0
    %1534 = vmatpush1.msra.mxu0 0.0
    %1535 = vmatprep.subr.mxu0 0.0
    %1536 = vmatpush1.msra.mxu0 0.0
    %1537 = vmatprep.subr.mxu0 0.0
    %1538 = vmatpush1.msra.mxu0 0.0
    %1539 = vmatprep.subr.mxu0 0.0
    %1540 = vmatpush1.msra.mxu0 0.0
    %1541 = vmatprep.subr.mxu0 0.0
    %1542 = vmatpush1.msra.mxu0 0.0
    %1543 = vmatprep.subr.mxu0 0.0
    %1544 = vmatpush1.msra.mxu0 0.0
    %1545 = vmatprep.subr.mxu0 0.0
    %1546 = vmatpush1.msra.mxu0 0.0
    %1547 = vmatprep.subr.mxu0 0.0
    %1548 = vmatpush1.msra.mxu0 0.0
    %1549 = vmatprep.mubr.f32.mxu0 0.0
    %1550 = vmatmul.mubr.f32.gmra.mrb[0].mxu0 %v1465
    %v1551 = vpop.f32.mrb[0].mxu0
    %v1552 = vadd.f32 %v1434, %v1551
    %v1553 = vpop.f32.mrb[0].mxu0
    %v1554 = vadd.f32 %v1438, %v1553
    %1555 = vmatprep.mubr.f32.mxu0 0.0
    %1556 = vmatmul.mubr.f32.gmra.mrb[0].mxu0 %v1482
    %v1557 = vpop.f32.mrb[0].mxu0
    %v1558 = vadd.f32 %v1434, %v1557
    %v1559 = vpop.f32.mrb[0].mxu0
    %v1560 = vadd.f32 %v1438, %v1559
    %1561 = vdwg.mxu0
    %v1566 = vcombine.low %v1552, %v1554
    %v1567 = vcombine.high %v1552, %v1554
    %v1569 = vunpack.c.l.s4 1983009808
    %v1570 = vunpack.c.0.s8 %v1569
    %v1571 = vlaneseq
    %v1572 = vshrl.u32 %v1571, 7
    %v1573 = vsub.s32 %v1570, %v1572
    %v1574 = vrot.slane %v1566, %v1573
    %v1576 = vunpack.c.l.s4 1983009808
    %v1577 = vunpack.c.0.s8 %v1576
    %v1578 = vlaneseq
    %v1579 = vshrl.u32 %v1578, 7
    %v1580 = vsub.s32 %v1577, %v1579
    %v1581 = vrot.slane %v1567, %v1580
    %v1582 = vcombine.high %v1574, %v1574
    %v1583 = vcombine.high %v1581, %v1581
    %v1584 = vcombine.low %v1558, %v1560
    %v1585 = vcombine.high %v1558, %v1560
    %v1587 = vunpack.c.l.s4 1983009808
    %v1588 = vunpack.c.0.s8 %v1587
    %v1589 = vlaneseq
    %v1590 = vshrl.u32 %v1589, 7
    %v1591 = vsub.s32 %v1588, %v1590
    %v1592 = vrot.slane %v1584, %v1591
    %v1594 = vunpack.c.l.s4 1983009808
    %v1595 = vunpack.c.0.s8 %v1594
    %v1596 = vlaneseq
    %v1597 = vshrl.u32 %v1596, 7
    %v1598 = vsub.s32 %v1595, %v1597
    %v1599 = vrot.slane %v1585, %v1598
    %v1600 = vcombine.high %v1592, %v1592
    %v1601 = vcombine.high %v1599, %v1599
    %v1610 = vld [vmem:[#allocation5 + $0x100] sm:$0xff]
    %v1611 = vld [vmem:[#allocation5 + $0x108] sm:$0xff]
    %v1612 = vld [vmem:[#allocation5 + $0x110] sm:$0xff]
    %v1613 = vld [vmem:[#allocation5 + $0x118] sm:$0xff]
    %v1614 = vld [vmem:[#allocation5 + $0x120] sm:$0xff]
    %v1615 = vld [vmem:[#allocation5 + $0x128] sm:$0xff]
    %v1616 = vld [vmem:[#allocation5 + $0x130] sm:$0xff]
    %v1617 = vld [vmem:[#allocation5 + $0x138] sm:$0xff]
    %v1618 = vld [vmem:[#allocation5 + $0x140] sm:$0xff]
    %v1619 = vld [vmem:[#allocation5 + $0x148] sm:$0xff]
    %v1620 = vld [vmem:[#allocation5 + $0x150] sm:$0xff]
    %v1621 = vld [vmem:[#allocation5 + $0x158] sm:$0xff]
    %v1622 = vld [vmem:[#allocation5 + $0x160] sm:$0xff]
    %v1623 = vld [vmem:[#allocation5 + $0x168] sm:$0xff]
    %v1624 = vld [vmem:[#allocation5 + $0x170] sm:$0xff]
    %v1625 = vld [vmem:[#allocation5 + $0x178] sm:$0xff]
    %1626 = vmatprep.subr.mxu0 %v1611
    %1627 = vmatpush1.msra.mxu0 %v1610
    %1628 = vmatprep.subr.mxu0 %v1613
    %1629 = vmatpush1.msra.mxu0 %v1612
    %1630 = vmatprep.subr.mxu0 %v1615
    %1631 = vmatpush1.msra.mxu0 %v1614
    %1632 = vmatprep.subr.mxu0 %v1617
    %1633 = vmatpush1.msra.mxu0 %v1616
    %1634 = vmatprep.subr.mxu0 %v1619
    %1635 = vmatpush1.msra.mxu0 %v1618
    %1636 = vmatprep.subr.mxu0 %v1621
    %1637 = vmatpush1.msra.mxu0 %v1620
    %1638 = vmatprep.subr.mxu0 %v1623
    %1639 = vmatpush1.msra.mxu0 %v1622
    %1640 = vmatprep.subr.mxu0 %v1625
    %1641 = vmatpush1.msra.mxu0 %v1624
    %1642 = vmatprep.subr.mxu0 0.0
    %1643 = vmatpush1.msra.mxu0 0.0
    %1644 = vmatprep.subr.mxu0 0.0
    %1645 = vmatpush1.msra.mxu0 0.0
    %1646 = vmatprep.subr.mxu0 0.0
    %1647 = vmatpush1.msra.mxu0 0.0
    %1648 = vmatprep.subr.mxu0 0.0
    %1649 = vmatpush1.msra.mxu0 0.0
    %1650 = vmatprep.subr.mxu0 0.0
    %1651 = vmatpush1.msra.mxu0 0.0
    %1652 = vmatprep.subr.mxu0 0.0
    %1653 = vmatpush1.msra.mxu0 0.0
    %1654 = vmatprep.subr.mxu0 0.0
    %1655 = vmatpush1.msra.mxu0 0.0
    %1656 = vmatprep.subr.mxu0 0.0
    %1657 = vmatpush1.msra.mxu0 0.0
    %1658 = vmatprep.subr.mxu0 0.0
    %1659 = vmatpush1.msra.mxu0 0.0
    %1660 = vmatprep.subr.mxu0 0.0
    %1661 = vmatpush1.msra.mxu0 0.0
    %1662 = vmatprep.subr.mxu0 0.0
    %1663 = vmatpush1.msra.mxu0 0.0
    %1664 = vmatprep.subr.mxu0 0.0
    %1665 = vmatpush1.msra.mxu0 0.0
    %1666 = vmatprep.subr.mxu0 0.0
    %1667 = vmatpush1.msra.mxu0 0.0
    %1668 = vmatprep.subr.mxu0 0.0
    %1669 = vmatpush1.msra.mxu0 0.0
    %1670 = vmatprep.subr.mxu0 0.0
    %1671 = vmatpush1.msra.mxu0 0.0
    %1672 = vmatprep.subr.mxu0 0.0
    %1673 = vmatpush1.msra.mxu0 0.0
    %1674 = vmatprep.subr.mxu0 0.0
    %1675 = vmatpush1.msra.mxu0 0.0
    %1676 = vmatprep.subr.mxu0 0.0
    %1677 = vmatpush1.msra.mxu0 0.0
    %1678 = vmatprep.subr.mxu0 0.0
    %1679 = vmatpush1.msra.mxu0 0.0
    %1680 = vmatprep.subr.mxu0 0.0
    %1681 = vmatpush1.msra.mxu0 0.0
    %1682 = vmatprep.subr.mxu0 0.0
    %1683 = vmatpush1.msra.mxu0 0.0
    %1684 = vmatprep.subr.mxu0 0.0
    %1685 = vmatpush1.msra.mxu0 0.0
    %1686 = vmatprep.subr.mxu0 0.0
    %1687 = vmatpush1.msra.mxu0 0.0
    %1688 = vmatprep.subr.mxu0 0.0
    %1689 = vmatpush1.msra.mxu0 0.0
    %1690 = vmatprep.mubr.f32.mxu0 0.0
    %1691 = vmatmul.mubr.f32.gmra.mrb[0].mxu0 %v304
    %v1692 = vpop.f32.mrb[0].mxu0
    %v1693 = vadd.f32 0.0, %v1692
    %v1694 = vpop.f32.mrb[0].mxu0
    %v1695 = vadd.f32 0.0, %v1694
    %1696 = vdwg.mxu0
    %v1699 = vcombine.low %v1693, %v1695
    %v1701 = vunpack.c.l.s4 1983009808
    %v1702 = vunpack.c.0.s8 %v1701
    %v1703 = vlaneseq
    %v1704 = vshrl.u32 %v1703, 7
    %v1705 = vsub.s32 %v1702, %v1704
    %v1706 = vrot.slane %v1699, %v1705
    %v1708 = vadd.f32 %v1574, %v1706
    %v1709 = vxor.u32 %v1708, 2147483648
    %v1710 = vmul.f32 %v1709, 1.442695
    %v1711 = vpow.pop %v1710
    %v1712 = vadd.f32 %v1711, 1.0
    %v1713 = vrcp.pop %v1712
    %v1714 = vmul.f32 1.0, %v1713
    %1716 = vrot.lane.b32.xlu0 %v1708, 64
    %v1717 = vpop.permute.xlu0 %1716
    %v1718 = vrot.slane %v1717, 2
    %v1720 = vtanh.pop %v1718
    %v1721 = vmul.f32 %v1714, 0.0
    %v1722 = vmul.f32 %v1714, %v1720
    %1724 = vrot.lane.b32.xlu0 %v1722, 64
    %v1725 = vpop.permute.xlu0 %1724
    %v1727 = vadd.f32 %v1721, %v1725
    %v1728 = vtanh.pop %v1727
    %v1730 = vrot.slane %v1714, 2
    %1733 = vrot.lane.b32.xlu0 %v1728, 64
    %v1734 = vpop.permute.xlu0 %1733
    %v1736 = vmul.f32 %v1730, %v1734
    %v1738 = vsel %vm302, %v1736, 0
    %1740 = vmatprep.subr.mxu0 %v1611
    %1741 = vmatpush1.msra.mxu0 %v1610
    %1742 = vmatprep.subr.mxu0 %v1613
    %1743 = vmatpush1.msra.mxu0 %v1612
    %1744 = vmatprep.subr.mxu0 %v1615
    %1745 = vmatpush1.msra.mxu0 %v1614
    %1746 = vmatprep.subr.mxu0 %v1617
    %1747 = vmatpush1.msra.mxu0 %v1616
    %1748 = vmatprep.subr.mxu0 %v1619
    %1749 = vmatpush1.msra.mxu0 %v1618
    %1750 = vmatprep.subr.mxu0 %v1621
    %1751 = vmatpush1.msra.mxu0 %v1620
    %1752 = vmatprep.subr.mxu0 %v1623
    %1753 = vmatpush1.msra.mxu0 %v1622
    %1754 = vmatprep.subr.mxu0 %v1625
    %1755 = vmatpush1.msra.mxu0 %v1624
    %1756 = vmatprep.subr.mxu0 0.0
    %1757 = vmatpush1.msra.mxu0 0.0
    %1758 = vmatprep.subr.mxu0 0.0
    %1759 = vmatpush1.msra.mxu0 0.0
    %1760 = vmatprep.subr.mxu0 0.0
    %1761 = vmatpush1.msra.mxu0 0.0
    %1762 = vmatprep.subr.mxu0 0.0
    %1763 = vmatpush1.msra.mxu0 0.0
    %1764 = vmatprep.subr.mxu0 0.0
    %1765 = vmatpush1.msra.mxu0 0.0
    %1766 = vmatprep.subr.mxu0 0.0
    %1767 = vmatpush1.msra.mxu0 0.0
    %1768 = vmatprep.subr.mxu0 0.0
    %1769 = vmatpush1.msra.mxu0 0.0
    %1770 = vmatprep.subr.mxu0 0.0
    %1771 = vmatpush1.msra.mxu0 0.0
    %1772 = vmatprep.subr.mxu0 0.0
    %1773 = vmatpush1.msra.mxu0 0.0
    %1774 = vmatprep.subr.mxu0 0.0
    %1775 = vmatpush1.msra.mxu0 0.0
    %1776 = vmatprep.subr.mxu0 0.0
    %1777 = vmatpush1.msra.mxu0 0.0
    %1778 = vmatprep.subr.mxu0 0.0
    %1779 = vmatpush1.msra.mxu0 0.0
    %1780 = vmatprep.subr.mxu0 0.0
    %1781 = vmatpush1.msra.mxu0 0.0
    %1782 = vmatprep.subr.mxu0 0.0
    %1783 = vmatpush1.msra.mxu0 0.0
    %1784 = vmatprep.subr.mxu0 0.0
    %1785 = vmatpush1.msra.mxu0 0.0
    %1786 = vmatprep.subr.mxu0 0.0
    %1787 = vmatpush1.msra.mxu0 0.0
    %1788 = vmatprep.subr.mxu0 0.0
    %1789 = vmatpush1.msra.mxu0 0.0
    %1790 = vmatprep.subr.mxu0 0.0
    %1791 = vmatpush1.msra.mxu0 0.0
    %1792 = vmatprep.subr.mxu0 0.0
    %1793 = vmatpush1.msra.mxu0 0.0
    %1794 = vmatprep.subr.mxu0 0.0
    %1795 = vmatpush1.msra.mxu0 0.0
    %1796 = vmatprep.subr.mxu0 0.0
    %1797 = vmatpush1.msra.mxu0 0.0
    %1798 = vmatprep.subr.mxu0 0.0
    %1799 = vmatpush1.msra.mxu0 0.0
    %1800 = vmatprep.subr.mxu0 0.0
    %1801 = vmatpush1.msra.mxu0 0.0
    %1802 = vmatprep.subr.mxu0 0.0
    %1803 = vmatpush1.msra.mxu0 0.0
    %1804 = vmatprep.mubr.f32.mxu0 0.0
    %1805 = vmatmul.mubr.f32.gmra.mrb[0].mxu0 %v1738
    %v1806 = vpop.f32.mrb[0].mxu0
    %v1807 = vadd.f32 0.0, %v1806
    %v1808 = vpop.f32.mrb[0].mxu0
    %v1809 = vadd.f32 0.0, %v1808
    %1810 = vdwg.mxu0
    %v1813 = vcombine.low %v1807, %v1809
    %v1815 = vunpack.c.l.s4 1983009808
    %v1816 = vunpack.c.0.s8 %v1815
    %v1817 = vlaneseq
    %v1818 = vshrl.u32 %v1817, 7
    %v1819 = vsub.s32 %v1816, %v1818
    %v1820 = vrot.slane %v1813, %v1819
    %v1822 = vadd.f32 %v1582, %v1820
    %v1823 = vxor.u32 %v1822, 2147483648
    %v1824 = vmul.f32 %v1823, 1.442695
    %v1825 = vpow.pop %v1824
    %v1826 = vadd.f32 %v1825, 1.0
    %v1827 = vrcp.pop %v1826
    %v1828 = vmul.f32 1.0, %v1827
    %1830 = vrot.lane.b32.xlu0 %v1822, 64
    %v1831 = vpop.permute.xlu0 %1830
    %v1832 = vrot.slane %v1831, 2
    %v1834 = vtanh.pop %v1832
    %v1835 = vmul.f32 %v1828, %v1727
    %v1836 = vmul.f32 %v1828, %v1834
    %1838 = vrot.lane.b32.xlu0 %v1836, 64
    %v1839 = vpop.permute.xlu0 %1838
    %v1841 = vadd.f32 %v1835, %v1839
    %v1842 = vtanh.pop %v1841
    %v1844 = vrot.slane %v1828, 2
    %1847 = vrot.lane.b32.xlu0 %v1842, 64
    %v1848 = vpop.permute.xlu0 %1847
    %v1850 = vmul.f32 %v1844, %v1848
    %v1852 = vsel %vm302, %v1850, 0
    %1854 = vmatprep.subr.mxu0 %v1611
    %1855 = vmatpush1.msra.mxu0 %v1610
    %1856 = vmatprep.subr.mxu0 %v1613
    %1857 = vmatpush1.msra.mxu0 %v1612
    %1858 = vmatprep.subr.mxu0 %v1615
    %1859 = vmatpush1.msra.mxu0 %v1614
    %1860 = vmatprep.subr.mxu0 %v1617
    %1861 = vmatpush1.msra.mxu0 %v1616
    %1862 = vmatprep.subr.mxu0 %v1619
    %1863 = vmatpush1.msra.mxu0 %v1618
    %1864 = vmatprep.subr.mxu0 %v1621
    %1865 = vmatpush1.msra.mxu0 %v1620
    %1866 = vmatprep.subr.mxu0 %v1623
    %1867 = vmatpush1.msra.mxu0 %v1622
    %1868 = vmatprep.subr.mxu0 %v1625
    %1869 = vmatpush1.msra.mxu0 %v1624
    %1870 = vmatprep.subr.mxu0 0.0
    %1871 = vmatpush1.msra.mxu0 0.0
    %1872 = vmatprep.subr.mxu0 0.0
    %1873 = vmatpush1.msra.mxu0 0.0
    %1874 = vmatprep.subr.mxu0 0.0
    %1875 = vmatpush1.msra.mxu0 0.0
    %1876 = vmatprep.subr.mxu0 0.0
    %1877 = vmatpush1.msra.mxu0 0.0
    %1878 = vmatprep.subr.mxu0 0.0
    %1879 = vmatpush1.msra.mxu0 0.0
    %1880 = vmatprep.subr.mxu0 0.0
    %1881 = vmatpush1.msra.mxu0 0.0
    %1882 = vmatprep.subr.mxu0 0.0
    %1883 = vmatpush1.msra.mxu0 0.0
    %1884 = vmatprep.subr.mxu0 0.0
    %1885 = vmatpush1.msra.mxu0 0.0
    %1886 = vmatprep.subr.mxu0 0.0
    %1887 = vmatpush1.msra.mxu0 0.0
    %1888 = vmatprep.subr.mxu0 0.0
    %1889 = vmatpush1.msra.mxu0 0.0
    %1890 = vmatprep.subr.mxu0 0.0
    %1891 = vmatpush1.msra.mxu0 0.0
    %1892 = vmatprep.subr.mxu0 0.0
    %1893 = vmatpush1.msra.mxu0 0.0
    %1894 = vmatprep.subr.mxu0 0.0
    %1895 = vmatpush1.msra.mxu0 0.0
    %1896 = vmatprep.subr.mxu0 0.0
    %1897 = vmatpush1.msra.mxu0 0.0
    %1898 = vmatprep.subr.mxu0 0.0
    %1899 = vmatpush1.msra.mxu0 0.0
    %1900 = vmatprep.subr.mxu0 0.0
    %1901 = vmatpush1.msra.mxu0 0.0
    %1902 = vmatprep.subr.mxu0 0.0
    %1903 = vmatpush1.msra.mxu0 0.0
    %1904 = vmatprep.subr.mxu0 0.0
    %1905 = vmatpush1.msra.mxu0 0.0
    %1906 = vmatprep.subr.mxu0 0.0
    %1907 = vmatpush1.msra.mxu0 0.0
    %1908 = vmatprep.subr.mxu0 0.0
    %1909 = vmatpush1.msra.mxu0 0.0
    %1910 = vmatprep.subr.mxu0 0.0
    %1911 = vmatpush1.msra.mxu0 0.0
    %1912 = vmatprep.subr.mxu0 0.0
    %1913 = vmatpush1.msra.mxu0 0.0
    %1914 = vmatprep.subr.mxu0 0.0
    %1915 = vmatpush1.msra.mxu0 0.0
    %1916 = vmatprep.subr.mxu0 0.0
    %1917 = vmatpush1.msra.mxu0 0.0
    %1918 = vmatprep.mubr.f32.mxu0 0.0
    %1919 = vmatmul.mubr.f32.gmra.mrb[0].mxu0 %v1852
    %v1920 = vpop.f32.mrb[0].mxu0
    %v1921 = vadd.f32 0.0, %v1920
    %v1922 = vpop.f32.mrb[0].mxu0
    %v1923 = vadd.f32 0.0, %v1922
    %1924 = vdwg.mxu0
    %v1927 = vcombine.low %v1921, %v1923
    %v1929 = vunpack.c.l.s4 1983009808
    %v1930 = vunpack.c.0.s8 %v1929
    %v1931 = vlaneseq
    %v1932 = vshrl.u32 %v1931, 7
    %v1933 = vsub.s32 %v1930, %v1932
    %v1934 = vrot.slane %v1927, %v1933
    %v1936 = vadd.f32 %v1581, %v1934
    %v1937 = vxor.u32 %v1936, 2147483648
    %v1938 = vmul.f32 %v1937, 1.442695
    %v1939 = vpow.pop %v1938
    %v1940 = vadd.f32 %v1939, 1.0
    %v1941 = vrcp.pop %v1940
    %v1942 = vmul.f32 1.0, %v1941
    %1944 = vrot.lane.b32.xlu0 %v1936, 64
    %v1945 = vpop.permute.xlu0 %1944
    %v1946 = vrot.slane %v1945, 2
    %v1948 = vtanh.pop %v1946
    %v1949 = vmul.f32 %v1942, %v1841
    %v1950 = vmul.f32 %v1942, %v1948
    %1952 = vrot.lane.b32.xlu0 %v1950, 64
    %v1953 = vpop.permute.xlu0 %1952
    %v1955 = vadd.f32 %v1949, %v1953
    %v1956 = vtanh.pop %v1955
    %v1958 = vrot.slane %v1942, 2
    %1961 = vrot.lane.b32.xlu0 %v1956, 64
    %v1962 = vpop.permute.xlu0 %1961
    %v1964 = vmul.f32 %v1958, %v1962
    %v1966 = vsel %vm302, %v1964, 0
    %1968 = vmatprep.subr.mxu0 %v1611
    %1969 = vmatpush1.msra.mxu0 %v1610
    %1970 = vmatprep.subr.mxu0 %v1613
    %1971 = vmatpush1.msra.mxu0 %v1612
    %1972 = vmatprep.subr.mxu0 %v1615
    %1973 = vmatpush1.msra.mxu0 %v1614
    %1974 = vmatprep.subr.mxu0 %v1617
    %1975 = vmatpush1.msra.mxu0 %v1616
    %1976 = vmatprep.subr.mxu0 %v1619
    %1977 = vmatpush1.msra.mxu0 %v1618
    %1978 = vmatprep.subr.mxu0 %v1621
    %1979 = vmatpush1.msra.mxu0 %v1620
    %1980 = vmatprep.subr.mxu0 %v1623
    %1981 = vmatpush1.msra.mxu0 %v1622
    %1982 = vmatprep.subr.mxu0 %v1625
    %1983 = vmatpush1.msra.mxu0 %v1624
    %1984 = vmatprep.subr.mxu0 0.0
    %1985 = vmatpush1.msra.mxu0 0.0
    %1986 = vmatprep.subr.mxu0 0.0
    %1987 = vmatpush1.msra.mxu0 0.0
    %1988 = vmatprep.subr.mxu0 0.0
    %1989 = vmatpush1.msra.mxu0 0.0
    %1990 = vmatprep.subr.mxu0 0.0
    %1991 = vmatpush1.msra.mxu0 0.0
    %1992 = vmatprep.subr.mxu0 0.0
    %1993 = vmatpush1.msra.mxu0 0.0
    %1994 = vmatprep.subr.mxu0 0.0
    %1995 = vmatpush1.msra.mxu0 0.0
    %1996 = vmatprep.subr.mxu0 0.0
    %1997 = vmatpush1.msra.mxu0 0.0
    %1998 = vmatprep.subr.mxu0 0.0
    %1999 = vmatpush1.msra.mxu0 0.0
    %2000 = vmatprep.subr.mxu0 0.0
    %2001 = vmatpush1.msra.mxu0 0.0
    %2002 = vmatprep.subr.mxu0 0.0
    %2003 = vmatpush1.msra.mxu0 0.0
    %2004 = vmatprep.subr.mxu0 0.0
    %2005 = vmatpush1.msra.mxu0 0.0
    %2006 = vmatprep.subr.mxu0 0.0
    %2007 = vmatpush1.msra.mxu0 0.0
    %2008 = vmatprep.subr.mxu0 0.0
    %2009 = vmatpush1.msra.mxu0 0.0
    %2010 = vmatprep.subr.mxu0 0.0
    %2011 = vmatpush1.msra.mxu0 0.0
    %2012 = vmatprep.subr.mxu0 0.0
    %2013 = vmatpush1.msra.mxu0 0.0
    %2014 = vmatprep.subr.mxu0 0.0
    %2015 = vmatpush1.msra.mxu0 0.0
    %2016 = vmatprep.subr.mxu0 0.0
    %2017 = vmatpush1.msra.mxu0 0.0
    %2018 = vmatprep.subr.mxu0 0.0
    %2019 = vmatpush1.msra.mxu0 0.0
    %2020 = vmatprep.subr.mxu0 0.0
    %2021 = vmatpush1.msra.mxu0 0.0
    %2022 = vmatprep.subr.mxu0 0.0
    %2023 = vmatpush1.msra.mxu0 0.0
    %2024 = vmatprep.subr.mxu0 0.0
    %2025 = vmatpush1.msra.mxu0 0.0
    %2026 = vmatprep.subr.mxu0 0.0
    %2027 = vmatpush1.msra.mxu0 0.0
    %2028 = vmatprep.subr.mxu0 0.0
    %2029 = vmatpush1.msra.mxu0 0.0
    %2030 = vmatprep.subr.mxu0 0.0
    %2031 = vmatpush1.msra.mxu0 0.0
    %2032 = vmatprep.mubr.f32.mxu0 0.0
    %2033 = vmatmul.mubr.f32.gmra.mrb[0].mxu0 %v1966
    %v2034 = vpop.f32.mrb[0].mxu0
    %v2035 = vadd.f32 0.0, %v2034
    %v2036 = vpop.f32.mrb[0].mxu0
    %v2037 = vadd.f32 0.0, %v2036
    %2038 = vdwg.mxu0
    %v2041 = vcombine.low %v2035, %v2037
    %v2043 = vunpack.c.l.s4 1983009808
    %v2044 = vunpack.c.0.s8 %v2043
    %v2045 = vlaneseq
    %v2046 = vshrl.u32 %v2045, 7
    %v2047 = vsub.s32 %v2044, %v2046
    %v2048 = vrot.slane %v2041, %v2047
    %v2050 = vadd.f32 %v1583, %v2048
    %v2051 = vxor.u32 %v2050, 2147483648
    %v2052 = vmul.f32 %v2051, 1.442695
    %v2053 = vpow.pop %v2052
    %v2054 = vadd.f32 %v2053, 1.0
    %v2055 = vrcp.pop %v2054
    %v2056 = vmul.f32 1.0, %v2055
    %2058 = vrot.lane.b32.xlu0 %v2050, 64
    %v2059 = vpop.permute.xlu0 %2058
    %v2060 = vrot.slane %v2059, 2
    %v2062 = vtanh.pop %v2060
    %v2063 = vmul.f32 %v2056, %v1955
    %v2064 = vmul.f32 %v2056, %v2062
    %2066 = vrot.lane.b32.xlu0 %v2064, 64
    %v2067 = vpop.permute.xlu0 %2066
    %v2069 = vadd.f32 %v2063, %v2067
    %v2070 = vtanh.pop %v2069
    %v2072 = vrot.slane %v2056, 2
    %2075 = vrot.lane.b32.xlu0 %v2070, 64
    %v2076 = vpop.permute.xlu0 %2075
    %v2078 = vmul.f32 %v2072, %v2076
    %v2080 = vsel %vm302, %v2078, 0
    %2082 = vmatprep.subr.mxu0 %v1611
    %2083 = vmatpush1.msra.mxu0 %v1610
    %2084 = vmatprep.subr.mxu0 %v1613
    %2085 = vmatpush1.msra.mxu0 %v1612
    %2086 = vmatprep.subr.mxu0 %v1615
    %2087 = vmatpush1.msra.mxu0 %v1614
    %2088 = vmatprep.subr.mxu0 %v1617
    %2089 = vmatpush1.msra.mxu0 %v1616
    %2090 = vmatprep.subr.mxu0 %v1619
    %2091 = vmatpush1.msra.mxu0 %v1618
    %2092 = vmatprep.subr.mxu0 %v1621
    %2093 = vmatpush1.msra.mxu0 %v1620
    %2094 = vmatprep.subr.mxu0 %v1623
    %2095 = vmatpush1.msra.mxu0 %v1622
    %2096 = vmatprep.subr.mxu0 %v1625
    %2097 = vmatpush1.msra.mxu0 %v1624
    %2098 = vmatprep.subr.mxu0 0.0
    %2099 = vmatpush1.msra.mxu0 0.0
    %2100 = vmatprep.subr.mxu0 0.0
    %2101 = vmatpush1.msra.mxu0 0.0
    %2102 = vmatprep.subr.mxu0 0.0
    %2103 = vmatpush1.msra.mxu0 0.0
    %2104 = vmatprep.subr.mxu0 0.0
    %2105 = vmatpush1.msra.mxu0 0.0
    %2106 = vmatprep.subr.mxu0 0.0
    %2107 = vmatpush1.msra.mxu0 0.0
    %2108 = vmatprep.subr.mxu0 0.0
    %2109 = vmatpush1.msra.mxu0 0.0
    %2110 = vmatprep.subr.mxu0 0.0
    %2111 = vmatpush1.msra.mxu0 0.0
    %2112 = vmatprep.subr.mxu0 0.0
    %2113 = vmatpush1.msra.mxu0 0.0
    %2114 = vmatprep.subr.mxu0 0.0
    %2115 = vmatpush1.msra.mxu0 0.0
    %2116 = vmatprep.subr.mxu0 0.0
    %2117 = vmatpush1.msra.mxu0 0.0
    %2118 = vmatprep.subr.mxu0 0.0
    %2119 = vmatpush1.msra.mxu0 0.0
    %2120 = vmatprep.subr.mxu0 0.0
    %2121 = vmatpush1.msra.mxu0 0.0
    %2122 = vmatprep.subr.mxu0 0.0
    %2123 = vmatpush1.msra.mxu0 0.0
    %2124 = vmatprep.subr.mxu0 0.0
    %2125 = vmatpush1.msra.mxu0 0.0
    %2126 = vmatprep.subr.mxu0 0.0
    %2127 = vmatpush1.msra.mxu0 0.0
    %2128 = vmatprep.subr.mxu0 0.0
    %2129 = vmatpush1.msra.mxu0 0.0
    %2130 = vmatprep.subr.mxu0 0.0
    %2131 = vmatpush1.msra.mxu0 0.0
    %2132 = vmatprep.subr.mxu0 0.0
    %2133 = vmatpush1.msra.mxu0 0.0
    %2134 = vmatprep.subr.mxu0 0.0
    %2135 = vmatpush1.msra.mxu0 0.0
    %2136 = vmatprep.subr.mxu0 0.0
    %2137 = vmatpush1.msra.mxu0 0.0
    %2138 = vmatprep.subr.mxu0 0.0
    %2139 = vmatpush1.msra.mxu0 0.0
    %2140 = vmatprep.subr.mxu0 0.0
    %2141 = vmatpush1.msra.mxu0 0.0
    %2142 = vmatprep.subr.mxu0 0.0
    %2143 = vmatpush1.msra.mxu0 0.0
    %2144 = vmatprep.subr.mxu0 0.0
    %2145 = vmatpush1.msra.mxu0 0.0
    %2146 = vmatprep.mubr.f32.mxu0 0.0
    %2147 = vmatmul.mubr.f32.gmra.mrb[0].mxu0 %v2080
    %v2148 = vpop.f32.mrb[0].mxu0
    %v2149 = vadd.f32 0.0, %v2148
    %v2150 = vpop.f32.mrb[0].mxu0
    %v2151 = vadd.f32 0.0, %v2150
    %2152 = vdwg.mxu0
    %v2155 = vcombine.low %v2149, %v2151
    %v2157 = vunpack.c.l.s4 1983009808
    %v2158 = vunpack.c.0.s8 %v2157
    %v2159 = vlaneseq
    %v2160 = vshrl.u32 %v2159, 7
    %v2161 = vsub.s32 %v2158, %v2160
    %v2162 = vrot.slane %v2155, %v2161
    %v2164 = vadd.f32 %v1592, %v2162
    %v2165 = vxor.u32 %v2164, 2147483648
    %v2166 = vmul.f32 %v2165, 1.442695
    %v2167 = vpow.pop %v2166
    %v2168 = vadd.f32 %v2167, 1.0
    %v2169 = vrcp.pop %v2168
    %v2170 = vmul.f32 1.0, %v2169
    %2172 = vrot.lane.b32.xlu0 %v2164, 64
    %v2173 = vpop.permute.xlu0 %2172
    %v2174 = vrot.slane %v2173, 2
    %v2176 = vtanh.pop %v2174
    %v2177 = vmul.f32 %v2170, %v2069
    %v2178 = vmul.f32 %v2170, %v2176
    %2180 = vrot.lane.b32.xlu0 %v2178, 64
    %v2181 = vpop.permute.xlu0 %2180
    %v2183 = vadd.f32 %v2177, %v2181
    %v2184 = vtanh.pop %v2183
    %v2186 = vrot.slane %v2170, 2
    %2189 = vrot.lane.b32.xlu0 %v2184, 64
    %v2190 = vpop.permute.xlu0 %2189
    %v2192 = vmul.f32 %v2186, %v2190
    %v2194 = vsel %vm302, %v2192, 0
    %2196 = vmatprep.subr.mxu0 %v1611
    %2197 = vmatpush1.msra.mxu0 %v1610
    %2198 = vmatprep.subr.mxu0 %v1613
    %2199 = vmatpush1.msra.mxu0 %v1612
    %2200 = vmatprep.subr.mxu0 %v1615
    %2201 = vmatpush1.msra.mxu0 %v1614
    %2202 = vmatprep.subr.mxu0 %v1617
    %2203 = vmatpush1.msra.mxu0 %v1616
    %2204 = vmatprep.subr.mxu0 %v1619
    %2205 = vmatpush1.msra.mxu0 %v1618
    %2206 = vmatprep.subr.mxu0 %v1621
    %2207 = vmatpush1.msra.mxu0 %v1620
    %2208 = vmatprep.subr.mxu0 %v1623
    %2209 = vmatpush1.msra.mxu0 %v1622
    %2210 = vmatprep.subr.mxu0 %v1625
    %2211 = vmatpush1.msra.mxu0 %v1624
    %2212 = vmatprep.subr.mxu0 0.0
    %2213 = vmatpush1.msra.mxu0 0.0
    %2214 = vmatprep.subr.mxu0 0.0
    %2215 = vmatpush1.msra.mxu0 0.0
    %2216 = vmatprep.subr.mxu0 0.0
    %2217 = vmatpush1.msra.mxu0 0.0
    %2218 = vmatprep.subr.mxu0 0.0
    %2219 = vmatpush1.msra.mxu0 0.0
    %2220 = vmatprep.subr.mxu0 0.0
    %2221 = vmatpush1.msra.mxu0 0.0
    %2222 = vmatprep.subr.mxu0 0.0
    %2223 = vmatpush1.msra.mxu0 0.0
    %2224 = vmatprep.subr.mxu0 0.0
    %2225 = vmatpush1.msra.mxu0 0.0
    %2226 = vmatprep.subr.mxu0 0.0
    %2227 = vmatpush1.msra.mxu0 0.0
    %2228 = vmatprep.subr.mxu0 0.0
    %2229 = vmatpush1.msra.mxu0 0.0
    %2230 = vmatprep.subr.mxu0 0.0
    %2231 = vmatpush1.msra.mxu0 0.0
    %2232 = vmatprep.subr.mxu0 0.0
    %2233 = vmatpush1.msra.mxu0 0.0
    %2234 = vmatprep.subr.mxu0 0.0
    %2235 = vmatpush1.msra.mxu0 0.0
    %2236 = vmatprep.subr.mxu0 0.0
    %2237 = vmatpush1.msra.mxu0 0.0
    %2238 = vmatprep.subr.mxu0 0.0
    %2239 = vmatpush1.msra.mxu0 0.0
    %2240 = vmatprep.subr.mxu0 0.0
    %2241 = vmatpush1.msra.mxu0 0.0
    %2242 = vmatprep.subr.mxu0 0.0
    %2243 = vmatpush1.msra.mxu0 0.0
    %2244 = vmatprep.subr.mxu0 0.0
    %2245 = vmatpush1.msra.mxu0 0.0
    %2246 = vmatprep.subr.mxu0 0.0
    %2247 = vmatpush1.msra.mxu0 0.0
    %2248 = vmatprep.subr.mxu0 0.0
    %2249 = vmatpush1.msra.mxu0 0.0
    %2250 = vmatprep.subr.mxu0 0.0
    %2251 = vmatpush1.msra.mxu0 0.0
    %2252 = vmatprep.subr.mxu0 0.0
    %2253 = vmatpush1.msra.mxu0 0.0
    %2254 = vmatprep.subr.mxu0 0.0
    %2255 = vmatpush1.msra.mxu0 0.0
    %2256 = vmatprep.subr.mxu0 0.0
    %2257 = vmatpush1.msra.mxu0 0.0
    %2258 = vmatprep.subr.mxu0 0.0
    %2259 = vmatpush1.msra.mxu0 0.0
    %2260 = vmatprep.mubr.f32.mxu0 0.0
    %2261 = vmatmul.mubr.f32.gmra.mrb[0].mxu0 %v2194
    %v2262 = vpop.f32.mrb[0].mxu0
    %v2263 = vadd.f32 0.0, %v2262
    %v2264 = vpop.f32.mrb[0].mxu0
    %v2265 = vadd.f32 0.0, %v2264
    %2266 = vdwg.mxu0
    %v2269 = vcombine.low %v2263, %v2265
    %v2271 = vunpack.c.l.s4 1983009808
    %v2272 = vunpack.c.0.s8 %v2271
    %v2273 = vlaneseq
    %v2274 = vshrl.u32 %v2273, 7
    %v2275 = vsub.s32 %v2272, %v2274
    %v2276 = vrot.slane %v2269, %v2275
    %v2278 = vadd.f32 %v1600, %v2276
    %v2279 = vxor.u32 %v2278, 2147483648
    %v2280 = vmul.f32 %v2279, 1.442695
    %v2281 = vpow.pop %v2280
    %v2282 = vadd.f32 %v2281, 1.0
    %v2283 = vrcp.pop %v2282
    %v2284 = vmul.f32 1.0, %v2283
    %2286 = vrot.lane.b32.xlu0 %v2278, 64
    %v2287 = vpop.permute.xlu0 %2286
    %v2288 = vrot.slane %v2287, 2
    %v2290 = vtanh.pop %v2288
    %v2291 = vmul.f32 %v2284, %v2183
    %v2292 = vmul.f32 %v2284, %v2290
    %2294 = vrot.lane.b32.xlu0 %v2292, 64
    %v2295 = vpop.permute.xlu0 %2294
    %v2297 = vadd.f32 %v2291, %v2295
    %v2298 = vtanh.pop %v2297
    %v2300 = vrot.slane %v2284, 2
    %2303 = vrot.lane.b32.xlu0 %v2298, 64
    %v2304 = vpop.permute.xlu0 %2303
    %v2306 = vmul.f32 %v2300, %v2304
    %v2308 = vsel %vm302, %v2306, 0
    %2310 = vmatprep.subr.mxu0 %v1611
    %2311 = vmatpush1.msra.mxu0 %v1610
    %2312 = vmatprep.subr.mxu0 %v1613
    %2313 = vmatpush1.msra.mxu0 %v1612
    %2314 = vmatprep.subr.mxu0 %v1615
    %2315 = vmatpush1.msra.mxu0 %v1614
    %2316 = vmatprep.subr.mxu0 %v1617
    %2317 = vmatpush1.msra.mxu0 %v1616
    %2318 = vmatprep.subr.mxu0 %v1619
    %2319 = vmatpush1.msra.mxu0 %v1618
    %2320 = vmatprep.subr.mxu0 %v1621
    %2321 = vmatpush1.msra.mxu0 %v1620
    %2322 = vmatprep.subr.mxu0 %v1623
    %2323 = vmatpush1.msra.mxu0 %v1622
    %2324 = vmatprep.subr.mxu0 %v1625
    %2325 = vmatpush1.msra.mxu0 %v1624
    %2326 = vmatprep.subr.mxu0 0.0
    %2327 = vmatpush1.msra.mxu0 0.0
    %2328 = vmatprep.subr.mxu0 0.0
    %2329 = vmatpush1.msra.mxu0 0.0
    %2330 = vmatprep.subr.mxu0 0.0
    %2331 = vmatpush1.msra.mxu0 0.0
    %2332 = vmatprep.subr.mxu0 0.0
    %2333 = vmatpush1.msra.mxu0 0.0
    %2334 = vmatprep.subr.mxu0 0.0
    %2335 = vmatpush1.msra.mxu0 0.0
    %2336 = vmatprep.subr.mxu0 0.0
    %2337 = vmatpush1.msra.mxu0 0.0
    %2338 = vmatprep.subr.mxu0 0.0
    %2339 = vmatpush1.msra.mxu0 0.0
    %2340 = vmatprep.subr.mxu0 0.0
    %2341 = vmatpush1.msra.mxu0 0.0
    %2342 = vmatprep.subr.mxu0 0.0
    %2343 = vmatpush1.msra.mxu0 0.0
    %2344 = vmatprep.subr.mxu0 0.0
    %2345 = vmatpush1.msra.mxu0 0.0
    %2346 = vmatprep.subr.mxu0 0.0
    %2347 = vmatpush1.msra.mxu0 0.0
    %2348 = vmatprep.subr.mxu0 0.0
    %2349 = vmatpush1.msra.mxu0 0.0
    %2350 = vmatprep.subr.mxu0 0.0
    %2351 = vmatpush1.msra.mxu0 0.0
    %2352 = vmatprep.subr.mxu0 0.0
    %2353 = vmatpush1.msra.mxu0 0.0
    %2354 = vmatprep.subr.mxu0 0.0
    %2355 = vmatpush1.msra.mxu0 0.0
    %2356 = vmatprep.subr.mxu0 0.0
    %2357 = vmatpush1.msra.mxu0 0.0
    %2358 = vmatprep.subr.mxu0 0.0
    %2359 = vmatpush1.msra.mxu0 0.0
    %2360 = vmatprep.subr.mxu0 0.0
    %2361 = vmatpush1.msra.mxu0 0.0
    %2362 = vmatprep.subr.mxu0 0.0
    %2363 = vmatpush1.msra.mxu0 0.0
    %2364 = vmatprep.subr.mxu0 0.0
    %2365 = vmatpush1.msra.mxu0 0.0
    %2366 = vmatprep.subr.mxu0 0.0
    %2367 = vmatpush1.msra.mxu0 0.0
    %2368 = vmatprep.subr.mxu0 0.0
    %2369 = vmatpush1.msra.mxu0 0.0
    %2370 = vmatprep.subr.mxu0 0.0
    %2371 = vmatpush1.msra.mxu0 0.0
    %2372 = vmatprep.subr.mxu0 0.0
    %2373 = vmatpush1.msra.mxu0 0.0
    %2374 = vmatprep.mubr.f32.mxu0 0.0
    %2375 = vmatmul.mubr.f32.gmra.mrb[0].mxu0 %v2308
    %v2376 = vpop.f32.mrb[0].mxu0
    %v2377 = vadd.f32 0.0, %v2376
    %v2378 = vpop.f32.mrb[0].mxu0
    %v2379 = vadd.f32 0.0, %v2378
    %2380 = vdwg.mxu0
    %v2383 = vcombine.low %v2377, %v2379
    %v2385 = vunpack.c.l.s4 1983009808
    %v2386 = vunpack.c.0.s8 %v2385
    %v2387 = vlaneseq
    %v2388 = vshrl.u32 %v2387, 7
    %v2389 = vsub.s32 %v2386, %v2388
    %v2390 = vrot.slane %v2383, %v2389
    %v2392 = vadd.f32 %v1599, %v2390
    %v2393 = vxor.u32 %v2392, 2147483648
    %v2394 = vmul.f32 %v2393, 1.442695
    %v2395 = vpow.pop %v2394
    %v2396 = vadd.f32 %v2395, 1.0
    %v2397 = vrcp.pop %v2396
    %v2398 = vmul.f32 1.0, %v2397
    %2400 = vrot.lane.b32.xlu0 %v2392, 64
    %v2401 = vpop.permute.xlu0 %2400
    %v2402 = vrot.slane %v2401, 2
    %v2404 = vtanh.pop %v2402
    %v2405 = vmul.f32 %v2398, %v2297
    %v2406 = vmul.f32 %v2398, %v2404
    %2408 = vrot.lane.b32.xlu0 %v2406, 64
    %v2409 = vpop.permute.xlu0 %2408
    %v2411 = vadd.f32 %v2405, %v2409
    %v2412 = vtanh.pop %v2411
    %v2414 = vrot.slane %v2398, 2
    %2417 = vrot.lane.b32.xlu0 %v2412, 64
    %v2418 = vpop.permute.xlu0 %2417
    %v2420 = vmul.f32 %v2414, %v2418
    %v2422 = vsel %vm302, %v2420, 0
    %2424 = vmatprep.subr.mxu0 %v1611
    %2425 = vmatpush1.msra.mxu0 %v1610
    %2426 = vmatprep.subr.mxu0 %v1613
    %2427 = vmatpush1.msra.mxu0 %v1612
    %2428 = vmatprep.subr.mxu0 %v1615
    %2429 = vmatpush1.msra.mxu0 %v1614
    %2430 = vmatprep.subr.mxu0 %v1617
    %2431 = vmatpush1.msra.mxu0 %v1616
    %2432 = vmatprep.subr.mxu0 %v1619
    %2433 = vmatpush1.msra.mxu0 %v1618
    %2434 = vmatprep.subr.mxu0 %v1621
    %2435 = vmatpush1.msra.mxu0 %v1620
    %2436 = vmatprep.subr.mxu0 %v1623
    %2437 = vmatpush1.msra.mxu0 %v1622
    %2438 = vmatprep.subr.mxu0 %v1625
    %2439 = vmatpush1.msra.mxu0 %v1624
    %2440 = vmatprep.subr.mxu0 0.0
    %2441 = vmatpush1.msra.mxu0 0.0
    %2442 = vmatprep.subr.mxu0 0.0
    %2443 = vmatpush1.msra.mxu0 0.0
    %2444 = vmatprep.subr.mxu0 0.0
    %2445 = vmatpush1.msra.mxu0 0.0
    %2446 = vmatprep.subr.mxu0 0.0
    %2447 = vmatpush1.msra.mxu0 0.0
    %2448 = vmatprep.subr.mxu0 0.0
    %2449 = vmatpush1.msra.mxu0 0.0
    %2450 = vmatprep.subr.mxu0 0.0
    %2451 = vmatpush1.msra.mxu0 0.0
    %2452 = vmatprep.subr.mxu0 0.0
    %2453 = vmatpush1.msra.mxu0 0.0
    %2454 = vmatprep.subr.mxu0 0.0
    %2455 = vmatpush1.msra.mxu0 0.0
    %2456 = vmatprep.subr.mxu0 0.0
    %2457 = vmatpush1.msra.mxu0 0.0
    %2458 = vmatprep.subr.mxu0 0.0
    %2459 = vmatpush1.msra.mxu0 0.0
    %2460 = vmatprep.subr.mxu0 0.0
    %2461 = vmatpush1.msra.mxu0 0.0
    %2462 = vmatprep.subr.mxu0 0.0
    %2463 = vmatpush1.msra.mxu0 0.0
    %2464 = vmatprep.subr.mxu0 0.0
    %2465 = vmatpush1.msra.mxu0 0.0
    %2466 = vmatprep.subr.mxu0 0.0
    %2467 = vmatpush1.msra.mxu0 0.0
    %2468 = vmatprep.subr.mxu0 0.0
    %2469 = vmatpush1.msra.mxu0 0.0
    %2470 = vmatprep.subr.mxu0 0.0
    %2471 = vmatpush1.msra.mxu0 0.0
    %2472 = vmatprep.subr.mxu0 0.0
    %2473 = vmatpush1.msra.mxu0 0.0
    %2474 = vmatprep.subr.mxu0 0.0
    %2475 = vmatpush1.msra.mxu0 0.0
    %2476 = vmatprep.subr.mxu0 0.0
    %2477 = vmatpush1.msra.mxu0 0.0
    %2478 = vmatprep.subr.mxu0 0.0
    %2479 = vmatpush1.msra.mxu0 0.0
    %2480 = vmatprep.subr.mxu0 0.0
    %2481 = vmatpush1.msra.mxu0 0.0
    %2482 = vmatprep.subr.mxu0 0.0
    %2483 = vmatpush1.msra.mxu0 0.0
    %2484 = vmatprep.subr.mxu0 0.0
    %2485 = vmatpush1.msra.mxu0 0.0
    %2486 = vmatprep.subr.mxu0 0.0
    %2487 = vmatpush1.msra.mxu0 0.0
    %2488 = vmatprep.mubr.f32.mxu0 0.0
    %2489 = vmatmul.mubr.f32.gmra.mrb[0].mxu0 %v2422
    %v2490 = vpop.f32.mrb[0].mxu0
    %v2491 = vadd.f32 0.0, %v2490
    %v2492 = vpop.f32.mrb[0].mxu0
    %v2493 = vadd.f32 0.0, %v2492
    %2494 = vdwg.mxu0
    %v2497 = vcombine.low %v2491, %v2493
    %v2499 = vunpack.c.l.s4 1983009808
    %v2500 = vunpack.c.0.s8 %v2499
    %v2501 = vlaneseq
    %v2502 = vshrl.u32 %v2501, 7
    %v2503 = vsub.s32 %v2500, %v2502
    %v2504 = vrot.slane %v2497, %v2503
    %v2506 = vadd.f32 %v1601, %v2504
    %v2507 = vxor.u32 %v2506, 2147483648
    %v2508 = vmul.f32 %v2507, 1.442695
    %v2509 = vpow.pop %v2508
    %v2510 = vadd.f32 %v2509, 1.0
    %v2511 = vrcp.pop %v2510
    %v2512 = vmul.f32 1.0, %v2511
    %2514 = vrot.lane.b32.xlu0 %v2506, 64
    %v2515 = vpop.permute.xlu0 %2514
    %v2516 = vrot.slane %v2515, 2
    %v2518 = vtanh.pop %v2516
    %v2519 = vmul.f32 %v2512, %v2411
    %v2520 = vmul.f32 %v2512, %v2518
    %2522 = vrot.lane.b32.xlu0 %v2520, 64
    %v2523 = vpop.permute.xlu0 %2522
    %v2525 = vadd.f32 %v2519, %v2523
    %v2526 = vtanh.pop %v2525
    %v2528 = vrot.slane %v2512, 2
    %2531 = vrot.lane.b32.xlu0 %v2526, 64
    %v2532 = vpop.permute.xlu0 %2531
    %v2534 = vmul.f32 %v2528, %v2532
    %v2536 = vunpack.c.l.s4 1966171168
    %v2537 = vunpack.c.0.s8 %v2536
    %v2538 = vlaneseq
    %v2539 = vshrl.u32 %v2538, 7
    %v2540 = vsub.s32 %v2537, %v2539
    %v2541 = vrot.slane %v1736, %v2540
    %v2542 = vcombine.high %v2541, %v2541
    %v2546 = vunpack.c.l.s4 1966171168
    %v2547 = vunpack.c.0.s8 %v2546
    %v2548 = vlaneseq
    %v2549 = vshrl.u32 %v2548, 7
    %v2550 = vsub.s32 %v2547, %v2549
    %v2551 = vrot.slane %v1850, %v2550
    %v2552 = vcombine.high %v2551, %v2551
    %v2554 = vunpack.c.l.s4 1966171168
    %v2555 = vunpack.c.0.s8 %v2554
    %v2556 = vlaneseq
    %v2557 = vshrl.u32 %v2556, 7
    %v2558 = vsub.s32 %v2555, %v2557
    %v2559 = vrot.slane %v1964, %v2558
    %v2560 = vcombine.high %v2559, %v2559
    %v2562 = vunpack.c.l.s4 1966171168
    %v2563 = vunpack.c.0.s8 %v2562
    %v2564 = vlaneseq
    %v2565 = vshrl.u32 %v2564, 7
    %v2566 = vsub.s32 %v2563, %v2565
    %v2567 = vrot.slane %v2078, %v2566
    %v2568 = vcombine.high %v2567, %v2567
    %v2570 = vunpack.c.l.s4 1966171168
    %v2571 = vunpack.c.0.s8 %v2570
    %v2572 = vlaneseq
    %v2573 = vshrl.u32 %v2572, 7
    %v2574 = vsub.s32 %v2571, %v2573
    %v2575 = vrot.slane %v2192, %v2574
    %v2576 = vcombine.high %v2575, %v2575
    %v2578 = vunpack.c.l.s4 1966171168
    %v2579 = vunpack.c.0.s8 %v2578
    %v2580 = vlaneseq
    %v2581 = vshrl.u32 %v2580, 7
    %v2582 = vsub.s32 %v2579, %v2581
    %v2583 = vrot.slane %v2306, %v2582
    %v2584 = vcombine.high %v2583, %v2583
    %v2586 = vunpack.c.l.s4 1966171168
    %v2587 = vunpack.c.0.s8 %v2586
    %v2588 = vlaneseq
    %v2589 = vshrl.u32 %v2588, 7
    %v2590 = vsub.s32 %v2587, %v2589
    %v2591 = vrot.slane %v2420, %v2590
    %v2592 = vcombine.high %v2591, %v2591
    %v2595 = vunpack.c.l.s4 1966171168
    %v2596 = vunpack.c.0.s8 %v2595
    %v2597 = vlaneseq
    %v2598 = vshrl.u32 %v2597, 7
    %v2599 = vsub.s32 %v2596, %v2598
    %v2600 = vrot.slane %v2534, %v2599
    %v2601 = vcombine.high %v2600, %v2600
    %v2602 = vlaneseq
    %v2603 = vshrl.u32 %v2602, 7
    %v2604 = vsub.s32 0, %v2603
    %v2605 = vrot.slane %v2551, %v2604
    %v2606 = vlaneseq
    %v2607 = vshrl.u32 %v2606, 7
    %v2608 = vsub.s32 0, %v2607
    %v2609 = vrot.slane %v2552, %v2608
    %v2612 = vlaneseq
    %v2613 = vshrl.u32 %v2612, 7
    %v2614 = vsub.s32 0, %v2613
    %v2615 = vrot.slane %v2559, %v2614
    %v2616 = vlaneseq
    %v2617 = vshrl.u32 %v2616, 7
    %v2618 = vsub.s32 0, %v2617
    %v2619 = vrot.slane %v2560, %v2618
    %v2622 = vlaneseq
    %v2623 = vshrl.u32 %v2622, 7
    %v2624 = vsub.s32 0, %v2623
    %v2625 = vrot.slane %v2567, %v2624
    %v2626 = vlaneseq
    %v2627 = vshrl.u32 %v2626, 7
    %v2628 = vsub.s32 0, %v2627
    %v2629 = vrot.slane %v2568, %v2628
    %v2632 = vlaneseq
    %v2633 = vshrl.u32 %v2632, 7
    %v2634 = vsub.s32 0, %v2633
    %v2635 = vrot.slane %v2575, %v2634
    %v2636 = vlaneseq
    %v2637 = vshrl.u32 %v2636, 7
    %v2638 = vsub.s32 0, %v2637
    %v2639 = vrot.slane %v2576, %v2638
    %v2642 = vlaneseq
    %v2643 = vshrl.u32 %v2642, 7
    %v2644 = vsub.s32 0, %v2643
    %v2645 = vrot.slane %v2583, %v2644
    %v2646 = vlaneseq
    %v2647 = vshrl.u32 %v2646, 7
    %v2648 = vsub.s32 0, %v2647
    %v2649 = vrot.slane %v2584, %v2648
    %v2652 = vlaneseq
    %v2653 = vshrl.u32 %v2652, 7
    %v2654 = vsub.s32 0, %v2653
    %v2655 = vrot.slane %v2591, %v2654
    %v2656 = vlaneseq
    %v2657 = vshrl.u32 %v2656, 7
    %v2658 = vsub.s32 0, %v2657
    %v2659 = vrot.slane %v2592, %v2658
    %v2662 = vlaneseq
    %v2663 = vshrl.u32 %v2662, 7
    %v2664 = vsub.s32 0, %v2663
    %v2665 = vrot.slane %v2600, %v2664
    %v2666 = vlaneseq
    %v2667 = vshrl.u32 %v2666, 7
    %v2668 = vsub.s32 0, %v2667
    %v2669 = vrot.slane %v2601, %v2668
    %vm2672 = vcmask 1040384
    %v2673 = vsel %vm2672, %v2541, %v2605
    %v2674 = vsel %vm2672, %v2542, %v2609
    %vm2675 = vcmask 1041408
    %v2676 = vsel %vm2675, %v2673, %v2615
    %v2677 = vsel %vm2675, %v2674, %v2619
    %vm2678 = vcmask 1042432
    %v2679 = vsel %vm2678, %v2676, %v2625
    %v2680 = vsel %vm2678, %v2677, %v2629
    %vm2681 = vcmask 1043456
    %v2682 = vsel %vm2681, %v2679, %v2635
    %v2683 = vsel %vm2681, %v2680, %v2639
    %vm2684 = vcmask 1044480
    %v2685 = vsel %vm2684, %v2682, %v2645
    %v2686 = vsel %vm2684, %v2683, %v2649
    %vm2687 = vcmask 1045504
    %v2688 = vsel %vm2687, %v2685, %v2655
    %v2689 = vsel %vm2687, %v2686, %v2659
    %vm2690 = vcmask 1046528
    %v2691 = vsel %vm2690, %v2688, %v2665
    %v2692 = vsel %vm2690, %v2689, %v2669
    %v2695 = vlaneseq
    %v2696 = vshrl.u32 %v2695, 7
    %v2697 = vsub.s32 0, %v2696
    %v2698 = vrot.slane %v2541, %v2697
    %v2699 = vlaneseq
    %v2700 = vshrl.u32 %v2699, 7
    %v2701 = vsub.s32 0, %v2700
    %v2702 = vrot.slane %v2542, %v2701
    %v2705 = vsel %vm2672, %v2600, %v2655
    %v2706 = vsel %vm2672, %v2601, %v2659
    %v2707 = vsel %vm2675, %v2705, %v2645
    %v2708 = vsel %vm2675, %v2706, %v2649
    %v2709 = vsel %vm2678, %v2707, %v2635
    %v2710 = vsel %vm2678, %v2708, %v2639
    %v2711 = vsel %vm2681, %v2709, %v2625
    %v2712 = vsel %vm2681, %v2710, %v2629
    %v2713 = vsel %vm2684, %v2711, %v2615
    %v2714 = vsel %vm2684, %v2712, %v2619
    %v2715 = vsel %vm2687, %v2713, %v2605
    %v2716 = vsel %vm2687, %v2714, %v2609
    %v2717 = vsel %vm2690, %v2715, %v2698
    %v2718 = vsel %vm2690, %v2716, %v2702
    %v2719 = vsel %vm1215, %v2691, %v2717
    %v2720 = vsel %vm1215, %v2692, %v2718
    %v2721 = vld [vmem:[%s4 + $0x2] sm:$0x1]
    %v2722 = vld [vmem:[%s4 + $0x3] sm:$0x1]
    %v2723 = vsel %vm302, %v2719, 0.0
    %2724 = vadd.xlane.f32.xlu0 %v2723
    %v2725 = vpop.xlane.xlu0 %2724
    %v2726 = vsel %vm302, %v2720, 0.0
    %2727 = vadd.xlane.f32.xlu0 %v2726
    %v2728 = vpop.xlane.xlu0 %2727
    %v2729 = vmul.f32 %v2725, %v1251
    %v2730 = vmul.f32 %v2728, %v1251
    %v2731 = vsub.f32 %v2719, %v2729
    %v2732 = vsub.f32 %v2720, %v2730
    %v2733 = vmul.f32 %v2731, %v2731
    %v2734 = vmul.f32 %v2732, %v2732
    %v2735 = vsel %vm302, %v2733, 0.0
    %2736 = vadd.xlane.f32.xlu0 %v2735
    %v2737 = vpop.xlane.xlu0 %2736
    %v2738 = vsel %vm302, %v2734, 0.0
    %2739 = vadd.xlane.f32.xlu0 %v2738
    %v2740 = vpop.xlane.xlu0 %2739
    %v2741 = vmul.f32 %v2737, %v1251
    %v2742 = vmul.f32 %v2740, %v1251
    %v2743 = vadd.f32 %v2741, 1e-05
    %v2744 = vadd.f32 %v2742, 1e-05
    %v2745 = vrsqrt.pop %v2743
    %v2746 = vrsqrt.pop %v2744
    %v2747 = vmul.f32 %v2731, %v2745
    %v2748 = vmul.f32 %v2732, %v2746
    %v2749 = vlaneseq
    %v2750 = vshrl.u32 %v2749, 7
    %v2751 = vsub.s32 0, %v2750
    %v2752 = vrot.slane %v2721, %v2751
    %v2753 = vmul.f32 %v2747, %v2752
    %v2754 = vmul.f32 %v2748, %v2752
    %v2755 = vlaneseq
    %v2756 = vshrl.u32 %v2755, 7
    %v2757 = vsub.s32 0, %v2756
    %v2758 = vrot.slane %v2722, %v2757
    %v2759 = vadd.f32 %v2753, %v2758
    %v2760 = vadd.f32 %v2754, %v2758
    %v2761 = vld [vmem:[%s4 + $0x4] sm:$0x1]
    %v2762 = vlaneseq
    %v2763 = vshrl.u32 %v2762, 7
    %v2764 = vsub.s32 0, %v2763
    %v2765 = vrot.slane %v2761, %v2764
    %v2766 = vmul.f32 %v2759, %v2765
    %v2767 = vmul.f32 %v2760, %v2765
    %v2768 = vsel %vm302, %v2766, 0.0
    %2769 = vadd.xlane.f32.xlu0 %v2768
    %v2770 = vpop.xlane.xlu0 %2769
    %v2771 = vsel %vm302, %v2767, 0.0
    %2772 = vadd.xlane.f32.xlu0 %v2771
    %v2773 = vpop.xlane.xlu0 %2772
    %v2774 = vld [vmem:[%s4 + $0x5] sm:$0x1]
    %s2776 = vtos %v2774
    %v2777 = vstv %s2776
    %v2779 = vadd.f32 %v2770, %v2777
    %v2780 = vadd.f32 %v2773, %v2777
    %v2783 = vlaneseq
    %v2784 = vand.u32 %v2783, 127
    %v2785 = vlaneseq
    %v2786 = vshrl.u32 %v2785, 7
    %v2787 = vsub.s32 %v2784, %v2786
    %v2788 = vrot.slane %v2779, %v2787
    %v2789 = vlaneseq
    %v2790 = vshrl.u32 %v2789, 7
    %v2791 = vsub.s32 %v2784, %v2790
    %v2792 = vrot.slane %v2780, %v2791
    %vm2793 = vcmask 1041409
    %v2794 = vsel %vm2793, %v2792, %v2788
    %vm2796 = vcmask 58368
    %2797 = vst.msk [vmem:[#allocation7] sm:$0x3] %vm2796, %v2794
    // Predicated region
    $region30: #{fuel_consumption_forward.1} parent=1 // pred_check
      _
    $region31: #{fuel_consumption_forward.1} parent=1 // pred_check_branch
      %2799 = sbr.rel (0) target = $region33
    $region32: #{fuel_consumption_forward.1} parent=1 // pred_region
      %s2801 = ssub.s32 32, 32
      %2802 = vsyncadd [#allocation4], %s2801
      %s2804 = sshll.u32 [#allocation7], 4
      %s2805 = int_to_ptr.vmem [resolvable:$true] %s2804
      %2807 = dma.vmem_to_hbm [thread:$0]  %s2805, 32, %s5, [#allocation4]
    $region33: #{fuel_consumption_forward.1} parent=1 // pred_fallthru
      _
    // Predicated region
    $region34: #{fuel_consumption_forward.1} parent=1 // pred_check
      _
    $region35: #{fuel_consumption_forward.1} parent=1 // pred_check_branch
      %2809 = sbr.rel (0) target = $region37
    $region36: #{fuel_consumption_forward.1} parent=1 // pred_region
      %2810 = dma.done [#allocation4], 32
    $region37: #{fuel_consumption_forward.1} parent=1 // pred_fallthru
      _
    %2811 = vsyncpa [#allocation3], 1
    %2812 = vsyncpa [#allocation6], 1
    %2813 = vsyncpa [#allocation4], 1

</llo_original>
